<compile_context>
chip_gen: v6e
topology: v6e:2x2x1
jax: 0.10.0
libtpu: 0.0.40
codegen_flags: <defaults>
</compile_context>

<pallas_src>
import jax
import jax.numpy as jnp
from jax.experimental import pallas as pl
from jax.experimental.pallas import tpu as pltpu


# ---------------------------------------------------------------------------
# Fused kernel (channel-major, 2D zero halo)
# ---------------------------------------------------------------------------

def _make_fused_kernel(H, W, in_C, mid_C, out_C, k, bb, f0):
    WP = W + 2
    NPAD = (H + 2) * WP          # flattened padded image, pitch WP
    SPAN = H * WP - 2            # span of conv-output positions (pitch WP)
    RING = WP + 1                # halo lanes before/after the span
    CT = f0 + in_C + mid_C       # scratch rows: [down|feats..|pad|x|feats_last]
    f32 = jnp.float32

    def kernel(*refs):
        x_ref, wdown_ref, bdown_ref = refs[0], refs[1], refs[2]
        dense_refs = refs[3:3 + 2 * k]            # [w9_0, shift_0, w9_1, ...]
        wfuse_ref, shf_ref = refs[3 + 2 * k], refs[4 + 2 * k]
        o_ref = refs[5 + 2 * k]                   # (bb, out_C, SPAN)
        sc = refs[6 + 2 * k]                      # (CT, NPAD) f32 scratch

        # Ring-only zeroing (body lanes are fully rewritten every step; the
        # ring is never written by the body stores, so re-zero it per step
        # to stay correct under "parallel" megacore sharding).
        sc[:, :RING] = jnp.zeros((CT, RING), f32)
        sc[:, NPAD - RING:] = jnp.zeros((CT, RING), f32)

        # Body-column mask over the span: padded column index must lie in
        # [1, W] (one mask per stage, replaces per-tap border selects).
        px = (jax.lax.broadcasted_iota(jnp.int32, (1, SPAN), 1) + 1) % WP
        body = jnp.logical_and(px >= 1, px <= W)

        # Hoist weight loads out of the per-image loop.
        wdown = wdown_ref[...]                    # (mid_C, in_C)
        bdown = bdown_ref[...]                    # (mid_C, 1)
        wds = [dense_refs[2 * i][...] for i in range(k)]       # (9,mid_C,Cin_i)
        shds = [dense_refs[2 * i + 1][...] for i in range(k)]  # (mid_C,1)
        wf = wfuse_ref[...]                       # (9, out_C, in_C+mid_C)
        shf = shf_ref[...]                        # (out_C, 1)

        def conv3x3(w9, rows_lo, rows_hi):
            # 9 static lane-shifted taps of the zero-haloed scratch rows;
            # round-robin accumulators break the serial add chain.
            cout = w9.shape[1]
            accs = [jnp.zeros((cout, SPAN), f32) for _ in range(3)]
            for t in range(9):
                off = (t // 3) * WP + (t % 3)
                tap = sc[rows_lo:rows_hi, off:off + SPAN]
                accs[t % 3] = accs[t % 3] + jnp.dot(
                    w9[t], tap, preferred_element_type=f32)
            return accs[0] + accs[1] + accs[2]

        for j in range(bb):
            # Stage the already-padded input image (its halo is zero).
            sc[f0:f0 + in_C, :] = x_ref[j].astype(f32)

            # down: 1x1 conv + bias; mask junk (halo-center) columns so the
            # dense block sees an exact zero-padded `down`.
            x_body = sc[f0:f0 + in_C, RING:RING + SPAN]
            down = jnp.dot(wdown, x_body, preferred_element_type=f32) + bdown
            sc[0:mid_C, RING:RING + SPAN] = jnp.where(body, down, 0.0)

            # dense blocks: 3x3 conv (pad=1, no bias) + folded BN.  Sources
            # of block i are the contiguous rows [0, (i+1)*mid_C).
            for i in range(k):
                feats = conv3x3(wds[i], 0, (i + 1) * mid_C) + shds[i]
                row0 = (1 + i) * mid_C if i < k - 1 else f0 + in_C
                sc[row0:row0 + mid_C, RING:RING + SPAN] = jnp.where(
                    body, feats, 0.0)

            # fuse: 3x3 conv over the contiguous [x | feats_{k-1}] rows.
            # No mask needed; junk columns are dropped in the wrapper.
            out = conv3x3(wf, f0, f0 + in_C + mid_C) + shf
            o_ref[j] = out.astype(o_ref.dtype)

    return kernel


# ---------------------------------------------------------------------------
# Wrapper: layout glue + BN folding + pallas_call
# ---------------------------------------------------------------------------

def _pick_images_per_step(B, cap=4):
    """Amortize per-step overhead while keeping >=2 parallel steps (v7x)."""
    best = 1
    for bb in range(1, min(B, cap) + 1):
        if B % bb == 0 and B // bb >= 2:
            best = bb
    return best


def dense_layer_forward(x_nchw, params, k=1, eps=1e-5, images_per_step=None):
    """Pallas implementation of DenseLayer.forward (NCHW in, NCHW out)."""
    B, in_C, H, W = x_nchw.shape
    mid_C = params["down_w"].shape[1]
    out_C = params["fuse"]["w"].shape[-1]
    WP = W + 2
    NPAD = (H + 2) * WP
    SPAN = H * WP - 2
    f0 = -(-(k * mid_C) // 8) * 8        # 8-align the fuse-source rows
    CT = f0 + in_C + mid_C

    bb = images_per_step if images_per_step is not None else _pick_images_per_step(B)
    assert B % bb == 0

    # NCHW -> channel-major, zero-padded, flattened spatial: (B, in_C, NPAD).
    xp = jnp.pad(x_nchw.astype(jnp.float32),
                 ((0, 0), (0, 0), (1, 1), (1, 1))).reshape(B, in_C, NPAD)

    def fold(p):
        scale = p["gamma"] / jnp.sqrt(p["var"] + eps)
        w = p["w"] * scale                                   # (3,3,Cin,Cout)
        shift = p["beta"] - p["mean"] * scale
        cin, cout = w.shape[2], w.shape[3]
        w9 = jnp.transpose(w, (0, 1, 3, 2)).reshape(9, cout, cin)   # (9,Cout,Cin)
        return w9.astype(jnp.float32), shift.reshape(cout, 1).astype(jnp.float32)

    inputs = [xp,
              jnp.transpose(params["down_w"]).astype(jnp.float32),   # (mid_C,in_C)
              params["down_b"].reshape(mid_C, 1).astype(jnp.float32)]
    in_specs = [pl.BlockSpec((bb, in_C, NPAD), lambda b: (b, 0, 0)),
                pl.BlockSpec((mid_C, in_C), lambda b: (0, 0)),
                pl.BlockSpec((mid_C, 1), lambda b: (0, 0))]

    for i in range(k):
        w9, sh = fold(params["dense"][i])
        # PyTorch Cin order is (feats_0..feats_{i-1}, down); the scratch keeps
        # (down, feats_0..feats_{i-1}) -> move down's Cin slab to the front.
        if i:
            w9 = jnp.concatenate([w9[:, :, i * mid_C:], w9[:, :, :i * mid_C]],
                                 axis=2)
        cin = (i + 1) * mid_C
        inputs += [w9, sh]
        in_specs += [pl.BlockSpec((9, mid_C, cin), lambda b: (0, 0, 0)),
                     pl.BlockSpec((mid_C, 1), lambda b: (0, 0))]

    w9f, shf = fold(params["fuse"])          # Cin order (x, feats) matches scratch
    inputs += [w9f, shf]
    in_specs += [pl.BlockSpec((9, out_C, in_C + mid_C), lambda b: (0, 0, 0)),
                 pl.BlockSpec((out_C, 1), lambda b: (0, 0))]

    out = pl.pallas_call(
        _make_fused_kernel(H, W, in_C, mid_C, out_C, k, bb, f0),
        out_shape=jax.ShapeDtypeStruct((B, out_C, SPAN), jnp.float32),
        grid=(B // bb,),
        in_specs=in_specs,
        out_specs=pl.BlockSpec((bb, out_C, SPAN), lambda b: (b, 0, 0)),
        scratch_shapes=[pltpu.VMEM((CT, NPAD), jnp.float32)],
        compiler_params=pltpu.CompilerParams(
            dimension_semantics=("parallel",),
            vmem_limit_bytes=32 * 1024 * 1024),
    )(*inputs)

    # Span (pitch W+2, origin at padded (1,1)) -> dense NCHW image.
    out = jnp.pad(out, ((0, 0), (0, 0), (0, 2))).reshape(B, out_C, H, WP)
    return out[:, :, :, :W]


# ---------------------------------------------------------------------------
# Pure-JAX reference (lax.conv) for the correctness check
# ---------------------------------------------------------------------------

def ref_dense_layer(x_nchw, params, k=1, eps=1e-5):
    dn = ("NHWC", "HWIO", "NHWC")
    x = jnp.transpose(x_nchw, (0, 2, 3, 1))
    down = jax.lax.conv_general_dilated(
        x, params["down_w"][None, None], (1, 1), "VALID",
        dimension_numbers=dn) + params["down_b"]
    out_feats, feats = [], None
    for i in range(k):
        inp = jnp.concatenate(out_feats + [down], axis=-1)
        p = params["dense"][i]
        c = jax.lax.conv_general_dilated(inp, p["w"], (1, 1),
                                         ((1, 1), (1, 1)),
                                         dimension_numbers=dn)
        feats = (c - p["mean"]) / jnp.sqrt(p["var"] + eps) * p["gamma"] + p["beta"]
        out_feats.append(feats)
    fin = jnp.concatenate([x, feats], axis=-1)
    pf = params["fuse"]
    c = jax.lax.conv_general_dilated(fin, pf["w"], (1, 1), ((1, 1), (1, 1)),
                                     dimension_numbers=dn)
    out = (c - pf["mean"]) / jnp.sqrt(pf["var"] + eps) * pf["gamma"] + pf["beta"]
    return jnp.transpose(out, (0, 3, 1, 2))


# ---------------------------------------------------------------------------
# Deterministic parameter construction
# ---------------------------------------------------------------------------

def make_params(key, in_C, out_C, down_factor=4, k=1):
    mid_C = out_C // down_factor
    ks = iter(jax.random.split(key, 4 + 5 * (k + 1)))
    params = {
        "down_w": 0.1 * jax.random.normal(next(ks), (in_C, mid_C), jnp.float32),
        "down_b": 0.1 * jax.random.normal(next(ks), (mid_C,), jnp.float32),
        "dense": [],
    }

    def bn_block(cin, cout):
        return {
            "w": 0.1 * jax.random.normal(next(ks), (3, 3, cin, cout), jnp.float32),
            "gamma": 1.0 + 0.1 * jax.random.normal(next(ks), (cout,), jnp.float32),
            "beta": 0.1 * jax.random.normal(next(ks), (cout,), jnp.float32),
            "mean": 0.1 * jax.random.normal(next(ks), (cout,), jnp.float32),
            "var": 0.5 + 0.5 * jax.random.uniform(next(ks), (cout,), jnp.float32),
        }

    for i in range(1, k + 1):
        params["dense"].append(bn_block(mid_C * i, mid_C))
    params["fuse"] = bn_block(in_C + mid_C, out_C)
    return params


# ---------------------------------------------------------------------------

if __name__ == "__main__":
    in_C, out_C, k = 4, 16, 1          # mid_C = out_C // 4 = 4
    B, H, W = 2, 16, 16

    root = jax.random.PRNGKey(0)
    kx, kp = jax.random.split(root)
    x = jax.random.normal(kx, (B, in_C, H, W), jnp.float32)   # NCHW like PyTorch
    params = make_params(kp, in_C, out_C, down_factor=4, k=k)

    fwd = jax.jit(lambda xx, pp: dense_layer_forward(xx, pp, k=k))
    out = jax.block_until_ready(fwd(x, params))

    ref = jax.block_until_ready(ref_dense_layer(x, params, k=k))

    assert out.shape == (B, out_C, H, W), out.shape
    assert jnp.allclose(out, ref, atol=2e-3, rtol=2e-3), (
        float(jnp.max(jnp.abs(out - ref))))

    print("KERNEL_OK")
</pallas_src>

<mosaic_0001>
module attributes {stable_mosaic.version = 11 : i64} {
  func.func @kernel(%arg0: i32, %arg1: memref<1x4x324xf32, #tpu.memory_space<vmem>>, %arg2: memref<4x4xf32, #tpu.memory_space<vmem>>, %arg3: memref<4x1xf32, #tpu.memory_space<vmem>>, %arg4: memref<9x4x4xf32, #tpu.memory_space<vmem>>, %arg5: memref<4x1xf32, #tpu.memory_space<vmem>>, %arg6: memref<9x16x8xf32, #tpu.memory_space<vmem>>, %arg7: memref<16x1xf32, #tpu.memory_space<vmem>>, %arg8: memref<1x16x286xf32, #tpu.memory_space<vmem>>, %arg9: memref<16x324xf32, #tpu.memory_space<vmem>>) attributes {dimension_semantics = [#tpu.dimension_semantics<parallel>], iteration_bounds = array<i64: 2>, scalar_prefetch = 0 : i64, scratch_operands = 1 : i64, tpu.core_type = #tpu.core_type<tc>, window_params = [{transform_indices = @transform_0, window_bounds = array<i64: 1, 4, 324>}, {pipeline_mode = #tpu.pipeline_mode<synchronous>, transform_indices = @transform_1, window_bounds = array<i64: 4, 4>}, {pipeline_mode = #tpu.pipeline_mode<synchronous>, transform_indices = @transform_2, window_bounds = array<i64: 4, 1>}, {pipeline_mode = #tpu.pipeline_mode<synchronous>, transform_indices = @transform_3, window_bounds = array<i64: 9, 4, 4>}, {pipeline_mode = #tpu.pipeline_mode<synchronous>, transform_indices = @transform_4, window_bounds = array<i64: 4, 1>}, {pipeline_mode = #tpu.pipeline_mode<synchronous>, transform_indices = @transform_5, window_bounds = array<i64: 9, 16, 8>}, {pipeline_mode = #tpu.pipeline_mode<synchronous>, transform_indices = @transform_6, window_bounds = array<i64: 16, 1>}, {transform_indices = @transform_7, window_bounds = array<i64: 1, 16, 286>}]} {
    %cst = arith.constant 0.000000e+00 : f32
    %0 = vector.broadcast %cst : f32 to vector<16x19xf32>
    %c0 = arith.constant 0 : index
    %c0_0 = arith.constant 0 : index
    %1 = vector.load %arg9[%c0, %c0_0] : memref<16x324xf32, #tpu.memory_space<vmem>>, vector<16x19xf32>
    tpu.vector_store %arg9[%c0, %c0_0], %0 {strides = array<i32>} : memref<16x324xf32, #tpu.memory_space<vmem>>, vector<16x19xf32>,
    %cst_1 = arith.constant 0.000000e+00 : f32
    %2 = vector.broadcast %cst_1 : f32 to vector<16x19xf32>
    %c0_2 = arith.constant 0 : index
    %c305 = arith.constant 305 : index
    %3 = vector.load %arg9[%c0_2, %c305] : memref<16x324xf32, #tpu.memory_space<vmem>>, vector<16x19xf32>
    tpu.vector_store %arg9[%c0_2, %c305], %2 {strides = array<i32>} : memref<16x324xf32, #tpu.memory_space<vmem>>, vector<16x19xf32>,
    %4 = tpu.iota {dimensions = array<i32: 1>} : vector<1x286xi32>
    %c1_i32 = arith.constant 1 : i32
    %5 = vector.broadcast %c1_i32 : i32 to vector<1x286xi32>
    %6 = arith.addi %4, %5 : vector<1x286xi32>
    %c18_i32 = arith.constant 18 : i32
    %c0_i32 = arith.constant 0 : i32
    %7 = arith.cmpi eq, %c18_i32, %c0_i32 : i32
    %c1_i32_3 = arith.constant 1 : i32
    %8 = arith.select %7, %c1_i32_3, %c18_i32 : i32
    %9 = vector.broadcast %8 : i32 to vector<1x286xi32>
    %10 = arith.remsi %6, %9 : vector<1x286xi32>
    %c0_i32_4 = arith.constant 0 : i32
    %11 = vector.broadcast %c0_i32_4 : i32 to vector<1x286xi32>
    %12 = arith.cmpi ne, %10, %11 : vector<1x286xi32>
    %c0_i32_5 = arith.constant 0 : i32
    %13 = vector.broadcast %c0_i32_5 : i32 to vector<1x286xi32>
    %14 = arith.cmpi slt, %10, %13 : vector<1x286xi32>
    %c0_i32_6 = arith.constant 0 : i32
    %15 = arith.cmpi slt, %8, %c0_i32_6 : i32
    %16 = vector.broadcast %15 : i1 to vector<1x286xi1>
    %17 = vector.broadcast %16 : vector<1x286xi1> to vector<1x286xi1>
    %18 = arith.xori %14, %17 : vector<1x286xi1>
    %19 = arith.andi %18, %12 : vector<1x286xi1>
    %20 = vector.broadcast %8 : i32 to vector<1x286xi32>
    %21 = arith.addi %10, %20 : vector<1x286xi32>
    %22 = arith.select %19, %21, %10 : vector<1x286xi1>, vector<1x286xi32>
    %c1_i32_7 = arith.constant 1 : i32
    %23 = vector.broadcast %c1_i32_7 : i32 to vector<1x286xi32>
    %24 = arith.cmpi sge, %22, %23 : vector<1x286xi32>
    %c16_i32 = arith.constant 16 : i32
    %25 = vector.broadcast %c16_i32 : i32 to vector<1x286xi32>
    %26 = arith.cmpi sle, %22, %25 : vector<1x286xi32>
    %27 = arith.andi %24, %26 : vector<1x286xi1>
    %c0_8 = arith.constant 0 : index
    %c0_9 = arith.constant 0 : index
    %28 = vector.load %arg2[%c0_8, %c0_9] : memref<4x4xf32, #tpu.memory_space<vmem>>, vector<4x4xf32>
    %c0_10 = arith.constant 0 : index
    %c0_11 = arith.constant 0 : index
    %29 = vector.load %arg3[%c0_10, %c0_11] : memref<4x1xf32, #tpu.memory_space<vmem>>, vector<4x1xf32>
    %c0_12 = arith.constant 0 : index
    %c0_13 = arith.constant 0 : index
    %c0_14 = arith.constant 0 : index
    %30 = vector.load %arg4[%c0_12, %c0_13, %c0_14] : memref<9x4x4xf32, #tpu.memory_space<vmem>>, vector<9x4x4xf32>
    %c0_15 = arith.constant 0 : index
    %c0_16 = arith.constant 0 : index
    %31 = vector.load %arg5[%c0_15, %c0_16] : memref<4x1xf32, #tpu.memory_space<vmem>>, vector<4x1xf32>
    %c0_17 = arith.constant 0 : index
    %c0_18 = arith.constant 0 : index
    %c0_19 = arith.constant 0 : index
    %32 = vector.load %arg6[%c0_17, %c0_18, %c0_19] : memref<9x16x8xf32, #tpu.memory_space<vmem>>, vector<9x16x8xf32>
    %c0_20 = arith.constant 0 : index
    %c0_21 = arith.constant 0 : index
    %33 = vector.load %arg7[%c0_20, %c0_21] : memref<16x1xf32, #tpu.memory_space<vmem>>, vector<16x1xf32>
    %c0_22 = arith.constant 0 : index
    %c0_23 = arith.constant 0 : index
    %c0_24 = arith.constant 0 : index
    %34 = vector.load %arg1[%c0_22, %c0_23, %c0_24] : memref<1x4x324xf32, #tpu.memory_space<vmem>>, vector<1x4x324xf32>
    %35 = vector.shape_cast %34 : vector<1x4x324xf32> to vector<4x324xf32>
    %c8 = arith.constant 8 : index
    %c0_25 = arith.constant 0 : index
    %36 = vector.load %arg9[%c8, %c0_25] : memref<16x324xf32, #tpu.memory_space<vmem>>, vector<4x324xf32>
    tpu.vector_store %arg9[%c8, %c0_25], %35 {strides = array<i32>} : memref<16x324xf32, #tpu.memory_space<vmem>>, vector<4x324xf32>,
    %c8_26 = arith.constant 8 : index
    %c19 = arith.constant 19 : index
    %37 = vector.load %arg9[%c8_26, %c19] : memref<16x324xf32, #tpu.memory_space<vmem>>, vector<4x286xf32>
    %cst_27 = arith.constant dense<0.000000e+00> : vector<4x286xf32>
    %38 = tpu.matmul %28, %37, %cst_27 {dimension_numbers = #tpu.dot_dimension_numbers<[1], [0], [0], [1], [0, 0, 1, 1], [], []>} : vector<4x4xf32>, vector<4x286xf32>, vector<4x286xf32> -> vector<4x286xf32>
    %39 = vector.broadcast %29 : vector<4x1xf32> to vector<4x286xf32>
    %40 = arith.addf %38, %39 : vector<4x286xf32>
    %cst_28 = arith.constant 0.000000e+00 : f32
    %41 = vector.shape_cast %27 : vector<1x286xi1> to vector<1x286xi1>
    %42 = vector.broadcast %41 : vector<1x286xi1> to vector<4x286xi1>
    %43 = vector.broadcast %cst_28 : f32 to vector<4x286xf32>
    %44 = arith.select %42, %40, %43 : vector<4x286xi1>, vector<4x286xf32>
    %c0_29 = arith.constant 0 : index
    %c19_30 = arith.constant 19 : index
    %45 = vector.load %arg9[%c0_29, %c19_30] : memref<16x324xf32, #tpu.memory_space<vmem>>, vector<4x286xf32>
    tpu.vector_store %arg9[%c0_29, %c19_30], %44 {strides = array<i32>} : memref<16x324xf32, #tpu.memory_space<vmem>>, vector<4x286xf32>,
    %cst_31 = arith.constant 0.000000e+00 : f32
    %46 = vector.broadcast %cst_31 : f32 to vector<4x286xf32>
    %cst_32 = arith.constant 0.000000e+00 : f32
    %47 = vector.broadcast %cst_32 : f32 to vector<4x286xf32>
    %cst_33 = arith.constant 0.000000e+00 : f32
    %48 = vector.broadcast %cst_33 : f32 to vector<4x286xf32>
    %c0_34 = arith.constant 0 : index
    %c0_35 = arith.constant 0 : index
    %49 = vector.load %arg9[%c0_34, %c0_35] : memref<16x324xf32, #tpu.memory_space<vmem>>, vector<4x286xf32>
    %50 = vector.extract_strided_slice %30 {offsets = [0, 0, 0], sizes = [1, 4, 4], strides = [1, 1, 1]} : vector<9x4x4xf32> to vector<1x4x4xf32>
    %51 = vector.shape_cast %50 : vector<1x4x4xf32> to vector<4x4xf32>
    %cst_36 = arith.constant dense<0.000000e+00> : vector<4x286xf32>
    %52 = tpu.matmul %51, %49, %cst_36 {dimension_numbers = #tpu.dot_dimension_numbers<[1], [0], [0], [1], [0, 0, 1, 1], [], []>} : vector<4x4xf32>, vector<4x286xf32>, vector<4x286xf32> -> vector<4x286xf32>
    %53 = arith.addf %46, %52 : vector<4x286xf32>
    %c0_37 = arith.constant 0 : index
    %c1 = arith.constant 1 : index
    %54 = vector.load %arg9[%c0_37, %c1] : memref<16x324xf32, #tpu.memory_space<vmem>>, vector<4x286xf32>
    %55 = vector.extract_strided_slice %30 {offsets = [1, 0, 0], sizes = [1, 4, 4], strides = [1, 1, 1]} : vector<9x4x4xf32> to vector<1x4x4xf32>
    %56 = vector.shape_cast %55 : vector<1x4x4xf32> to vector<4x4xf32>
    %cst_38 = arith.constant dense<0.000000e+00> : vector<4x286xf32>
    %57 = tpu.matmul %56, %54, %cst_38 {dimension_numbers = #tpu.dot_dimension_numbers<[1], [0], [0], [1], [0, 0, 1, 1], [], []>} : vector<4x4xf32>, vector<4x286xf32>, vector<4x286xf32> -> vector<4x286xf32>
    %58 = arith.addf %47, %57 : vector<4x286xf32>
    %c0_39 = arith.constant 0 : index
    %c2 = arith.constant 2 : index
    %59 = vector.load %arg9[%c0_39, %c2] : memref<16x324xf32, #tpu.memory_space<vmem>>, vector<4x286xf32>
    %60 = vector.extract_strided_slice %30 {offsets = [2, 0, 0], sizes = [1, 4, 4], strides = [1, 1, 1]} : vector<9x4x4xf32> to vector<1x4x4xf32>
    %61 = vector.shape_cast %60 : vector<1x4x4xf32> to vector<4x4xf32>
    %cst_40 = arith.constant dense<0.000000e+00> : vector<4x286xf32>
    %62 = tpu.matmul %61, %59, %cst_40 {dimension_numbers = #tpu.dot_dimension_numbers<[1], [0], [0], [1], [0, 0, 1, 1], [], []>} : vector<4x4xf32>, vector<4x286xf32>, vector<4x286xf32> -> vector<4x286xf32>
    %63 = arith.addf %48, %62 : vector<4x286xf32>
    %c0_41 = arith.constant 0 : index
    %c18 = arith.constant 18 : index
    %64 = vector.load %arg9[%c0_41, %c18] : memref<16x324xf32, #tpu.memory_space<vmem>>, vector<4x286xf32>
    %65 = vector.extract_strided_slice %30 {offsets = [3, 0, 0], sizes = [1, 4, 4], strides = [1, 1, 1]} : vector<9x4x4xf32> to vector<1x4x4xf32>
    %66 = vector.shape_cast %65 : vector<1x4x4xf32> to vector<4x4xf32>
    %cst_42 = arith.constant dense<0.000000e+00> : vector<4x286xf32>
    %67 = tpu.matmul %66, %64, %cst_42 {dimension_numbers = #tpu.dot_dimension_numbers<[1], [0], [0], [1], [0, 0, 1, 1], [], []>} : vector<4x4xf32>, vector<4x286xf32>, vector<4x286xf32> -> vector<4x286xf32>
    %68 = arith.addf %53, %67 : vector<4x286xf32>
    %c0_43 = arith.constant 0 : index
    %c19_44 = arith.constant 19 : index
    %69 = vector.load %arg9[%c0_43, %c19_44] : memref<16x324xf32, #tpu.memory_space<vmem>>, vector<4x286xf32>
    %70 = vector.extract_strided_slice %30 {offsets = [4, 0, 0], sizes = [1, 4, 4], strides = [1, 1, 1]} : vector<9x4x4xf32> to vector<1x4x4xf32>
    %71 = vector.shape_cast %70 : vector<1x4x4xf32> to vector<4x4xf32>
    %cst_45 = arith.constant dense<0.000000e+00> : vector<4x286xf32>
    %72 = tpu.matmul %71, %69, %cst_45 {dimension_numbers = #tpu.dot_dimension_numbers<[1], [0], [0], [1], [0, 0, 1, 1], [], []>} : vector<4x4xf32>, vector<4x286xf32>, vector<4x286xf32> -> vector<4x286xf32>
    %73 = arith.addf %58, %72 : vector<4x286xf32>
    %c0_46 = arith.constant 0 : index
    %c20 = arith.constant 20 : index
    %74 = vector.load %arg9[%c0_46, %c20] : memref<16x324xf32, #tpu.memory_space<vmem>>, vector<4x286xf32>
    %75 = vector.extract_strided_slice %30 {offsets = [5, 0, 0], sizes = [1, 4, 4], strides = [1, 1, 1]} : vector<9x4x4xf32> to vector<1x4x4xf32>
    %76 = vector.shape_cast %75 : vector<1x4x4xf32> to vector<4x4xf32>
    %cst_47 = arith.constant dense<0.000000e+00> : vector<4x286xf32>
    %77 = tpu.matmul %76, %74, %cst_47 {dimension_numbers = #tpu.dot_dimension_numbers<[1], [0], [0], [1], [0, 0, 1, 1], [], []>} : vector<4x4xf32>, vector<4x286xf32>, vector<4x286xf32> -> vector<4x286xf32>
    %78 = arith.addf %63, %77 : vector<4x286xf32>
    %c0_48 = arith.constant 0 : index
    %c36 = arith.constant 36 : index
    %79 = vector.load %arg9[%c0_48, %c36] : memref<16x324xf32, #tpu.memory_space<vmem>>, vector<4x286xf32>
    %80 = vector.extract_strided_slice %30 {offsets = [6, 0, 0], sizes = [1, 4, 4], strides = [1, 1, 1]} : vector<9x4x4xf32> to vector<1x4x4xf32>
    %81 = vector.shape_cast %80 : vector<1x4x4xf32> to vector<4x4xf32>
    %cst_49 = arith.constant dense<0.000000e+00> : vector<4x286xf32>
    %82 = tpu.matmul %81, %79, %cst_49 {dimension_numbers = #tpu.dot_dimension_numbers<[1], [0], [0], [1], [0, 0, 1, 1], [], []>} : vector<4x4xf32>, vector<4x286xf32>, vector<4x286xf32> -> vector<4x286xf32>
    %83 = arith.addf %68, %82 : vector<4x286xf32>
    %c0_50 = arith.constant 0 : index
    %c37 = arith.constant 37 : index
    %84 = vector.load %arg9[%c0_50, %c37] : memref<16x324xf32, #tpu.memory_space<vmem>>, vector<4x286xf32>
    %85 = vector.extract_strided_slice %30 {offsets = [7, 0, 0], sizes = [1, 4, 4], strides = [1, 1, 1]} : vector<9x4x4xf32> to vector<1x4x4xf32>
    %86 = vector.shape_cast %85 : vector<1x4x4xf32> to vector<4x4xf32>
    %cst_51 = arith.constant dense<0.000000e+00> : vector<4x286xf32>
    %87 = tpu.matmul %86, %84, %cst_51 {dimension_numbers = #tpu.dot_dimension_numbers<[1], [0], [0], [1], [0, 0, 1, 1], [], []>} : vector<4x4xf32>, vector<4x286xf32>, vector<4x286xf32> -> vector<4x286xf32>
    %88 = arith.addf %73, %87 : vector<4x286xf32>
    %c0_52 = arith.constant 0 : index
    %c38 = arith.constant 38 : index
    %89 = vector.load %arg9[%c0_52, %c38] : memref<16x324xf32, #tpu.memory_space<vmem>>, vector<4x286xf32>
    %90 = vector.extract_strided_slice %30 {offsets = [8, 0, 0], sizes = [1, 4, 4], strides = [1, 1, 1]} : vector<9x4x4xf32> to vector<1x4x4xf32>
    %91 = vector.shape_cast %90 : vector<1x4x4xf32> to vector<4x4xf32>
    %cst_53 = arith.constant dense<0.000000e+00> : vector<4x286xf32>
    %92 = tpu.matmul %91, %89, %cst_53 {dimension_numbers = #tpu.dot_dimension_numbers<[1], [0], [0], [1], [0, 0, 1, 1], [], []>} : vector<4x4xf32>, vector<4x286xf32>, vector<4x286xf32> -> vector<4x286xf32>
    %93 = arith.addf %78, %92 : vector<4x286xf32>
    %94 = arith.addf %83, %88 : vector<4x286xf32>
    %95 = arith.addf %94, %93 : vector<4x286xf32>
    %96 = vector.broadcast %31 : vector<4x1xf32> to vector<4x286xf32>
    %97 = arith.addf %95, %96 : vector<4x286xf32>
    %cst_54 = arith.constant 0.000000e+00 : f32
    %98 = vector.shape_cast %27 : vector<1x286xi1> to vector<1x286xi1>
    %99 = vector.broadcast %98 : vector<1x286xi1> to vector<4x286xi1>
    %100 = vector.broadcast %cst_54 : f32 to vector<4x286xf32>
    %101 = arith.select %99, %97, %100 : vector<4x286xi1>, vector<4x286xf32>
    %c12 = arith.constant 12 : index
    %c19_55 = arith.constant 19 : index
    %102 = vector.load %arg9[%c12, %c19_55] : memref<16x324xf32, #tpu.memory_space<vmem>>, vector<4x286xf32>
    tpu.vector_store %arg9[%c12, %c19_55], %101 {strides = array<i32>} : memref<16x324xf32, #tpu.memory_space<vmem>>, vector<4x286xf32>,
    %cst_56 = arith.constant 0.000000e+00 : f32
    %103 = vector.broadcast %cst_56 : f32 to vector<16x286xf32>
    %cst_57 = arith.constant 0.000000e+00 : f32
    %104 = vector.broadcast %cst_57 : f32 to vector<16x286xf32>
    %cst_58 = arith.constant 0.000000e+00 : f32
    %105 = vector.broadcast %cst_58 : f32 to vector<16x286xf32>
    %c8_59 = arith.constant 8 : index
    %c0_60 = arith.constant 0 : index
    %106 = vector.load %arg9[%c8_59, %c0_60] : memref<16x324xf32, #tpu.memory_space<vmem>>, vector<8x286xf32>
    %107 = vector.extract_strided_slice %32 {offsets = [0, 0, 0], sizes = [1, 16, 8], strides = [1, 1, 1]} : vector<9x16x8xf32> to vector<1x16x8xf32>
    %108 = vector.shape_cast %107 : vector<1x16x8xf32> to vector<16x8xf32>
    %cst_61 = arith.constant dense<0.000000e+00> : vector<16x286xf32>
    %109 = tpu.matmul %108, %106, %cst_61 {dimension_numbers = #tpu.dot_dimension_numbers<[1], [0], [0], [1], [0, 0, 1, 1], [], []>} : vector<16x8xf32>, vector<8x286xf32>, vector<16x286xf32> -> vector<16x286xf32>
    %110 = arith.addf %103, %109 : vector<16x286xf32>
    %c8_62 = arith.constant 8 : index
    %c1_63 = arith.constant 1 : index
    %111 = vector.load %arg9[%c8_62, %c1_63] : memref<16x324xf32, #tpu.memory_space<vmem>>, vector<8x286xf32>
    %112 = vector.extract_strided_slice %32 {offsets = [1, 0, 0], sizes = [1, 16, 8], strides = [1, 1, 1]} : vector<9x16x8xf32> to vector<1x16x8xf32>
    %113 = vector.shape_cast %112 : vector<1x16x8xf32> to vector<16x8xf32>
    %cst_64 = arith.constant dense<0.000000e+00> : vector<16x286xf32>
    %114 = tpu.matmul %113, %111, %cst_64 {dimension_numbers = #tpu.dot_dimension_numbers<[1], [0], [0], [1], [0, 0, 1, 1], [], []>} : vector<16x8xf32>, vector<8x286xf32>, vector<16x286xf32> -> vector<16x286xf32>
    %115 = arith.addf %104, %114 : vector<16x286xf32>
    %c8_65 = arith.constant 8 : index
    %c2_66 = arith.constant 2 : index
    %116 = vector.load %arg9[%c8_65, %c2_66] : memref<16x324xf32, #tpu.memory_space<vmem>>, vector<8x286xf32>
    %117 = vector.extract_strided_slice %32 {offsets = [2, 0, 0], sizes = [1, 16, 8], strides = [1, 1, 1]} : vector<9x16x8xf32> to vector<1x16x8xf32>
    %118 = vector.shape_cast %117 : vector<1x16x8xf32> to vector<16x8xf32>
    %cst_67 = arith.constant dense<0.000000e+00> : vector<16x286xf32>
    %119 = tpu.matmul %118, %116, %cst_67 {dimension_numbers = #tpu.dot_dimension_numbers<[1], [0], [0], [1], [0, 0, 1, 1], [], []>} : vector<16x8xf32>, vector<8x286xf32>, vector<16x286xf32> -> vector<16x286xf32>
    %120 = arith.addf %105, %119 : vector<16x286xf32>
    %c8_68 = arith.constant 8 : index
    %c18_69 = arith.constant 18 : index
    %121 = vector.load %arg9[%c8_68, %c18_69] : memref<16x324xf32, #tpu.memory_space<vmem>>, vector<8x286xf32>
    %122 = vector.extract_strided_slice %32 {offsets = [3, 0, 0], sizes = [1, 16, 8], strides = [1, 1, 1]} : vector<9x16x8xf32> to vector<1x16x8xf32>
    %123 = vector.shape_cast %122 : vector<1x16x8xf32> to vector<16x8xf32>
    %cst_70 = arith.constant dense<0.000000e+00> : vector<16x286xf32>
    %124 = tpu.matmul %123, %121, %cst_70 {dimension_numbers = #tpu.dot_dimension_numbers<[1], [0], [0], [1], [0, 0, 1, 1], [], []>} : vector<16x8xf32>, vector<8x286xf32>, vector<16x286xf32> -> vector<16x286xf32>
    %125 = arith.addf %110, %124 : vector<16x286xf32>
    %c8_71 = arith.constant 8 : index
    %c19_72 = arith.constant 19 : index
    %126 = vector.load %arg9[%c8_71, %c19_72] : memref<16x324xf32, #tpu.memory_space<vmem>>, vector<8x286xf32>
    %127 = vector.extract_strided_slice %32 {offsets = [4, 0, 0], sizes = [1, 16, 8], strides = [1, 1, 1]} : vector<9x16x8xf32> to vector<1x16x8xf32>
    %128 = vector.shape_cast %127 : vector<1x16x8xf32> to vector<16x8xf32>
    %cst_73 = arith.constant dense<0.000000e+00> : vector<16x286xf32>
    %129 = tpu.matmul %128, %126, %cst_73 {dimension_numbers = #tpu.dot_dimension_numbers<[1], [0], [0], [1], [0, 0, 1, 1], [], []>} : vector<16x8xf32>, vector<8x286xf32>, vector<16x286xf32> -> vector<16x286xf32>
    %130 = arith.addf %115, %129 : vector<16x286xf32>
    %c8_74 = arith.constant 8 : index
    %c20_75 = arith.constant 20 : index
    %131 = vector.load %arg9[%c8_74, %c20_75] : memref<16x324xf32, #tpu.memory_space<vmem>>, vector<8x286xf32>
    %132 = vector.extract_strided_slice %32 {offsets = [5, 0, 0], sizes = [1, 16, 8], strides = [1, 1, 1]} : vector<9x16x8xf32> to vector<1x16x8xf32>
    %133 = vector.shape_cast %132 : vector<1x16x8xf32> to vector<16x8xf32>
    %cst_76 = arith.constant dense<0.000000e+00> : vector<16x286xf32>
    %134 = tpu.matmul %133, %131, %cst_76 {dimension_numbers = #tpu.dot_dimension_numbers<[1], [0], [0], [1], [0, 0, 1, 1], [], []>} : vector<16x8xf32>, vector<8x286xf32>, vector<16x286xf32> -> vector<16x286xf32>
    %135 = arith.addf %120, %134 : vector<16x286xf32>
    %c8_77 = arith.constant 8 : index
    %c36_78 = arith.constant 36 : index
    %136 = vector.load %arg9[%c8_77, %c36_78] : memref<16x324xf32, #tpu.memory_space<vmem>>, vector<8x286xf32>
    %137 = vector.extract_strided_slice %32 {offsets = [6, 0, 0], sizes = [1, 16, 8], strides = [1, 1, 1]} : vector<9x16x8xf32> to vector<1x16x8xf32>
    %138 = vector.shape_cast %137 : vector<1x16x8xf32> to vector<16x8xf32>
    %cst_79 = arith.constant dense<0.000000e+00> : vector<16x286xf32>
    %139 = tpu.matmul %138, %136, %cst_79 {dimension_numbers = #tpu.dot_dimension_numbers<[1], [0], [0], [1], [0, 0, 1, 1], [], []>} : vector<16x8xf32>, vector<8x286xf32>, vector<16x286xf32> -> vector<16x286xf32>
    %140 = arith.addf %125, %139 : vector<16x286xf32>
    %c8_80 = arith.constant 8 : index
    %c37_81 = arith.constant 37 : index
    %141 = vector.load %arg9[%c8_80, %c37_81] : memref<16x324xf32, #tpu.memory_space<vmem>>, vector<8x286xf32>
    %142 = vector.extract_strided_slice %32 {offsets = [7, 0, 0], sizes = [1, 16, 8], strides = [1, 1, 1]} : vector<9x16x8xf32> to vector<1x16x8xf32>
    %143 = vector.shape_cast %142 : vector<1x16x8xf32> to vector<16x8xf32>
    %cst_82 = arith.constant dense<0.000000e+00> : vector<16x286xf32>
    %144 = tpu.matmul %143, %141, %cst_82 {dimension_numbers = #tpu.dot_dimension_numbers<[1], [0], [0], [1], [0, 0, 1, 1], [], []>} : vector<16x8xf32>, vector<8x286xf32>, vector<16x286xf32> -> vector<16x286xf32>
    %145 = arith.addf %130, %144 : vector<16x286xf32>
    %c8_83 = arith.constant 8 : index
    %c38_84 = arith.constant 38 : index
    %146 = vector.load %arg9[%c8_83, %c38_84] : memref<16x324xf32, #tpu.memory_space<vmem>>, vector<8x286xf32>
    %147 = vector.extract_strided_slice %32 {offsets = [8, 0, 0], sizes = [1, 16, 8], strides = [1, 1, 1]} : vector<9x16x8xf32> to vector<1x16x8xf32>
    %148 = vector.shape_cast %147 : vector<1x16x8xf32> to vector<16x8xf32>
    %cst_85 = arith.constant dense<0.000000e+00> : vector<16x286xf32>
    %149 = tpu.matmul %148, %146, %cst_85 {dimension_numbers = #tpu.dot_dimension_numbers<[1], [0], [0], [1], [0, 0, 1, 1], [], []>} : vector<16x8xf32>, vector<8x286xf32>, vector<16x286xf32> -> vector<16x286xf32>
    %150 = arith.addf %135, %149 : vector<16x286xf32>
    %151 = arith.addf %140, %145 : vector<16x286xf32>
    %152 = arith.addf %151, %150 : vector<16x286xf32>
    %153 = vector.broadcast %33 : vector<16x1xf32> to vector<16x286xf32>
    %154 = arith.addf %152, %153 : vector<16x286xf32>
    %c0_86 = arith.constant 0 : index
    %c0_87 = arith.constant 0 : index
    %c0_88 = arith.constant 0 : index
    %155 = vector.load %arg8[%c0_86, %c0_87, %c0_88] : memref<1x16x286xf32, #tpu.memory_space<vmem>>, vector<1x16x286xf32>
    %156 = vector.shape_cast %155 : vector<1x16x286xf32> to vector<16x286xf32>
    %157 = vector.shape_cast %154 : vector<16x286xf32> to vector<1x16x286xf32>
    tpu.vector_store %arg8[%c0_86, %c0_87, %c0_88], %157 {strides = array<i32>} : memref<1x16x286xf32, #tpu.memory_space<vmem>>, vector<1x16x286xf32>,
    return
  }
  func.func @transform_0(%arg0: i32) -> (i32, i32, i32) {
    %c0_i32 = arith.constant 0 : i32
    %c0_i32_0 = arith.constant 0 : i32
    %c0_i32_1 = arith.constant 0 : i32
    return %arg0, %c0_i32, %c0_i32_0 : i32, i32, i32
  }
  func.func @transform_1(%arg0: i32) -> (i32, i32) {
    %c0_i32 = arith.constant 0 : i32
    %c0_i32_0 = arith.constant 0 : i32
    %c0_i32_1 = arith.constant 0 : i32
    return %c0_i32, %c0_i32_0 : i32, i32
  }
  func.func @transform_2(%arg0: i32) -> (i32, i32) {
    %c0_i32 = arith.constant 0 : i32
    %c0_i32_0 = arith.constant 0 : i32
    %c0_i32_1 = arith.constant 0 : i32
    return %c0_i32, %c0_i32_0 : i32, i32
  }
  func.func @transform_3(%arg0: i32) -> (i32, i32, i32) {
    %c0_i32 = arith.constant 0 : i32
    %c0_i32_0 = arith.constant 0 : i32
    %c0_i32_1 = arith.constant 0 : i32
    %c0_i32_2 = arith.constant 0 : i32
    return %c0_i32, %c0_i32_0, %c0_i32_1 : i32, i32, i32
  }
  func.func @transform_4(%arg0: i32) -> (i32, i32) {
    %c0_i32 = arith.constant 0 : i32
    %c0_i32_0 = arith.constant 0 : i32
    %c0_i32_1 = arith.constant 0 : i32
    return %c0_i32, %c0_i32_0 : i32, i32
  }
  func.func @transform_5(%arg0: i32) -> (i32, i32, i32) {
    %c0_i32 = arith.constant 0 : i32
    %c0_i32_0 = arith.constant 0 : i32
    %c0_i32_1 = arith.constant 0 : i32
    %c0_i32_2 = arith.constant 0 : i32
    return %c0_i32, %c0_i32_0, %c0_i32_1 : i32, i32, i32
  }
  func.func @transform_6(%arg0: i32) -> (i32, i32) {
    %c0_i32 = arith.constant 0 : i32
    %c0_i32_0 = arith.constant 0 : i32
    %c0_i32_1 = arith.constant 0 : i32
    return %c0_i32, %c0_i32_0 : i32, i32
  }
  func.func @transform_7(%arg0: i32) -> (i32, i32, i32) {
    %c0_i32 = arith.constant 0 : i32
    %c0_i32_0 = arith.constant 0 : i32
    %c0_i32_1 = arith.constant 0 : i32
    return %arg0, %c0_i32, %c0_i32_0 : i32, i32, i32
  }
}

</mosaic_0001>

<llo_original>
// kernel: _lambda_.1
$region0: #{_lambda_.1}
  #allocation0 [shape = 'u32[]', space=smem, size = 0x4, offset = 0x4, fixed_abs, tag = 'smem constant byte address 0x4 - core index']
  #allocation1 [shape = 'u32[144,128]{1,0:T(1,128)}', space=vmem, size = 0x12000, scoped, tag = 'internal scratch']
  #allocation2 [shape = 'f32[16,324]{1,0:T(8,128)}', space=vmem, size = 0x6000, scoped, tag = 'scratch operand']
  %s0 = inlined_call_operand.vmem [shape: f32[2,4,324], index: 0, kind: input, shape index: {}]
  %s1 = inlined_call_operand.vmem [shape: f32[4,4], index: 1, kind: input, shape index: {}]
  %s2 = inlined_call_operand.vmem [shape: f32[4,1], index: 2, kind: input, shape index: {}]
  %s3 = inlined_call_operand.vmem [shape: f32[9,4,4], index: 3, kind: input, shape index: {}]
  %s4 = inlined_call_operand.vmem [shape: f32[4,1], index: 4, kind: input, shape index: {}]
  %s5 = inlined_call_operand.vmem [shape: f32[9,16,8], index: 5, kind: input, shape index: {}]
  %s6 = inlined_call_operand.vmem [shape: f32[16,1], index: 6, kind: input, shape index: {}]
  %s7 = inlined_call_operand.vmem [shape: f32[2,16,286], index: 7, kind: output, shape index: {}]
  %s8 = sld [smem:[#allocation0]]
  $region61: #{_lambda_.1} parent=0
    _
  %s10 = ssub.s32 1, %s8
  %s11 = scalar_select 0, %s10, %s8
  loop: start=0, step=1, limit=4
  $region2: #{_lambda_.1} parent=0 // loop_pre_header
    _
  $region3: #{_lambda_.1} parent=0 // loop_header
    %s13 = sphi 0, %s17
    %p14 = scmp.ge.s32.totalorder %s13, 4
    %s23 = sphi 0, %s25
    %s26 = sphi 0, %s23
    %s27 = sphi 0, %s26
    %s43 = sphi 0, %s27
    %s47 = sphi 0, %s47
    %s49 = sphi 0, %s47
    %s50 = sphi 0, %s49
    %s64 = sphi 0, %s50
    %s68 = sphi 0, %s68
    %s70 = sphi 0, %s68
    %s71 = sphi 0, %s70
    %s85 = sphi 0, %s71
    %s89 = sphi 0, %s89
    %s91 = sphi 0, %s89
    %s92 = sphi 0, %s91
    %s106 = sphi 0, %s92
    %s110 = sphi 0, %s110
    %s112 = sphi 0, %s110
    %s113 = sphi 0, %s112
    %s127 = sphi 0, %s113
    %s131 = sphi 0, %s131
    %s133 = sphi 0, %s131
    %s134 = sphi 0, %s133
    %s148 = sphi 0, %s134
    %s152 = sphi 0, %s152
    %s154 = sphi 0, %s152
    %s155 = sphi 0, %s154
    %s169 = sphi 0, %s155
    %s175 = sphi 0, %s177
    %s178 = sphi 0, %s175
    %s179 = sphi 0, %s178
    %s195 = sphi 0, %s179
  $region4: #{_lambda_.1} parent=0 // loop_header_branch
    %16 = sbr.rel (%p14) target = $region8
  $region5: #{_lambda_.1} parent=0 // loop_body
    %s18 = ssub.s32 %s13, 1
    %s19 = ssub.s32 %s13, 2
    %s20 = sadd.s32 %s13, 1
    %s21 = ssub.s32 %s13, %s20
    %p22 = scmp.eq.s32.totalorder %s21, 0
    %s24 = sadd.s32 %s23, 1
    %s25 = scalar_select %p22, %s23, %s24
    %p28 = pneg %p22
    %p29 = scmp.eq.s32.totalorder %s13, 1
    %p30 = por %p28, %p29
    %p31 = scmp.ne.s32.totalorder %s23, %s26
    %p32 = scmp.eq.s32.totalorder %s13, 0
    %p33 = por %p31, %p32
    %p34 = scmp.ne.s32.totalorder %s23, %s26
    %p35 = scmp.eq.s32.totalorder %s18, 1
    %p36 = por %p34, %p35
    %p37 = scmp.ne.s32.totalorder %s26, %s27
    %p38 = scmp.eq.s32.totalorder %s18, 0
    %p39 = por %p37, %p38
    %p40 = scmp.ne.s32.totalorder %s26, %s27
    %p41 = scmp.eq.s32.totalorder %s19, 1
    %p42 = por %p40, %p41
    %p44 = scmp.ne.s32.totalorder %s27, %s43
    %p45 = scmp.eq.s32.totalorder %s19, 0
    %p46 = por %p44, %p45
    %s48 = sadd.s32 %s47, 1
    %p51 = scmp.eq.s32.totalorder %s13, 1
    %p52 = scmp.ne.s32.totalorder %s47, %s49
    %p53 = scmp.eq.s32.totalorder %s13, 0
    %p54 = por %p52, %p53
    %p55 = scmp.ne.s32.totalorder %s47, %s49
    %p56 = scmp.eq.s32.totalorder %s18, 1
    %p57 = por %p55, %p56
    %p58 = scmp.ne.s32.totalorder %s49, %s50
    %p59 = scmp.eq.s32.totalorder %s18, 0
    %p60 = por %p58, %p59
    %p61 = scmp.ne.s32.totalorder %s49, %s50
    %p62 = scmp.eq.s32.totalorder %s19, 1
    %p63 = por %p61, %p62
    %p65 = scmp.ne.s32.totalorder %s50, %s64
    %p66 = scmp.eq.s32.totalorder %s19, 0
    %p67 = por %p65, %p66
    %s69 = sadd.s32 %s68, 1
    %p72 = scmp.eq.s32.totalorder %s13, 1
    %p73 = scmp.ne.s32.totalorder %s68, %s70
    %p74 = scmp.eq.s32.totalorder %s13, 0
    %p75 = por %p73, %p74
    %p76 = scmp.ne.s32.totalorder %s68, %s70
    %p77 = scmp.eq.s32.totalorder %s18, 1
    %p78 = por %p76, %p77
    %p79 = scmp.ne.s32.totalorder %s70, %s71
    %p80 = scmp.eq.s32.totalorder %s18, 0
    %p81 = por %p79, %p80
    %p82 = scmp.ne.s32.totalorder %s70, %s71
    %p83 = scmp.eq.s32.totalorder %s19, 1
    %p84 = por %p82, %p83
    %p86 = scmp.ne.s32.totalorder %s71, %s85
    %p87 = scmp.eq.s32.totalorder %s19, 0
    %p88 = por %p86, %p87
    %s90 = sadd.s32 %s89, 1
    %p93 = scmp.eq.s32.totalorder %s13, 1
    %p94 = scmp.ne.s32.totalorder %s89, %s91
    %p95 = scmp.eq.s32.totalorder %s13, 0
    %p96 = por %p94, %p95
    %p97 = scmp.ne.s32.totalorder %s89, %s91
    %p98 = scmp.eq.s32.totalorder %s18, 1
    %p99 = por %p97, %p98
    %p100 = scmp.ne.s32.totalorder %s91, %s92
    %p101 = scmp.eq.s32.totalorder %s18, 0
    %p102 = por %p100, %p101
    %p103 = scmp.ne.s32.totalorder %s91, %s92
    %p104 = scmp.eq.s32.totalorder %s19, 1
    %p105 = por %p103, %p104
    %p107 = scmp.ne.s32.totalorder %s92, %s106
    %p108 = scmp.eq.s32.totalorder %s19, 0
    %p109 = por %p107, %p108
    %s111 = sadd.s32 %s110, 1
    %p114 = scmp.eq.s32.totalorder %s13, 1
    %p115 = scmp.ne.s32.totalorder %s110, %s112
    %p116 = scmp.eq.s32.totalorder %s13, 0
    %p117 = por %p115, %p116
    %p118 = scmp.ne.s32.totalorder %s110, %s112
    %p119 = scmp.eq.s32.totalorder %s18, 1
    %p120 = por %p118, %p119
    %p121 = scmp.ne.s32.totalorder %s112, %s113
    %p122 = scmp.eq.s32.totalorder %s18, 0
    %p123 = por %p121, %p122
    %p124 = scmp.ne.s32.totalorder %s112, %s113
    %p125 = scmp.eq.s32.totalorder %s19, 1
    %p126 = por %p124, %p125
    %p128 = scmp.ne.s32.totalorder %s113, %s127
    %p129 = scmp.eq.s32.totalorder %s19, 0
    %p130 = por %p128, %p129
    %s132 = sadd.s32 %s131, 1
    %p135 = scmp.eq.s32.totalorder %s13, 1
    %p136 = scmp.ne.s32.totalorder %s131, %s133
    %p137 = scmp.eq.s32.totalorder %s13, 0
    %p138 = por %p136, %p137
    %p139 = scmp.ne.s32.totalorder %s131, %s133
    %p140 = scmp.eq.s32.totalorder %s18, 1
    %p141 = por %p139, %p140
    %p142 = scmp.ne.s32.totalorder %s133, %s134
    %p143 = scmp.eq.s32.totalorder %s18, 0
    %p144 = por %p142, %p143
    %p145 = scmp.ne.s32.totalorder %s133, %s134
    %p146 = scmp.eq.s32.totalorder %s19, 1
    %p147 = por %p145, %p146
    %p149 = scmp.ne.s32.totalorder %s134, %s148
    %p150 = scmp.eq.s32.totalorder %s19, 0
    %p151 = por %p149, %p150
    %s153 = sadd.s32 %s152, 1
    %p156 = scmp.eq.s32.totalorder %s13, 1
    %p157 = scmp.ne.s32.totalorder %s152, %s154
    %p158 = scmp.eq.s32.totalorder %s13, 0
    %p159 = por %p157, %p158
    %p160 = scmp.ne.s32.totalorder %s152, %s154
    %p161 = scmp.eq.s32.totalorder %s18, 1
    %p162 = por %p160, %p161
    %p163 = scmp.ne.s32.totalorder %s154, %s155
    %p164 = scmp.eq.s32.totalorder %s18, 0
    %p165 = por %p163, %p164
    %p166 = scmp.ne.s32.totalorder %s154, %s155
    %p167 = scmp.eq.s32.totalorder %s19, 1
    %p168 = por %p166, %p167
    %p170 = scmp.ne.s32.totalorder %s155, %s169
    %p171 = scmp.eq.s32.totalorder %s19, 0
    %p172 = por %p170, %p171
    %s173 = ssub.s32 %s13, %s20
    %p174 = scmp.eq.s32.totalorder %s173, 0
    %s176 = sadd.s32 %s175, 1
    %s177 = scalar_select %p174, %s175, %s176
    %p180 = pneg %p174
    %p181 = scmp.eq.s32.totalorder %s13, 1
    %p182 = por %p180, %p181
    %p183 = scmp.ne.s32.totalorder %s175, %s178
    %p184 = scmp.eq.s32.totalorder %s13, 0
    %p185 = por %p183, %p184
    %p186 = scmp.ne.s32.totalorder %s175, %s178
    %p187 = scmp.eq.s32.totalorder %s18, 1
    %p188 = por %p186, %p187
    %p189 = scmp.ne.s32.totalorder %s178, %s179
    %p190 = scmp.eq.s32.totalorder %s18, 0
    %p191 = por %p189, %p190
    %p192 = scmp.ne.s32.totalorder %s178, %s179
    %p193 = scmp.eq.s32.totalorder %s19, 1
    %p194 = por %p192, %p193
    %p196 = scmp.ne.s32.totalorder %s179, %s195
    %p197 = scmp.eq.s32.totalorder %s19, 0
    %p198 = por %p196, %p197
    %p199 = scmp.le.s32.totalorder 1, %s13
    %p200 = scmp.lt.s32.totalorder %s13, 3
    %p201 = pnand %p199, %p200
    %p202 = pneg %p201
    // Predicated region
    $region9: #{_lambda_.1} parent=5 // pred_check
      _
    $region10: #{_lambda_.1} parent=5 // pred_check_branch
      %204 = sbr.rel (%p201) target = $region12
    $region11: #{_lambda_.1} parent=5 // pred_region
      %s205 = ssub.s32 %s13, 1
      // Predicated region
      $region13: #{_lambda_.1} parent=11 // pred_check
        %p206 = pneg %p60
      $region14: #{_lambda_.1} parent=11 // pred_check_branch
        %208 = sbr.rel (%p206) target = $region16
      $region15: #{_lambda_.1} parent=11 // pred_region
        _
      $region16: #{_lambda_.1} parent=11 // pred_fallthru
        _
      // Predicated region
      $region17: #{_lambda_.1} parent=11 // pred_check
        %p209 = pneg %p81
      $region18: #{_lambda_.1} parent=11 // pred_check_branch
        %211 = sbr.rel (%p209) target = $region20
      $region19: #{_lambda_.1} parent=11 // pred_region
        _
      $region20: #{_lambda_.1} parent=11 // pred_fallthru
        _
      // Predicated region
      $region21: #{_lambda_.1} parent=11 // pred_check
        %p212 = pneg %p102
      $region22: #{_lambda_.1} parent=11 // pred_check_branch
        %214 = sbr.rel (%p212) target = $region24
      $region23: #{_lambda_.1} parent=11 // pred_region
        _
      $region24: #{_lambda_.1} parent=11 // pred_fallthru
        _
      // Predicated region
      $region25: #{_lambda_.1} parent=11 // pred_check
        %p215 = pneg %p123
      $region26: #{_lambda_.1} parent=11 // pred_check_branch
        %217 = sbr.rel (%p215) target = $region28
      $region27: #{_lambda_.1} parent=11 // pred_region
        _
      $region28: #{_lambda_.1} parent=11 // pred_fallthru
        _
      // Predicated region
      $region29: #{_lambda_.1} parent=11 // pred_check
        %p218 = pneg %p144
      $region30: #{_lambda_.1} parent=11 // pred_check_branch
        %220 = sbr.rel (%p218) target = $region32
      $region31: #{_lambda_.1} parent=11 // pred_region
        _
      $region32: #{_lambda_.1} parent=11 // pred_fallthru
        _
      // Predicated region
      $region33: #{_lambda_.1} parent=11 // pred_check
        %p221 = pneg %p165
      $region34: #{_lambda_.1} parent=11 // pred_check_branch
        %223 = sbr.rel (%p221) target = $region36
      $region35: #{_lambda_.1} parent=11 // pred_region
        _
      $region36: #{_lambda_.1} parent=11 // pred_fallthru
        _
    $region12: #{_lambda_.1} parent=5 // pred_fallthru
      _
    %p224 = scmp.lt.s32.totalorder %s13, 2
    // Predicated region
    $region37: #{_lambda_.1} parent=5 // pred_check
      %p225 = pneg %p224
    $region38: #{_lambda_.1} parent=5 // pred_check_branch
      %227 = sbr.rel (%p225) target = $region40
    $region39: #{_lambda_.1} parent=5 // pred_region
      // Predicated region
      $region41: #{_lambda_.1} parent=39 // pred_check
        %p228 = pneg %p33
      $region42: #{_lambda_.1} parent=39 // pred_check_branch
        %230 = sbr.rel (%p228) target = $region44
      $region43: #{_lambda_.1} parent=39 // pred_region
        %p231 = scmp.lt.s32.totalorder %s13, 1
        %s232 = scalar_select %p231, %s13, 1
        %s233 = smul.addr %s232, 3
        %s234 = smul.addr %s233, 4
        %s235 = scalar_lea.vmem %s0, %s234
      $region44: #{_lambda_.1} parent=39 // pred_fallthru
        _
    $region40: #{_lambda_.1} parent=5 // pred_fallthru
      _
    %p236 = scmp.le.s32.totalorder 1, %s13
    %p237 = scmp.lt.s32.totalorder %s13, 3
    %p238 = pnand %p236, %p237
    %p239 = pneg %p238
    // Predicated region
    $region45: #{_lambda_.1} parent=5 // pred_check
      _
    $region46: #{_lambda_.1} parent=5 // pred_check_branch
      %241 = sbr.rel (%p238) target = $region48
    $region47: #{_lambda_.1} parent=5 // pred_region
      %s242 = ssub.s32 %s13, 1
      %p243 = scmp.lt.s32.totalorder %s18, 1
      %s244 = scalar_select %p243, %s18, 1
      %s245 = smul.addr %s244, 3
      %s246 = smul.addr %s245, 4
      %s247 = scalar_lea.vmem %s0, %s246
      %p248 = pneg %p39
      %p249 = pneg %p36
      %p250 = pneg %p60
      %p251 = pneg %p57
      %p252 = pneg %p81
      %p253 = pneg %p78
      %p254 = pneg %p102
      %p255 = pneg %p99
      %p256 = pneg %p123
      %p257 = pneg %p120
      %p258 = pneg %p144
      %p259 = pneg %p141
      %p260 = pneg %p165
      %p261 = pneg %p162
      %p262 = pneg %p191
      %p263 = pneg %p188
      %p264 = scmp.lt.s32.totalorder %s18, 1
      %s265 = scalar_select %p264, %s18, 1
      %s266 = smul.addr %s265, 6
      %s267 = smul.addr %s266, 8
      %s268 = scalar_lea.vmem %s7, %s267
      %p269 = scmp.lt.s32.totalorder %s18, 1
      %s270 = scalar_select %p269, %s18, 1
      %s271 = smul.addr %s270, 3
      %s272 = smul.addr %s271, 4
      %s273 = scalar_lea.vmem %s0, %s272
      %p274 = scmp.lt.s32.totalorder %s18, 1
      %s275 = scalar_select %p274, %s18, 1
      %s276 = smul.addr %s275, 6
      %s277 = smul.addr %s276, 8
      %s278 = scalar_lea.vmem %s7, %s277
      %vm279 = vcmask 154624
      %280 = vst.msk [vmem:[#allocation2] sm:$0xff] %vm279, 0.0
      %281 = vst.msk [vmem:[#allocation2 + $0x18] sm:$0xff] %vm279, 0.0
      %vm282 = vcmask 556424
      %283 = vst.msk [vmem:[#allocation2 + $0x10] sm:$0xff] %vm282, 0.0
      %284 = vst.msk [vmem:[#allocation2 + $0x28] sm:$0xff] %vm282, 0.0
      %v285 = vlaneseq
      %v286 = vand.u32 %v285, 127
      %v287 = vadd.s32 %v286, 128
      %v288 = vadd.s32 %v286, 256
      %v289 = vadd.s32 %v286, 1
      %v290 = vadd.s32 %v287, 1
      %v291 = vadd.s32 %v288, 1
      %vm292 = vcmp.lt.s32.totalorder %v289, 0
      %v293 = vsub.s32 0, %v289
      %v294 = vsel %vm292, %v293, %v289
      %v295 = vmul.u32.u64.compose %v294, 3817748708
      %v296 = vextract.low.u32 %v295
      %v297 = vextract.high.u32 %v295
      %v298 = vshrl.u32 %v297, 4
      %v299 = vmul.u32 %v298, 18
      %v300 = vsub.s32 %v294, %v299
      %v301 = vsub.s32 0, %v300
      %v302 = vsel %vm292, %v301, %v300
      %vm303 = vcmp.lt.s32.totalorder %v290, 0
      %v304 = vsub.s32 0, %v290
      %v305 = vsel %vm303, %v304, %v290
      %v306 = vmul.u32.u64.compose %v305, 3817748708
      %v307 = vextract.low.u32 %v306
      %v308 = vextract.high.u32 %v306
      %v309 = vshrl.u32 %v308, 4
      %v310 = vmul.u32 %v309, 18
      %v311 = vsub.s32 %v305, %v310
      %v312 = vsub.s32 0, %v311
      %v313 = vsel %vm303, %v312, %v311
      %vm314 = vcmp.lt.s32.totalorder %v291, 0
      %v315 = vsub.s32 0, %v291
      %v316 = vsel %vm314, %v315, %v291
      %v317 = vmul.u32.u64.compose %v316, 3817748708
      %v318 = vextract.low.u32 %v317
      %v319 = vextract.high.u32 %v317
      %v320 = vshrl.u32 %v319, 4
      %v321 = vmul.u32 %v320, 18
      %v322 = vsub.s32 %v316, %v321
      %v323 = vsub.s32 0, %v322
      %v324 = vsel %vm314, %v323, %v322
      %vm325 = vcmp.ne.s32.totalorder %v302, 0
      %vm326 = vcmp.ne.s32.totalorder %v313, 0
      %vm327 = vcmp.ne.s32.totalorder %v324, 0
      %vm328 = vcmp.lt.s32.totalorder %v302, 0
      %vm329 = vcmp.lt.s32.totalorder %v313, 0
      %vm330 = vcmp.lt.s32.totalorder %v324, 0
      %vm331 = vmand %vm328, %vm325
      %vm332 = vmand %vm329, %vm326
      %vm333 = vmand %vm330, %vm327
      %v334 = vadd.s32 %v302, 18
      %v335 = vadd.s32 %v313, 18
      %v336 = vadd.s32 %v324, 18
      %v337 = vsel %vm331, %v334, %v302
      %v338 = vsel %vm332, %v335, %v313
      %v339 = vsel %vm333, %v336, %v324
      %vm340 = vcmp.ge.s32.totalorder %v337, 1
      %vm341 = vcmp.ge.s32.totalorder %v338, 1
      %vm342 = vcmp.ge.s32.totalorder %v339, 1
      %vm343 = vcmp.le.s32.totalorder %v337, 16
      %vm344 = vcmp.le.s32.totalorder %v338, 16
      %vm345 = vcmp.le.s32.totalorder %v339, 16
      %vm346 = vmand %vm340, %vm343
      %vm347 = vmand %vm341, %vm344
      %vm348 = vmand %vm342, %vm345
      %v349 = vld [vmem:[%s1] sm:$0xf]
      %v350 = vld [vmem:[%s2] sm:$0xf]
      %v351 = vld [vmem:[%s3] sm:$0xf]
      %v352 = vld [vmem:[%s3 + $0x4] sm:$0xf]
      %v353 = vld [vmem:[%s3 + $0x8] sm:$0xf]
      %v354 = vld [vmem:[%s3 + $0xc] sm:$0xf]
      %v355 = vld [vmem:[%s3 + $0x10] sm:$0xf]
      %v356 = vld [vmem:[%s3 + $0x14] sm:$0xf]
      %v357 = vld [vmem:[%s3 + $0x18] sm:$0xf]
      %v358 = vld [vmem:[%s3 + $0x1c] sm:$0xf]
      %v359 = vld [vmem:[%s3 + $0x20] sm:$0xf]
      %v360 = vld [vmem:[%s4] sm:$0xf]
      %v361 = vld [vmem:[%s5] sm:$0xff]
      %v362 = vld [vmem:[%s5 + $0x8] sm:$0xff]
      %v363 = vld [vmem:[%s5 + $0x10] sm:$0xff]
      %v364 = vld [vmem:[%s5 + $0x18] sm:$0xff]
      %v365 = vld [vmem:[%s5 + $0x20] sm:$0xff]
      %v366 = vld [vmem:[%s5 + $0x28] sm:$0xff]
      %v367 = vld [vmem:[%s5 + $0x30] sm:$0xff]
      %v368 = vld [vmem:[%s5 + $0x38] sm:$0xff]
      %v369 = vld [vmem:[%s5 + $0x40] sm:$0xff]
      %v370 = vld [vmem:[%s5 + $0x48] sm:$0xff]
      %v371 = vld [vmem:[%s5 + $0x50] sm:$0xff]
      %v372 = vld [vmem:[%s5 + $0x58] sm:$0xff]
      %v373 = vld [vmem:[%s5 + $0x60] sm:$0xff]
      %v374 = vld [vmem:[%s5 + $0x68] sm:$0xff]
      %v375 = vld [vmem:[%s5 + $0x70] sm:$0xff]
      %v376 = vld [vmem:[%s5 + $0x78] sm:$0xff]
      %v377 = vld [vmem:[%s5 + $0x80] sm:$0xff]
      %v378 = vld [vmem:[%s5 + $0x88] sm:$0xff]
      %v379 = vld [vmem:[%s6] sm:$0xff]
      %v380 = vld [vmem:[%s6 + $0x8] sm:$0xff]
      %v381 = vld [vmem:[%s273] sm:$0xff]
      %v382 = vld [vmem:[%s273 + $0x8] sm:$0xf]
      %v384 = vcombine.high %v381, %v381
      %386 = vst [vmem:[#allocation2 + $0x18] sm:$0xf] %v381
      %387 = vst [vmem:[#allocation2 + $0x20] sm:$0xf] %v384
      %vm388 = vcmask 551936
      %389 = vst.msk [vmem:[#allocation2 + $0x28] sm:$0xf] %vm388, %v382
      %v390 = vld [vmem:[#allocation2 + $0x18] sm:$0xf]
      %v391 = vld [vmem:[#allocation2 + $0x20] sm:$0xf]
      %v392 = vld [vmem:[#allocation2 + $0x28] sm:$0xf]
      %394 = vset.pattern.permute.xlu0 0
      %395 = vperm.xlu0 %394, %v350
      %v396 = vpop.permute.xlu0 %395
      %401 = vrot.lane.b32.xlu0 %v390, 109
      %v402 = vpop.permute.xlu0 %401
      %403 = vrot.lane.b32.xlu0 %v391, 109
      %v404 = vpop.permute.xlu0 %403
      %405 = vrot.lane.b32.xlu0 %v392, 109
      %v406 = vpop.permute.xlu0 %405
      %vm407 = vcmask 891904
      %v408 = vsel %vm407, %v402, %v404
      %v409 = vsel %vm407, %v404, %v406
      %vm410 = vcmask 31744
      %v412 = vsel %vm410, %v349, 0
      %vm414 = vcmask 1043456
      %v415 = vsel %vm414, %v408, 0
      %v417 = vsel %vm414, %v409, 0
      %v419 = vsel %vm414, %v406, 0
      %421 = vmatprep.subr.mxu0 0.0
      %422 = vmatpush1.msra.mxu0 0.0
      %423 = vmatprep.subr.mxu0 0.0
      %424 = vmatpush1.msra.mxu0 0.0
      %425 = vmatprep.subr.mxu0 0.0
      %426 = vmatpush1.msra.mxu0 0.0
      %427 = vmatprep.subr.mxu0 0.0
      %428 = vmatpush1.msra.mxu0 0.0
      %429 = vmatprep.subr.mxu0 0.0
      %430 = vmatpush1.msra.mxu0 0.0
      %431 = vmatprep.subr.mxu0 0.0
      %432 = vmatpush1.msra.mxu0 0.0
      %433 = vmatprep.subr.mxu0 0.0
      %434 = vmatpush1.msra.mxu0 0.0
      %435 = vmatprep.subr.mxu0 0.0
      %436 = vmatpush1.msra.mxu0 0.0
      %437 = vmatprep.subr.mxu0 0.0
      %438 = vmatpush1.msra.mxu0 0.0
      %439 = vmatprep.subr.mxu0 0.0
      %440 = vmatpush1.msra.mxu0 0.0
      %441 = vmatprep.subr.mxu0 0.0
      %442 = vmatpush1.msra.mxu0 0.0
      %443 = vmatprep.subr.mxu0 0.0
      %444 = vmatpush1.msra.mxu0 0.0
      %445 = vmatprep.subr.mxu0 0.0
      %446 = vmatpush1.msra.mxu0 0.0
      %447 = vmatprep.subr.mxu0 0.0
      %448 = vmatpush1.msra.mxu0 0.0
      %449 = vmatprep.subr.mxu0 0.0
      %450 = vmatpush1.msra.mxu0 0.0
      %451 = vmatprep.subr.mxu0 %v417
      %452 = vmatpush1.msra.mxu0 %v415
      %453 = vmatprep.subr.mxu0 0.0
      %454 = vmatpush2.msra.mxu0 0.0
      %455 = vmatprep.subr.mxu0 0.0
      %456 = vmatpush2.msra.mxu0 0.0
      %457 = vmatprep.subr.mxu0 0.0
      %458 = vmatpush2.msra.mxu0 0.0
      %459 = vmatprep.subr.mxu0 0.0
      %460 = vmatpush2.msra.mxu0 0.0
      %461 = vmatprep.subr.mxu0 0.0
      %462 = vmatpush2.msra.mxu0 0.0
      %463 = vmatprep.subr.mxu0 0.0
      %464 = vmatpush2.msra.mxu0 0.0
      %465 = vmatprep.subr.mxu0 0.0
      %466 = vmatpush2.msra.mxu0 0.0
      %467 = vmatprep.subr.mxu0 0.0
      %468 = vmatpush2.msra.mxu0 0.0
      %469 = vmatprep.subr.mxu0 0.0
      %470 = vmatpush2.msra.mxu0 0.0
      %471 = vmatprep.subr.mxu0 0.0
      %472 = vmatpush2.msra.mxu0 0.0
      %473 = vmatprep.subr.mxu0 0.0
      %474 = vmatpush2.msra.mxu0 0.0
      %475 = vmatprep.subr.mxu0 0.0
      %476 = vmatpush2.msra.mxu0 0.0
      %477 = vmatprep.subr.mxu0 0.0
      %478 = vmatpush2.msra.mxu0 0.0
      %479 = vmatprep.subr.mxu0 0.0
      %480 = vmatpush2.msra.mxu0 0.0
      %481 = vmatprep.subr.mxu0 0.0
      %482 = vmatpush2.msra.mxu0 0.0
      %483 = vmatprep.subr.mxu0 0.0
      %484 = vmatpush2.msra.mxu0 0.0
      %485 = vmatprep.mubr.f32.mxu0 0.0
      %486 = vmatmul.mubr.f32.gmra.mxu0 %v412
      %v487 = vpop.f32.mrf.mxu0
      %v488 = vadd.f32 %v396, %v487
      %v489 = vpop.f32.mrf.mxu0
      %v490 = vadd.f32 %v396, %v489
      %491 = vdwg.mxu0
      %492 = vmatprep.subr.mxu0 0.0
      %493 = vmatpush1.msra.mxu0 0.0
      %494 = vmatprep.subr.mxu0 0.0
      %495 = vmatpush1.msra.mxu0 0.0
      %496 = vmatprep.subr.mxu0 0.0
      %497 = vmatpush1.msra.mxu0 0.0
      %498 = vmatprep.subr.mxu0 0.0
      %499 = vmatpush1.msra.mxu0 0.0
      %500 = vmatprep.subr.mxu0 0.0
      %501 = vmatpush1.msra.mxu0 0.0
      %502 = vmatprep.subr.mxu0 0.0
      %503 = vmatpush1.msra.mxu0 0.0
      %504 = vmatprep.subr.mxu0 0.0
      %505 = vmatpush1.msra.mxu0 0.0
      %506 = vmatprep.subr.mxu0 0.0
      %507 = vmatpush1.msra.mxu0 0.0
      %508 = vmatprep.subr.mxu0 0.0
      %509 = vmatpush1.msra.mxu0 0.0
      %510 = vmatprep.subr.mxu0 0.0
      %511 = vmatpush1.msra.mxu0 0.0
      %512 = vmatprep.subr.mxu0 0.0
      %513 = vmatpush1.msra.mxu0 0.0
      %514 = vmatprep.subr.mxu0 0.0
      %515 = vmatpush1.msra.mxu0 0.0
      %516 = vmatprep.subr.mxu0 0.0
      %517 = vmatpush1.msra.mxu0 0.0
      %518 = vmatprep.subr.mxu0 0.0
      %519 = vmatpush1.msra.mxu0 0.0
      %520 = vmatprep.subr.mxu0 0.0
      %521 = vmatpush1.msra.mxu0 0.0
      %522 = vmatprep.subr.mxu0 0.0
      %523 = vmatpush1.msra.mxu0 %v419
      %524 = vmatprep.subr.mxu0 0.0
      %525 = vmatpush2.msra.mxu0 0.0
      %526 = vmatprep.subr.mxu0 0.0
      %527 = vmatpush2.msra.mxu0 0.0
      %528 = vmatprep.subr.mxu0 0.0
      %529 = vmatpush2.msra.mxu0 0.0
      %530 = vmatprep.subr.mxu0 0.0
      %531 = vmatpush2.msra.mxu0 0.0
      %532 = vmatprep.subr.mxu0 0.0
      %533 = vmatpush2.msra.mxu0 0.0
      %534 = vmatprep.subr.mxu0 0.0
      %535 = vmatpush2.msra.mxu0 0.0
      %536 = vmatprep.subr.mxu0 0.0
      %537 = vmatpush2.msra.mxu0 0.0
      %538 = vmatprep.subr.mxu0 0.0
      %539 = vmatpush2.msra.mxu0 0.0
      %540 = vmatprep.subr.mxu0 0.0
      %541 = vmatpush2.msra.mxu0 0.0
      %542 = vmatprep.subr.mxu0 0.0
      %543 = vmatpush2.msra.mxu0 0.0
      %544 = vmatprep.subr.mxu0 0.0
      %545 = vmatpush2.msra.mxu0 0.0
      %546 = vmatprep.subr.mxu0 0.0
      %547 = vmatpush2.msra.mxu0 0.0
      %548 = vmatprep.subr.mxu0 0.0
      %549 = vmatpush2.msra.mxu0 0.0
      %550 = vmatprep.subr.mxu0 0.0
      %551 = vmatpush2.msra.mxu0 0.0
      %552 = vmatprep.subr.mxu0 0.0
      %553 = vmatpush2.msra.mxu0 0.0
      %554 = vmatprep.subr.mxu0 0.0
      %555 = vmatpush2.msra.mxu0 0.0
      %556 = vmatprep.mubr.f32.mxu0 0.0
      %557 = vmatmul.mubr.f32.gmra.mxu0 %v412
      %v558 = vpop.f32.mrf.mxu0
      %v559 = vadd.f32 %v396, %v558
      %v560 = vpop.f32.mrf.mxu0
      %561 = vdwg.mxu0
      %v562 = vsel %vm346, 1, 0
      %v563 = vsel %vm347, 1, 0
      %v564 = vsel %vm348, 1, 0
      %vm565 = vcmp.eq.s32.totalorder %v562, 1
      %vm566 = vcmp.eq.s32.totalorder %v563, 1
      %vm567 = vcmp.eq.s32.totalorder %v564, 1
      %v568 = vsel %vm565, %v488, 0.0
      %v569 = vsel %vm566, %v490, 0.0
      %v570 = vsel %vm567, %v559, 0.0
      %574 = vrot.lane.b32.xlu0 %v568, 19
      %v575 = vpop.permute.xlu0 %574
      %576 = vrot.lane.b32.xlu0 %v569, 19
      %v577 = vpop.permute.xlu0 %576
      %578 = vrot.lane.b32.xlu0 %v570, 19
      %v579 = vpop.permute.xlu0 %578
      %v580 = vsel %vm279, %v575, %v577
      %v581 = vsel %vm279, %v577, %v579
      %vm585 = vcmask 1043608
      %586 = vst.msk [vmem:[#allocation2] sm:$0xf] %vm585, %v575
      %587 = vst [vmem:[#allocation2 + $0x8] sm:$0xf] %v580
      %vm588 = vcmask 396288
      %589 = vst.msk [vmem:[#allocation2 + $0x10] sm:$0xf] %vm588, %v581
      %v590 = vld [vmem:[#allocation2] sm:$0xf]
      %v591 = vld [vmem:[#allocation2 + $0x8] sm:$0xf]
      %v592 = vld [vmem:[#allocation2 + $0x10] sm:$0xf]
      %596 = vrot.lane.b32.xlu0 %v590, 110
      %v597 = vpop.permute.xlu0 %596
      %598 = vrot.lane.b32.xlu0 %v591, 110
      %v599 = vpop.permute.xlu0 %598
      %600 = vrot.lane.b32.xlu0 %v592, 110
      %v601 = vpop.permute.xlu0 %600
      %vm602 = vcmask 900096
      %v603 = vsel %vm602, %v597, %v599
      %v604 = vsel %vm602, %v599, %v601
      %v606 = vsel %vm410, %v354, 0
      %v608 = vsel %vm414, %v603, 0
      %v610 = vsel %vm414, %v604, 0
      %v612 = vsel %vm414, %v601, 0
      %614 = vmatprep.subr.mxu0 0.0
      %615 = vmatpush1.msra.mxu0 0.0
      %616 = vmatprep.subr.mxu0 0.0
      %617 = vmatpush1.msra.mxu0 0.0
      %618 = vmatprep.subr.mxu0 0.0
      %619 = vmatpush1.msra.mxu0 0.0
      %620 = vmatprep.subr.mxu0 0.0
      %621 = vmatpush1.msra.mxu0 0.0
      %622 = vmatprep.subr.mxu0 0.0
      %623 = vmatpush1.msra.mxu0 0.0
      %624 = vmatprep.subr.mxu0 0.0
      %625 = vmatpush1.msra.mxu0 0.0
      %626 = vmatprep.subr.mxu0 0.0
      %627 = vmatpush1.msra.mxu0 0.0
      %628 = vmatprep.subr.mxu0 0.0
      %629 = vmatpush1.msra.mxu0 0.0
      %630 = vmatprep.subr.mxu0 0.0
      %631 = vmatpush1.msra.mxu0 0.0
      %632 = vmatprep.subr.mxu0 0.0
      %633 = vmatpush1.msra.mxu0 0.0
      %634 = vmatprep.subr.mxu0 0.0
      %635 = vmatpush1.msra.mxu0 0.0
      %636 = vmatprep.subr.mxu0 0.0
      %637 = vmatpush1.msra.mxu0 0.0
      %638 = vmatprep.subr.mxu0 0.0
      %639 = vmatpush1.msra.mxu0 0.0
      %640 = vmatprep.subr.mxu0 0.0
      %641 = vmatpush1.msra.mxu0 0.0
      %642 = vmatprep.subr.mxu0 0.0
      %643 = vmatpush1.msra.mxu0 0.0
      %644 = vmatprep.subr.mxu0 %v610
      %645 = vmatpush1.msra.mxu0 %v608
      %646 = vmatprep.subr.mxu0 0.0
      %647 = vmatpush2.msra.mxu0 0.0
      %648 = vmatprep.subr.mxu0 0.0
      %649 = vmatpush2.msra.mxu0 0.0
      %650 = vmatprep.subr.mxu0 0.0
      %651 = vmatpush2.msra.mxu0 0.0
      %652 = vmatprep.subr.mxu0 0.0
      %653 = vmatpush2.msra.mxu0 0.0
      %654 = vmatprep.subr.mxu0 0.0
      %655 = vmatpush2.msra.mxu0 0.0
      %656 = vmatprep.subr.mxu0 0.0
      %657 = vmatpush2.msra.mxu0 0.0
      %658 = vmatprep.subr.mxu0 0.0
      %659 = vmatpush2.msra.mxu0 0.0
      %660 = vmatprep.subr.mxu0 0.0
      %661 = vmatpush2.msra.mxu0 0.0
      %662 = vmatprep.subr.mxu0 0.0
      %663 = vmatpush2.msra.mxu0 0.0
      %664 = vmatprep.subr.mxu0 0.0
      %665 = vmatpush2.msra.mxu0 0.0
      %666 = vmatprep.subr.mxu0 0.0
      %667 = vmatpush2.msra.mxu0 0.0
      %668 = vmatprep.subr.mxu0 0.0
      %669 = vmatpush2.msra.mxu0 0.0
      %670 = vmatprep.subr.mxu0 0.0
      %671 = vmatpush2.msra.mxu0 0.0
      %672 = vmatprep.subr.mxu0 0.0
      %673 = vmatpush2.msra.mxu0 0.0
      %674 = vmatprep.subr.mxu0 0.0
      %675 = vmatpush2.msra.mxu0 0.0
      %676 = vmatprep.subr.mxu0 0.0
      %677 = vmatpush2.msra.mxu0 0.0
      %678 = vmatprep.mubr.f32.mxu0 0.0
      %679 = vmatmul.mubr.f32.gmra.mxu0 %v606
      %v680 = vpop.f32.mrf.mxu0
      %v681 = vadd.f32 0.0, %v680
      %v682 = vpop.f32.mrf.mxu0
      %v683 = vadd.f32 0.0, %v682
      %684 = vdwg.mxu0
      %685 = vmatprep.subr.mxu0 0.0
      %686 = vmatpush1.msra.mxu0 0.0
      %687 = vmatprep.subr.mxu0 0.0
      %688 = vmatpush1.msra.mxu0 0.0
      %689 = vmatprep.subr.mxu0 0.0
      %690 = vmatpush1.msra.mxu0 0.0
      %691 = vmatprep.subr.mxu0 0.0
      %692 = vmatpush1.msra.mxu0 0.0
      %693 = vmatprep.subr.mxu0 0.0
      %694 = vmatpush1.msra.mxu0 0.0
      %695 = vmatprep.subr.mxu0 0.0
      %696 = vmatpush1.msra.mxu0 0.0
      %697 = vmatprep.subr.mxu0 0.0
      %698 = vmatpush1.msra.mxu0 0.0
      %699 = vmatprep.subr.mxu0 0.0
      %700 = vmatpush1.msra.mxu0 0.0
      %701 = vmatprep.subr.mxu0 0.0
      %702 = vmatpush1.msra.mxu0 0.0
      %703 = vmatprep.subr.mxu0 0.0
      %704 = vmatpush1.msra.mxu0 0.0
      %705 = vmatprep.subr.mxu0 0.0
      %706 = vmatpush1.msra.mxu0 0.0
      %707 = vmatprep.subr.mxu0 0.0
      %708 = vmatpush1.msra.mxu0 0.0
      %709 = vmatprep.subr.mxu0 0.0
      %710 = vmatpush1.msra.mxu0 0.0
      %711 = vmatprep.subr.mxu0 0.0
      %712 = vmatpush1.msra.mxu0 0.0
      %713 = vmatprep.subr.mxu0 0.0
      %714 = vmatpush1.msra.mxu0 0.0
      %715 = vmatprep.subr.mxu0 0.0
      %716 = vmatpush1.msra.mxu0 %v612
      %717 = vmatprep.subr.mxu0 0.0
      %718 = vmatpush2.msra.mxu0 0.0
      %719 = vmatprep.subr.mxu0 0.0
      %720 = vmatpush2.msra.mxu0 0.0
      %721 = vmatprep.subr.mxu0 0.0
      %722 = vmatpush2.msra.mxu0 0.0
      %723 = vmatprep.subr.mxu0 0.0
      %724 = vmatpush2.msra.mxu0 0.0
      %725 = vmatprep.subr.mxu0 0.0
      %726 = vmatpush2.msra.mxu0 0.0
      %727 = vmatprep.subr.mxu0 0.0
      %728 = vmatpush2.msra.mxu0 0.0
      %729 = vmatprep.subr.mxu0 0.0
      %730 = vmatpush2.msra.mxu0 0.0
      %731 = vmatprep.subr.mxu0 0.0
      %732 = vmatpush2.msra.mxu0 0.0
      %733 = vmatprep.subr.mxu0 0.0
      %734 = vmatpush2.msra.mxu0 0.0
      %735 = vmatprep.subr.mxu0 0.0
      %736 = vmatpush2.msra.mxu0 0.0
      %737 = vmatprep.subr.mxu0 0.0
      %738 = vmatpush2.msra.mxu0 0.0
      %739 = vmatprep.subr.mxu0 0.0
      %740 = vmatpush2.msra.mxu0 0.0
      %741 = vmatprep.subr.mxu0 0.0
      %742 = vmatpush2.msra.mxu0 0.0
      %743 = vmatprep.subr.mxu0 0.0
      %744 = vmatpush2.msra.mxu0 0.0
      %745 = vmatprep.subr.mxu0 0.0
      %746 = vmatpush2.msra.mxu0 0.0
      %747 = vmatprep.subr.mxu0 0.0
      %748 = vmatpush2.msra.mxu0 0.0
      %749 = vmatprep.mubr.f32.mxu0 0.0
      %750 = vmatmul.mubr.f32.gmra.mxu0 %v606
      %v751 = vpop.f32.mrf.mxu0
      %v752 = vadd.f32 0.0, %v751
      %v753 = vpop.f32.mrf.mxu0
      %754 = vdwg.mxu0
      %v756 = vsel %vm410, %v351, 0
      %v758 = vsel %vm414, %v590, 0
      %v760 = vsel %vm414, %v591, 0
      %v762 = vsel %vm414, %v592, 0
      %764 = vmatprep.subr.mxu0 0.0
      %765 = vmatpush1.msra.mxu0 0.0
      %766 = vmatprep.subr.mxu0 0.0
      %767 = vmatpush1.msra.mxu0 0.0
      %768 = vmatprep.subr.mxu0 0.0
      %769 = vmatpush1.msra.mxu0 0.0
      %770 = vmatprep.subr.mxu0 0.0
      %771 = vmatpush1.msra.mxu0 0.0
      %772 = vmatprep.subr.mxu0 0.0
      %773 = vmatpush1.msra.mxu0 0.0
      %774 = vmatprep.subr.mxu0 0.0
      %775 = vmatpush1.msra.mxu0 0.0
      %776 = vmatprep.subr.mxu0 0.0
      %777 = vmatpush1.msra.mxu0 0.0
      %778 = vmatprep.subr.mxu0 0.0
      %779 = vmatpush1.msra.mxu0 0.0
      %780 = vmatprep.subr.mxu0 0.0
      %781 = vmatpush1.msra.mxu0 0.0
      %782 = vmatprep.subr.mxu0 0.0
      %783 = vmatpush1.msra.mxu0 0.0
      %784 = vmatprep.subr.mxu0 0.0
      %785 = vmatpush1.msra.mxu0 0.0
      %786 = vmatprep.subr.mxu0 0.0
      %787 = vmatpush1.msra.mxu0 0.0
      %788 = vmatprep.subr.mxu0 0.0
      %789 = vmatpush1.msra.mxu0 0.0
      %790 = vmatprep.subr.mxu0 0.0
      %791 = vmatpush1.msra.mxu0 0.0
      %792 = vmatprep.subr.mxu0 0.0
      %793 = vmatpush1.msra.mxu0 0.0
      %794 = vmatprep.subr.mxu0 %v760
      %795 = vmatpush1.msra.mxu0 %v758
      %796 = vmatprep.subr.mxu0 0.0
      %797 = vmatpush2.msra.mxu0 0.0
      %798 = vmatprep.subr.mxu0 0.0
      %799 = vmatpush2.msra.mxu0 0.0
      %800 = vmatprep.subr.mxu0 0.0
      %801 = vmatpush2.msra.mxu0 0.0
      %802 = vmatprep.subr.mxu0 0.0
      %803 = vmatpush2.msra.mxu0 0.0
      %804 = vmatprep.subr.mxu0 0.0
      %805 = vmatpush2.msra.mxu0 0.0
      %806 = vmatprep.subr.mxu0 0.0
      %807 = vmatpush2.msra.mxu0 0.0
      %808 = vmatprep.subr.mxu0 0.0
      %809 = vmatpush2.msra.mxu0 0.0
      %810 = vmatprep.subr.mxu0 0.0
      %811 = vmatpush2.msra.mxu0 0.0
      %812 = vmatprep.subr.mxu0 0.0
      %813 = vmatpush2.msra.mxu0 0.0
      %814 = vmatprep.subr.mxu0 0.0
      %815 = vmatpush2.msra.mxu0 0.0
      %816 = vmatprep.subr.mxu0 0.0
      %817 = vmatpush2.msra.mxu0 0.0
      %818 = vmatprep.subr.mxu0 0.0
      %819 = vmatpush2.msra.mxu0 0.0
      %820 = vmatprep.subr.mxu0 0.0
      %821 = vmatpush2.msra.mxu0 0.0
      %822 = vmatprep.subr.mxu0 0.0
      %823 = vmatpush2.msra.mxu0 0.0
      %824 = vmatprep.subr.mxu0 0.0
      %825 = vmatpush2.msra.mxu0 0.0
      %826 = vmatprep.subr.mxu0 0.0
      %827 = vmatpush2.msra.mxu0 0.0
      %828 = vmatprep.mubr.f32.mxu0 0.0
      %829 = vmatmul.mubr.f32.gmra.mxu0 %v756
      %v830 = vpop.f32.mrf.mxu0
      %v831 = vadd.f32 %v681, %v830
      %v832 = vpop.f32.mrf.mxu0
      %v833 = vadd.f32 %v683, %v832
      %834 = vdwg.mxu0
      %835 = vmatprep.subr.mxu0 0.0
      %836 = vmatpush1.msra.mxu0 0.0
      %837 = vmatprep.subr.mxu0 0.0
      %838 = vmatpush1.msra.mxu0 0.0
      %839 = vmatprep.subr.mxu0 0.0
      %840 = vmatpush1.msra.mxu0 0.0
      %841 = vmatprep.subr.mxu0 0.0
      %842 = vmatpush1.msra.mxu0 0.0
      %843 = vmatprep.subr.mxu0 0.0
      %844 = vmatpush1.msra.mxu0 0.0
      %845 = vmatprep.subr.mxu0 0.0
      %846 = vmatpush1.msra.mxu0 0.0
      %847 = vmatprep.subr.mxu0 0.0
      %848 = vmatpush1.msra.mxu0 0.0
      %849 = vmatprep.subr.mxu0 0.0
      %850 = vmatpush1.msra.mxu0 0.0
      %851 = vmatprep.subr.mxu0 0.0
      %852 = vmatpush1.msra.mxu0 0.0
      %853 = vmatprep.subr.mxu0 0.0
      %854 = vmatpush1.msra.mxu0 0.0
      %855 = vmatprep.subr.mxu0 0.0
      %856 = vmatpush1.msra.mxu0 0.0
      %857 = vmatprep.subr.mxu0 0.0
      %858 = vmatpush1.msra.mxu0 0.0
      %859 = vmatprep.subr.mxu0 0.0
      %860 = vmatpush1.msra.mxu0 0.0
      %861 = vmatprep.subr.mxu0 0.0
      %862 = vmatpush1.msra.mxu0 0.0
      %863 = vmatprep.subr.mxu0 0.0
      %864 = vmatpush1.msra.mxu0 0.0
      %865 = vmatprep.subr.mxu0 0.0
      %866 = vmatpush1.msra.mxu0 %v762
      %867 = vmatprep.subr.mxu0 0.0
      %868 = vmatpush2.msra.mxu0 0.0
      %869 = vmatprep.subr.mxu0 0.0
      %870 = vmatpush2.msra.mxu0 0.0
      %871 = vmatprep.subr.mxu0 0.0
      %872 = vmatpush2.msra.mxu0 0.0
      %873 = vmatprep.subr.mxu0 0.0
      %874 = vmatpush2.msra.mxu0 0.0
      %875 = vmatprep.subr.mxu0 0.0
      %876 = vmatpush2.msra.mxu0 0.0
      %877 = vmatprep.subr.mxu0 0.0
      %878 = vmatpush2.msra.mxu0 0.0
      %879 = vmatprep.subr.mxu0 0.0
      %880 = vmatpush2.msra.mxu0 0.0
      %881 = vmatprep.subr.mxu0 0.0
      %882 = vmatpush2.msra.mxu0 0.0
      %883 = vmatprep.subr.mxu0 0.0
      %884 = vmatpush2.msra.mxu0 0.0
      %885 = vmatprep.subr.mxu0 0.0
      %886 = vmatpush2.msra.mxu0 0.0
      %887 = vmatprep.subr.mxu0 0.0
      %888 = vmatpush2.msra.mxu0 0.0
      %889 = vmatprep.subr.mxu0 0.0
      %890 = vmatpush2.msra.mxu0 0.0
      %891 = vmatprep.subr.mxu0 0.0
      %892 = vmatpush2.msra.mxu0 0.0
      %893 = vmatprep.subr.mxu0 0.0
      %894 = vmatpush2.msra.mxu0 0.0
      %895 = vmatprep.subr.mxu0 0.0
      %896 = vmatpush2.msra.mxu0 0.0
      %897 = vmatprep.subr.mxu0 0.0
      %898 = vmatpush2.msra.mxu0 0.0
      %899 = vmatprep.mubr.f32.mxu0 0.0
      %900 = vmatmul.mubr.f32.gmra.mxu0 %v756
      %v901 = vpop.f32.mrf.mxu0
      %v902 = vadd.f32 %v752, %v901
      %v903 = vpop.f32.mrf.mxu0
      %904 = vdwg.mxu0
      %905 = vrot.lane.b32.xlu0 %v590, 109
      %v906 = vpop.permute.xlu0 %905
      %907 = vrot.lane.b32.xlu0 %v591, 109
      %v908 = vpop.permute.xlu0 %907
      %909 = vrot.lane.b32.xlu0 %v592, 109
      %v910 = vpop.permute.xlu0 %909
      %v911 = vsel %vm407, %v906, %v908
      %v912 = vsel %vm407, %v908, %v910
      %v914 = vsel %vm410, %v355, 0
      %v916 = vsel %vm414, %v911, 0
      %v918 = vsel %vm414, %v912, 0
      %v920 = vsel %vm414, %v910, 0
      %922 = vmatprep.subr.mxu0 0.0
      %923 = vmatpush1.msra.mxu0 0.0
      %924 = vmatprep.subr.mxu0 0.0
      %925 = vmatpush1.msra.mxu0 0.0
      %926 = vmatprep.subr.mxu0 0.0
      %927 = vmatpush1.msra.mxu0 0.0
      %928 = vmatprep.subr.mxu0 0.0
      %929 = vmatpush1.msra.mxu0 0.0
      %930 = vmatprep.subr.mxu0 0.0
      %931 = vmatpush1.msra.mxu0 0.0
      %932 = vmatprep.subr.mxu0 0.0
      %933 = vmatpush1.msra.mxu0 0.0
      %934 = vmatprep.subr.mxu0 0.0
      %935 = vmatpush1.msra.mxu0 0.0
      %936 = vmatprep.subr.mxu0 0.0
      %937 = vmatpush1.msra.mxu0 0.0
      %938 = vmatprep.subr.mxu0 0.0
      %939 = vmatpush1.msra.mxu0 0.0
      %940 = vmatprep.subr.mxu0 0.0
      %941 = vmatpush1.msra.mxu0 0.0
      %942 = vmatprep.subr.mxu0 0.0
      %943 = vmatpush1.msra.mxu0 0.0
      %944 = vmatprep.subr.mxu0 0.0
      %945 = vmatpush1.msra.mxu0 0.0
      %946 = vmatprep.subr.mxu0 0.0
      %947 = vmatpush1.msra.mxu0 0.0
      %948 = vmatprep.subr.mxu0 0.0
      %949 = vmatpush1.msra.mxu0 0.0
      %950 = vmatprep.subr.mxu0 0.0
      %951 = vmatpush1.msra.mxu0 0.0
      %952 = vmatprep.subr.mxu0 %v918
      %953 = vmatpush1.msra.mxu0 %v916
      %954 = vmatprep.subr.mxu0 0.0
      %955 = vmatpush2.msra.mxu0 0.0
      %956 = vmatprep.subr.mxu0 0.0
      %957 = vmatpush2.msra.mxu0 0.0
      %958 = vmatprep.subr.mxu0 0.0
      %959 = vmatpush2.msra.mxu0 0.0
      %960 = vmatprep.subr.mxu0 0.0
      %961 = vmatpush2.msra.mxu0 0.0
      %962 = vmatprep.subr.mxu0 0.0
      %963 = vmatpush2.msra.mxu0 0.0
      %964 = vmatprep.subr.mxu0 0.0
      %965 = vmatpush2.msra.mxu0 0.0
      %966 = vmatprep.subr.mxu0 0.0
      %967 = vmatpush2.msra.mxu0 0.0
      %968 = vmatprep.subr.mxu0 0.0
      %969 = vmatpush2.msra.mxu0 0.0
      %970 = vmatprep.subr.mxu0 0.0
      %971 = vmatpush2.msra.mxu0 0.0
      %972 = vmatprep.subr.mxu0 0.0
      %973 = vmatpush2.msra.mxu0 0.0
      %974 = vmatprep.subr.mxu0 0.0
      %975 = vmatpush2.msra.mxu0 0.0
      %976 = vmatprep.subr.mxu0 0.0
      %977 = vmatpush2.msra.mxu0 0.0
      %978 = vmatprep.subr.mxu0 0.0
      %979 = vmatpush2.msra.mxu0 0.0
      %980 = vmatprep.subr.mxu0 0.0
      %981 = vmatpush2.msra.mxu0 0.0
      %982 = vmatprep.subr.mxu0 0.0
      %983 = vmatpush2.msra.mxu0 0.0
      %984 = vmatprep.subr.mxu0 0.0
      %985 = vmatpush2.msra.mxu0 0.0
      %986 = vmatprep.mubr.f32.mxu0 0.0
      %987 = vmatmul.mubr.f32.gmra.mxu0 %v914
      %v988 = vpop.f32.mrf.mxu0
      %v989 = vadd.f32 0.0, %v988
      %v990 = vpop.f32.mrf.mxu0
      %v991 = vadd.f32 0.0, %v990
      %992 = vdwg.mxu0
      %993 = vmatprep.subr.mxu0 0.0
      %994 = vmatpush1.msra.mxu0 0.0
      %995 = vmatprep.subr.mxu0 0.0
      %996 = vmatpush1.msra.mxu0 0.0
      %997 = vmatprep.subr.mxu0 0.0
      %998 = vmatpush1.msra.mxu0 0.0
      %999 = vmatprep.subr.mxu0 0.0
      %1000 = vmatpush1.msra.mxu0 0.0
      %1001 = vmatprep.subr.mxu0 0.0
      %1002 = vmatpush1.msra.mxu0 0.0
      %1003 = vmatprep.subr.mxu0 0.0
      %1004 = vmatpush1.msra.mxu0 0.0
      %1005 = vmatprep.subr.mxu0 0.0
      %1006 = vmatpush1.msra.mxu0 0.0
      %1007 = vmatprep.subr.mxu0 0.0
      %1008 = vmatpush1.msra.mxu0 0.0
      %1009 = vmatprep.subr.mxu0 0.0
      %1010 = vmatpush1.msra.mxu0 0.0
      %1011 = vmatprep.subr.mxu0 0.0
      %1012 = vmatpush1.msra.mxu0 0.0
      %1013 = vmatprep.subr.mxu0 0.0
      %1014 = vmatpush1.msra.mxu0 0.0
      %1015 = vmatprep.subr.mxu0 0.0
      %1016 = vmatpush1.msra.mxu0 0.0
      %1017 = vmatprep.subr.mxu0 0.0
      %1018 = vmatpush1.msra.mxu0 0.0
      %1019 = vmatprep.subr.mxu0 0.0
      %1020 = vmatpush1.msra.mxu0 0.0
      %1021 = vmatprep.subr.mxu0 0.0
      %1022 = vmatpush1.msra.mxu0 0.0
      %1023 = vmatprep.subr.mxu0 0.0
      %1024 = vmatpush1.msra.mxu0 %v920
      %1025 = vmatprep.subr.mxu0 0.0
      %1026 = vmatpush2.msra.mxu0 0.0
      %1027 = vmatprep.subr.mxu0 0.0
      %1028 = vmatpush2.msra.mxu0 0.0
      %1029 = vmatprep.subr.mxu0 0.0
      %1030 = vmatpush2.msra.mxu0 0.0
      %1031 = vmatprep.subr.mxu0 0.0
      %1032 = vmatpush2.msra.mxu0 0.0
      %1033 = vmatprep.subr.mxu0 0.0
      %1034 = vmatpush2.msra.mxu0 0.0
      %1035 = vmatprep.subr.mxu0 0.0
      %1036 = vmatpush2.msra.mxu0 0.0
      %1037 = vmatprep.subr.mxu0 0.0
      %1038 = vmatpush2.msra.mxu0 0.0
      %1039 = vmatprep.subr.mxu0 0.0
      %1040 = vmatpush2.msra.mxu0 0.0
      %1041 = vmatprep.subr.mxu0 0.0
      %1042 = vmatpush2.msra.mxu0 0.0
      %1043 = vmatprep.subr.mxu0 0.0
      %1044 = vmatpush2.msra.mxu0 0.0
      %1045 = vmatprep.subr.mxu0 0.0
      %1046 = vmatpush2.msra.mxu0 0.0
      %1047 = vmatprep.subr.mxu0 0.0
      %1048 = vmatpush2.msra.mxu0 0.0
      %1049 = vmatprep.subr.mxu0 0.0
      %1050 = vmatpush2.msra.mxu0 0.0
      %1051 = vmatprep.subr.mxu0 0.0
      %1052 = vmatpush2.msra.mxu0 0.0
      %1053 = vmatprep.subr.mxu0 0.0
      %1054 = vmatpush2.msra.mxu0 0.0
      %1055 = vmatprep.subr.mxu0 0.0
      %1056 = vmatpush2.msra.mxu0 0.0
      %1057 = vmatprep.mubr.f32.mxu0 0.0
      %1058 = vmatmul.mubr.f32.gmra.mxu0 %v914
      %v1059 = vpop.f32.mrf.mxu0
      %v1060 = vadd.f32 0.0, %v1059
      %v1061 = vpop.f32.mrf.mxu0
      %1062 = vdwg.mxu0
      %1063 = vrot.lane.b32.xlu0 %v590, 127
      %v1064 = vpop.permute.xlu0 %1063
      %1065 = vrot.lane.b32.xlu0 %v591, 127
      %v1066 = vpop.permute.xlu0 %1065
      %1067 = vrot.lane.b32.xlu0 %v592, 127
      %v1068 = vpop.permute.xlu0 %1067
      %vm1069 = vcmask 1039360
      %v1070 = vsel %vm1069, %v1064, %v1066
      %v1071 = vsel %vm1069, %v1066, %v1068
      %v1073 = vsel %vm410, %v352, 0
      %v1075 = vsel %vm414, %v1070, 0
      %v1077 = vsel %vm414, %v1071, 0
      %v1079 = vsel %vm414, %v1068, 0
      %1081 = vmatprep.subr.mxu0 0.0
      %1082 = vmatpush1.msra.mxu0 0.0
      %1083 = vmatprep.subr.mxu0 0.0
      %1084 = vmatpush1.msra.mxu0 0.0
      %1085 = vmatprep.subr.mxu0 0.0
      %1086 = vmatpush1.msra.mxu0 0.0
      %1087 = vmatprep.subr.mxu0 0.0
      %1088 = vmatpush1.msra.mxu0 0.0
      %1089 = vmatprep.subr.mxu0 0.0
      %1090 = vmatpush1.msra.mxu0 0.0
      %1091 = vmatprep.subr.mxu0 0.0
      %1092 = vmatpush1.msra.mxu0 0.0
      %1093 = vmatprep.subr.mxu0 0.0
      %1094 = vmatpush1.msra.mxu0 0.0
      %1095 = vmatprep.subr.mxu0 0.0
      %1096 = vmatpush1.msra.mxu0 0.0
      %1097 = vmatprep.subr.mxu0 0.0
      %1098 = vmatpush1.msra.mxu0 0.0
      %1099 = vmatprep.subr.mxu0 0.0
      %1100 = vmatpush1.msra.mxu0 0.0
      %1101 = vmatprep.subr.mxu0 0.0
      %1102 = vmatpush1.msra.mxu0 0.0
      %1103 = vmatprep.subr.mxu0 0.0
      %1104 = vmatpush1.msra.mxu0 0.0
      %1105 = vmatprep.subr.mxu0 0.0
      %1106 = vmatpush1.msra.mxu0 0.0
      %1107 = vmatprep.subr.mxu0 0.0
      %1108 = vmatpush1.msra.mxu0 0.0
      %1109 = vmatprep.subr.mxu0 0.0
      %1110 = vmatpush1.msra.mxu0 0.0
      %1111 = vmatprep.subr.mxu0 %v1077
      %1112 = vmatpush1.msra.mxu0 %v1075
      %1113 = vmatprep.subr.mxu0 0.0
      %1114 = vmatpush2.msra.mxu0 0.0
      %1115 = vmatprep.subr.mxu0 0.0
      %1116 = vmatpush2.msra.mxu0 0.0
      %1117 = vmatprep.subr.mxu0 0.0
      %1118 = vmatpush2.msra.mxu0 0.0
      %1119 = vmatprep.subr.mxu0 0.0
      %1120 = vmatpush2.msra.mxu0 0.0
      %1121 = vmatprep.subr.mxu0 0.0
      %1122 = vmatpush2.msra.mxu0 0.0
      %1123 = vmatprep.subr.mxu0 0.0
      %1124 = vmatpush2.msra.mxu0 0.0
      %1125 = vmatprep.subr.mxu0 0.0
      %1126 = vmatpush2.msra.mxu0 0.0
      %1127 = vmatprep.subr.mxu0 0.0
      %1128 = vmatpush2.msra.mxu0 0.0
      %1129 = vmatprep.subr.mxu0 0.0
      %1130 = vmatpush2.msra.mxu0 0.0
      %1131 = vmatprep.subr.mxu0 0.0
      %1132 = vmatpush2.msra.mxu0 0.0
      %1133 = vmatprep.subr.mxu0 0.0
      %1134 = vmatpush2.msra.mxu0 0.0
      %1135 = vmatprep.subr.mxu0 0.0
      %1136 = vmatpush2.msra.mxu0 0.0
      %1137 = vmatprep.subr.mxu0 0.0
      %1138 = vmatpush2.msra.mxu0 0.0
      %1139 = vmatprep.subr.mxu0 0.0
      %1140 = vmatpush2.msra.mxu0 0.0
      %1141 = vmatprep.subr.mxu0 0.0
      %1142 = vmatpush2.msra.mxu0 0.0
      %1143 = vmatprep.subr.mxu0 0.0
      %1144 = vmatpush2.msra.mxu0 0.0
      %1145 = vmatprep.mubr.f32.mxu0 0.0
      %1146 = vmatmul.mubr.f32.gmra.mxu0 %v1073
      %v1147 = vpop.f32.mrf.mxu0
      %v1148 = vadd.f32 %v989, %v1147
      %v1149 = vpop.f32.mrf.mxu0
      %v1150 = vadd.f32 %v991, %v1149
      %1151 = vdwg.mxu0
      %1152 = vmatprep.subr.mxu0 0.0
      %1153 = vmatpush1.msra.mxu0 0.0
      %1154 = vmatprep.subr.mxu0 0.0
      %1155 = vmatpush1.msra.mxu0 0.0
      %1156 = vmatprep.subr.mxu0 0.0
      %1157 = vmatpush1.msra.mxu0 0.0
      %1158 = vmatprep.subr.mxu0 0.0
      %1159 = vmatpush1.msra.mxu0 0.0
      %1160 = vmatprep.subr.mxu0 0.0
      %1161 = vmatpush1.msra.mxu0 0.0
      %1162 = vmatprep.subr.mxu0 0.0
      %1163 = vmatpush1.msra.mxu0 0.0
      %1164 = vmatprep.subr.mxu0 0.0
      %1165 = vmatpush1.msra.mxu0 0.0
      %1166 = vmatprep.subr.mxu0 0.0
      %1167 = vmatpush1.msra.mxu0 0.0
      %1168 = vmatprep.subr.mxu0 0.0
      %1169 = vmatpush1.msra.mxu0 0.0
      %1170 = vmatprep.subr.mxu0 0.0
      %1171 = vmatpush1.msra.mxu0 0.0
      %1172 = vmatprep.subr.mxu0 0.0
      %1173 = vmatpush1.msra.mxu0 0.0
      %1174 = vmatprep.subr.mxu0 0.0
      %1175 = vmatpush1.msra.mxu0 0.0
      %1176 = vmatprep.subr.mxu0 0.0
      %1177 = vmatpush1.msra.mxu0 0.0
      %1178 = vmatprep.subr.mxu0 0.0
      %1179 = vmatpush1.msra.mxu0 0.0
      %1180 = vmatprep.subr.mxu0 0.0
      %1181 = vmatpush1.msra.mxu0 0.0
      %1182 = vmatprep.subr.mxu0 0.0
      %1183 = vmatpush1.msra.mxu0 %v1079
      %1184 = vmatprep.subr.mxu0 0.0
      %1185 = vmatpush2.msra.mxu0 0.0
      %1186 = vmatprep.subr.mxu0 0.0
      %1187 = vmatpush2.msra.mxu0 0.0
      %1188 = vmatprep.subr.mxu0 0.0
      %1189 = vmatpush2.msra.mxu0 0.0
      %1190 = vmatprep.subr.mxu0 0.0
      %1191 = vmatpush2.msra.mxu0 0.0
      %1192 = vmatprep.subr.mxu0 0.0
      %1193 = vmatpush2.msra.mxu0 0.0
      %1194 = vmatprep.subr.mxu0 0.0
      %1195 = vmatpush2.msra.mxu0 0.0
      %1196 = vmatprep.subr.mxu0 0.0
      %1197 = vmatpush2.msra.mxu0 0.0
      %1198 = vmatprep.subr.mxu0 0.0
      %1199 = vmatpush2.msra.mxu0 0.0
      %1200 = vmatprep.subr.mxu0 0.0
      %1201 = vmatpush2.msra.mxu0 0.0
      %1202 = vmatprep.subr.mxu0 0.0
      %1203 = vmatpush2.msra.mxu0 0.0
      %1204 = vmatprep.subr.mxu0 0.0
      %1205 = vmatpush2.msra.mxu0 0.0
      %1206 = vmatprep.subr.mxu0 0.0
      %1207 = vmatpush2.msra.mxu0 0.0
      %1208 = vmatprep.subr.mxu0 0.0
      %1209 = vmatpush2.msra.mxu0 0.0
      %1210 = vmatprep.subr.mxu0 0.0
      %1211 = vmatpush2.msra.mxu0 0.0
      %1212 = vmatprep.subr.mxu0 0.0
      %1213 = vmatpush2.msra.mxu0 0.0
      %1214 = vmatprep.subr.mxu0 0.0
      %1215 = vmatpush2.msra.mxu0 0.0
      %1216 = vmatprep.mubr.f32.mxu0 0.0
      %1217 = vmatmul.mubr.f32.gmra.mxu0 %v1073
      %v1218 = vpop.f32.mrf.mxu0
      %v1219 = vadd.f32 %v1060, %v1218
      %v1220 = vpop.f32.mrf.mxu0
      %1221 = vdwg.mxu0
      %1222 = vrot.lane.b32.xlu0 %v590, 108
      %v1223 = vpop.permute.xlu0 %1222
      %1224 = vrot.lane.b32.xlu0 %v591, 108
      %v1225 = vpop.permute.xlu0 %1224
      %1226 = vrot.lane.b32.xlu0 %v592, 108
      %v1227 = vpop.permute.xlu0 %1226
      %vm1228 = vcmask 883712
      %v1229 = vsel %vm1228, %v1223, %v1225
      %v1230 = vsel %vm1228, %v1225, %v1227
      %v1232 = vsel %vm410, %v356, 0
      %v1234 = vsel %vm414, %v1229, 0
      %v1236 = vsel %vm414, %v1230, 0
      %v1238 = vsel %vm414, %v1227, 0
      %1240 = vmatprep.subr.mxu0 0.0
      %1241 = vmatpush1.msra.mxu0 0.0
      %1242 = vmatprep.subr.mxu0 0.0
      %1243 = vmatpush1.msra.mxu0 0.0
      %1244 = vmatprep.subr.mxu0 0.0
      %1245 = vmatpush1.msra.mxu0 0.0
      %1246 = vmatprep.subr.mxu0 0.0
      %1247 = vmatpush1.msra.mxu0 0.0
      %1248 = vmatprep.subr.mxu0 0.0
      %1249 = vmatpush1.msra.mxu0 0.0
      %1250 = vmatprep.subr.mxu0 0.0
      %1251 = vmatpush1.msra.mxu0 0.0
      %1252 = vmatprep.subr.mxu0 0.0
      %1253 = vmatpush1.msra.mxu0 0.0
      %1254 = vmatprep.subr.mxu0 0.0
      %1255 = vmatpush1.msra.mxu0 0.0
      %1256 = vmatprep.subr.mxu0 0.0
      %1257 = vmatpush1.msra.mxu0 0.0
      %1258 = vmatprep.subr.mxu0 0.0
      %1259 = vmatpush1.msra.mxu0 0.0
      %1260 = vmatprep.subr.mxu0 0.0
      %1261 = vmatpush1.msra.mxu0 0.0
      %1262 = vmatprep.subr.mxu0 0.0
      %1263 = vmatpush1.msra.mxu0 0.0
      %1264 = vmatprep.subr.mxu0 0.0
      %1265 = vmatpush1.msra.mxu0 0.0
      %1266 = vmatprep.subr.mxu0 0.0
      %1267 = vmatpush1.msra.mxu0 0.0
      %1268 = vmatprep.subr.mxu0 0.0
      %1269 = vmatpush1.msra.mxu0 0.0
      %1270 = vmatprep.subr.mxu0 %v1236
      %1271 = vmatpush1.msra.mxu0 %v1234
      %1272 = vmatprep.subr.mxu0 0.0
      %1273 = vmatpush2.msra.mxu0 0.0
      %1274 = vmatprep.subr.mxu0 0.0
      %1275 = vmatpush2.msra.mxu0 0.0
      %1276 = vmatprep.subr.mxu0 0.0
      %1277 = vmatpush2.msra.mxu0 0.0
      %1278 = vmatprep.subr.mxu0 0.0
      %1279 = vmatpush2.msra.mxu0 0.0
      %1280 = vmatprep.subr.mxu0 0.0
      %1281 = vmatpush2.msra.mxu0 0.0
      %1282 = vmatprep.subr.mxu0 0.0
      %1283 = vmatpush2.msra.mxu0 0.0
      %1284 = vmatprep.subr.mxu0 0.0
      %1285 = vmatpush2.msra.mxu0 0.0
      %1286 = vmatprep.subr.mxu0 0.0
      %1287 = vmatpush2.msra.mxu0 0.0
      %1288 = vmatprep.subr.mxu0 0.0
      %1289 = vmatpush2.msra.mxu0 0.0
      %1290 = vmatprep.subr.mxu0 0.0
      %1291 = vmatpush2.msra.mxu0 0.0
      %1292 = vmatprep.subr.mxu0 0.0
      %1293 = vmatpush2.msra.mxu0 0.0
      %1294 = vmatprep.subr.mxu0 0.0
      %1295 = vmatpush2.msra.mxu0 0.0
      %1296 = vmatprep.subr.mxu0 0.0
      %1297 = vmatpush2.msra.mxu0 0.0
      %1298 = vmatprep.subr.mxu0 0.0
      %1299 = vmatpush2.msra.mxu0 0.0
      %1300 = vmatprep.subr.mxu0 0.0
      %1301 = vmatpush2.msra.mxu0 0.0
      %1302 = vmatprep.subr.mxu0 0.0
      %1303 = vmatpush2.msra.mxu0 0.0
      %1304 = vmatprep.mubr.f32.mxu0 0.0
      %1305 = vmatmul.mubr.f32.gmra.mxu0 %v1232
      %v1306 = vpop.f32.mrf.mxu0
      %v1307 = vadd.f32 0.0, %v1306
      %v1308 = vpop.f32.mrf.mxu0
      %v1309 = vadd.f32 0.0, %v1308
      %1310 = vdwg.mxu0
      %1311 = vmatprep.subr.mxu0 0.0
      %1312 = vmatpush1.msra.mxu0 0.0
      %1313 = vmatprep.subr.mxu0 0.0
      %1314 = vmatpush1.msra.mxu0 0.0
      %1315 = vmatprep.subr.mxu0 0.0
      %1316 = vmatpush1.msra.mxu0 0.0
      %1317 = vmatprep.subr.mxu0 0.0
      %1318 = vmatpush1.msra.mxu0 0.0
      %1319 = vmatprep.subr.mxu0 0.0
      %1320 = vmatpush1.msra.mxu0 0.0
      %1321 = vmatprep.subr.mxu0 0.0
      %1322 = vmatpush1.msra.mxu0 0.0
      %1323 = vmatprep.subr.mxu0 0.0
      %1324 = vmatpush1.msra.mxu0 0.0
      %1325 = vmatprep.subr.mxu0 0.0
      %1326 = vmatpush1.msra.mxu0 0.0
      %1327 = vmatprep.subr.mxu0 0.0
      %1328 = vmatpush1.msra.mxu0 0.0
      %1329 = vmatprep.subr.mxu0 0.0
      %1330 = vmatpush1.msra.mxu0 0.0
      %1331 = vmatprep.subr.mxu0 0.0
      %1332 = vmatpush1.msra.mxu0 0.0
      %1333 = vmatprep.subr.mxu0 0.0
      %1334 = vmatpush1.msra.mxu0 0.0
      %1335 = vmatprep.subr.mxu0 0.0
      %1336 = vmatpush1.msra.mxu0 0.0
      %1337 = vmatprep.subr.mxu0 0.0
      %1338 = vmatpush1.msra.mxu0 0.0
      %1339 = vmatprep.subr.mxu0 0.0
      %1340 = vmatpush1.msra.mxu0 0.0
      %1341 = vmatprep.subr.mxu0 0.0
      %1342 = vmatpush1.msra.mxu0 %v1238
      %1343 = vmatprep.subr.mxu0 0.0
      %1344 = vmatpush2.msra.mxu0 0.0
      %1345 = vmatprep.subr.mxu0 0.0
      %1346 = vmatpush2.msra.mxu0 0.0
      %1347 = vmatprep.subr.mxu0 0.0
      %1348 = vmatpush2.msra.mxu0 0.0
      %1349 = vmatprep.subr.mxu0 0.0
      %1350 = vmatpush2.msra.mxu0 0.0
      %1351 = vmatprep.subr.mxu0 0.0
      %1352 = vmatpush2.msra.mxu0 0.0
      %1353 = vmatprep.subr.mxu0 0.0
      %1354 = vmatpush2.msra.mxu0 0.0
      %1355 = vmatprep.subr.mxu0 0.0
      %1356 = vmatpush2.msra.mxu0 0.0
      %1357 = vmatprep.subr.mxu0 0.0
      %1358 = vmatpush2.msra.mxu0 0.0
      %1359 = vmatprep.subr.mxu0 0.0
      %1360 = vmatpush2.msra.mxu0 0.0
      %1361 = vmatprep.subr.mxu0 0.0
      %1362 = vmatpush2.msra.mxu0 0.0
      %1363 = vmatprep.subr.mxu0 0.0
      %1364 = vmatpush2.msra.mxu0 0.0
      %1365 = vmatprep.subr.mxu0 0.0
      %1366 = vmatpush2.msra.mxu0 0.0
      %1367 = vmatprep.subr.mxu0 0.0
      %1368 = vmatpush2.msra.mxu0 0.0
      %1369 = vmatprep.subr.mxu0 0.0
      %1370 = vmatpush2.msra.mxu0 0.0
      %1371 = vmatprep.subr.mxu0 0.0
      %1372 = vmatpush2.msra.mxu0 0.0
      %1373 = vmatprep.subr.mxu0 0.0
      %1374 = vmatpush2.msra.mxu0 0.0
      %1375 = vmatprep.mubr.f32.mxu0 0.0
      %1376 = vmatmul.mubr.f32.gmra.mxu0 %v1232
      %v1377 = vpop.f32.mrf.mxu0
      %v1378 = vadd.f32 0.0, %v1377
      %v1379 = vpop.f32.mrf.mxu0
      %1380 = vdwg.mxu0
      %1381 = vrot.lane.b32.xlu0 %v590, 126
      %v1382 = vpop.permute.xlu0 %1381
      %1383 = vrot.lane.b32.xlu0 %v591, 126
      %v1384 = vpop.permute.xlu0 %1383
      %1385 = vrot.lane.b32.xlu0 %v592, 126
      %v1386 = vpop.permute.xlu0 %1385
      %vm1387 = vcmask 1031168
      %v1388 = vsel %vm1387, %v1382, %v1384
      %v1389 = vsel %vm1387, %v1384, %v1386
      %v1391 = vsel %vm410, %v353, 0
      %v1393 = vsel %vm414, %v1388, 0
      %v1395 = vsel %vm414, %v1389, 0
      %v1397 = vsel %vm414, %v1386, 0
      %1399 = vmatprep.subr.mxu0 0.0
      %1400 = vmatpush1.msra.mxu0 0.0
      %1401 = vmatprep.subr.mxu0 0.0
      %1402 = vmatpush1.msra.mxu0 0.0
      %1403 = vmatprep.subr.mxu0 0.0
      %1404 = vmatpush1.msra.mxu0 0.0
      %1405 = vmatprep.subr.mxu0 0.0
      %1406 = vmatpush1.msra.mxu0 0.0
      %1407 = vmatprep.subr.mxu0 0.0
      %1408 = vmatpush1.msra.mxu0 0.0
      %1409 = vmatprep.subr.mxu0 0.0
      %1410 = vmatpush1.msra.mxu0 0.0
      %1411 = vmatprep.subr.mxu0 0.0
      %1412 = vmatpush1.msra.mxu0 0.0
      %1413 = vmatprep.subr.mxu0 0.0
      %1414 = vmatpush1.msra.mxu0 0.0
      %1415 = vmatprep.subr.mxu0 0.0
      %1416 = vmatpush1.msra.mxu0 0.0
      %1417 = vmatprep.subr.mxu0 0.0
      %1418 = vmatpush1.msra.mxu0 0.0
      %1419 = vmatprep.subr.mxu0 0.0
      %1420 = vmatpush1.msra.mxu0 0.0
      %1421 = vmatprep.subr.mxu0 0.0
      %1422 = vmatpush1.msra.mxu0 0.0
      %1423 = vmatprep.subr.mxu0 0.0
      %1424 = vmatpush1.msra.mxu0 0.0
      %1425 = vmatprep.subr.mxu0 0.0
      %1426 = vmatpush1.msra.mxu0 0.0
      %1427 = vmatprep.subr.mxu0 0.0
      %1428 = vmatpush1.msra.mxu0 0.0
      %1429 = vmatprep.subr.mxu0 %v1395
      %1430 = vmatpush1.msra.mxu0 %v1393
      %1431 = vmatprep.subr.mxu0 0.0
      %1432 = vmatpush2.msra.mxu0 0.0
      %1433 = vmatprep.subr.mxu0 0.0
      %1434 = vmatpush2.msra.mxu0 0.0
      %1435 = vmatprep.subr.mxu0 0.0
      %1436 = vmatpush2.msra.mxu0 0.0
      %1437 = vmatprep.subr.mxu0 0.0
      %1438 = vmatpush2.msra.mxu0 0.0
      %1439 = vmatprep.subr.mxu0 0.0
      %1440 = vmatpush2.msra.mxu0 0.0
      %1441 = vmatprep.subr.mxu0 0.0
      %1442 = vmatpush2.msra.mxu0 0.0
      %1443 = vmatprep.subr.mxu0 0.0
      %1444 = vmatpush2.msra.mxu0 0.0
      %1445 = vmatprep.subr.mxu0 0.0
      %1446 = vmatpush2.msra.mxu0 0.0
      %1447 = vmatprep.subr.mxu0 0.0
      %1448 = vmatpush2.msra.mxu0 0.0
      %1449 = vmatprep.subr.mxu0 0.0
      %1450 = vmatpush2.msra.mxu0 0.0
      %1451 = vmatprep.subr.mxu0 0.0
      %1452 = vmatpush2.msra.mxu0 0.0
      %1453 = vmatprep.subr.mxu0 0.0
      %1454 = vmatpush2.msra.mxu0 0.0
      %1455 = vmatprep.subr.mxu0 0.0
      %1456 = vmatpush2.msra.mxu0 0.0
      %1457 = vmatprep.subr.mxu0 0.0
      %1458 = vmatpush2.msra.mxu0 0.0
      %1459 = vmatprep.subr.mxu0 0.0
      %1460 = vmatpush2.msra.mxu0 0.0
      %1461 = vmatprep.subr.mxu0 0.0
      %1462 = vmatpush2.msra.mxu0 0.0
      %1463 = vmatprep.mubr.f32.mxu0 0.0
      %1464 = vmatmul.mubr.f32.gmra.mxu0 %v1391
      %v1465 = vpop.f32.mrf.mxu0
      %v1466 = vadd.f32 %v1307, %v1465
      %v1467 = vpop.f32.mrf.mxu0
      %v1468 = vadd.f32 %v1309, %v1467
      %1469 = vdwg.mxu0
      %1470 = vmatprep.subr.mxu0 0.0
      %1471 = vmatpush1.msra.mxu0 0.0
      %1472 = vmatprep.subr.mxu0 0.0
      %1473 = vmatpush1.msra.mxu0 0.0
      %1474 = vmatprep.subr.mxu0 0.0
      %1475 = vmatpush1.msra.mxu0 0.0
      %1476 = vmatprep.subr.mxu0 0.0
      %1477 = vmatpush1.msra.mxu0 0.0
      %1478 = vmatprep.subr.mxu0 0.0
      %1479 = vmatpush1.msra.mxu0 0.0
      %1480 = vmatprep.subr.mxu0 0.0
      %1481 = vmatpush1.msra.mxu0 0.0
      %1482 = vmatprep.subr.mxu0 0.0
      %1483 = vmatpush1.msra.mxu0 0.0
      %1484 = vmatprep.subr.mxu0 0.0
      %1485 = vmatpush1.msra.mxu0 0.0
      %1486 = vmatprep.subr.mxu0 0.0
      %1487 = vmatpush1.msra.mxu0 0.0
      %1488 = vmatprep.subr.mxu0 0.0
      %1489 = vmatpush1.msra.mxu0 0.0
      %1490 = vmatprep.subr.mxu0 0.0
      %1491 = vmatpush1.msra.mxu0 0.0
      %1492 = vmatprep.subr.mxu0 0.0
      %1493 = vmatpush1.msra.mxu0 0.0
      %1494 = vmatprep.subr.mxu0 0.0
      %1495 = vmatpush1.msra.mxu0 0.0
      %1496 = vmatprep.subr.mxu0 0.0
      %1497 = vmatpush1.msra.mxu0 0.0
      %1498 = vmatprep.subr.mxu0 0.0
      %1499 = vmatpush1.msra.mxu0 0.0
      %1500 = vmatprep.subr.mxu0 0.0
      %1501 = vmatpush1.msra.mxu0 %v1397
      %1502 = vmatprep.subr.mxu0 0.0
      %1503 = vmatpush2.msra.mxu0 0.0
      %1504 = vmatprep.subr.mxu0 0.0
      %1505 = vmatpush2.msra.mxu0 0.0
      %1506 = vmatprep.subr.mxu0 0.0
      %1507 = vmatpush2.msra.mxu0 0.0
      %1508 = vmatprep.subr.mxu0 0.0
      %1509 = vmatpush2.msra.mxu0 0.0
      %1510 = vmatprep.subr.mxu0 0.0
      %1511 = vmatpush2.msra.mxu0 0.0
      %1512 = vmatprep.subr.mxu0 0.0
      %1513 = vmatpush2.msra.mxu0 0.0
      %1514 = vmatprep.subr.mxu0 0.0
      %1515 = vmatpush2.msra.mxu0 0.0
      %1516 = vmatprep.subr.mxu0 0.0
      %1517 = vmatpush2.msra.mxu0 0.0
      %1518 = vmatprep.subr.mxu0 0.0
      %1519 = vmatpush2.msra.mxu0 0.0
      %1520 = vmatprep.subr.mxu0 0.0
      %1521 = vmatpush2.msra.mxu0 0.0
      %1522 = vmatprep.subr.mxu0 0.0
      %1523 = vmatpush2.msra.mxu0 0.0
      %1524 = vmatprep.subr.mxu0 0.0
      %1525 = vmatpush2.msra.mxu0 0.0
      %1526 = vmatprep.subr.mxu0 0.0
      %1527 = vmatpush2.msra.mxu0 0.0
      %1528 = vmatprep.subr.mxu0 0.0
      %1529 = vmatpush2.msra.mxu0 0.0
      %1530 = vmatprep.subr.mxu0 0.0
      %1531 = vmatpush2.msra.mxu0 0.0
      %1532 = vmatprep.subr.mxu0 0.0
      %1533 = vmatpush2.msra.mxu0 0.0
      %1534 = vmatprep.mubr.f32.mxu0 0.0
      %1535 = vmatmul.mubr.f32.gmra.mxu0 %v1391
      %v1536 = vpop.f32.mrf.mxu0
      %v1537 = vadd.f32 %v1378, %v1536
      %v1538 = vpop.f32.mrf.mxu0
      %1539 = vdwg.mxu0
      %1540 = vrot.lane.b32.xlu0 %v590, 92
      %v1541 = vpop.permute.xlu0 %1540
      %1542 = vrot.lane.b32.xlu0 %v591, 92
      %v1543 = vpop.permute.xlu0 %1542
      %1544 = vrot.lane.b32.xlu0 %v592, 92
      %v1545 = vpop.permute.xlu0 %1544
      %vm1546 = vcmask 752640
      %v1547 = vsel %vm1546, %v1541, %v1543
      %v1548 = vsel %vm1546, %v1543, %v1545
      %v1550 = vsel %vm410, %v357, 0
      %v1552 = vsel %vm414, %v1547, 0
      %v1554 = vsel %vm414, %v1548, 0
      %v1556 = vsel %vm414, %v1545, 0
      %1558 = vmatprep.subr.mxu0 0.0
      %1559 = vmatpush1.msra.mxu0 0.0
      %1560 = vmatprep.subr.mxu0 0.0
      %1561 = vmatpush1.msra.mxu0 0.0
      %1562 = vmatprep.subr.mxu0 0.0
      %1563 = vmatpush1.msra.mxu0 0.0
      %1564 = vmatprep.subr.mxu0 0.0
      %1565 = vmatpush1.msra.mxu0 0.0
      %1566 = vmatprep.subr.mxu0 0.0
      %1567 = vmatpush1.msra.mxu0 0.0
      %1568 = vmatprep.subr.mxu0 0.0
      %1569 = vmatpush1.msra.mxu0 0.0
      %1570 = vmatprep.subr.mxu0 0.0
      %1571 = vmatpush1.msra.mxu0 0.0
      %1572 = vmatprep.subr.mxu0 0.0
      %1573 = vmatpush1.msra.mxu0 0.0
      %1574 = vmatprep.subr.mxu0 0.0
      %1575 = vmatpush1.msra.mxu0 0.0
      %1576 = vmatprep.subr.mxu0 0.0
      %1577 = vmatpush1.msra.mxu0 0.0
      %1578 = vmatprep.subr.mxu0 0.0
      %1579 = vmatpush1.msra.mxu0 0.0
      %1580 = vmatprep.subr.mxu0 0.0
      %1581 = vmatpush1.msra.mxu0 0.0
      %1582 = vmatprep.subr.mxu0 0.0
      %1583 = vmatpush1.msra.mxu0 0.0
      %1584 = vmatprep.subr.mxu0 0.0
      %1585 = vmatpush1.msra.mxu0 0.0
      %1586 = vmatprep.subr.mxu0 0.0
      %1587 = vmatpush1.msra.mxu0 0.0
      %1588 = vmatprep.subr.mxu0 %v1554
      %1589 = vmatpush1.msra.mxu0 %v1552
      %1590 = vmatprep.subr.mxu0 0.0
      %1591 = vmatpush2.msra.mxu0 0.0
      %1592 = vmatprep.subr.mxu0 0.0
      %1593 = vmatpush2.msra.mxu0 0.0
      %1594 = vmatprep.subr.mxu0 0.0
      %1595 = vmatpush2.msra.mxu0 0.0
      %1596 = vmatprep.subr.mxu0 0.0
      %1597 = vmatpush2.msra.mxu0 0.0
      %1598 = vmatprep.subr.mxu0 0.0
      %1599 = vmatpush2.msra.mxu0 0.0
      %1600 = vmatprep.subr.mxu0 0.0
      %1601 = vmatpush2.msra.mxu0 0.0
      %1602 = vmatprep.subr.mxu0 0.0
      %1603 = vmatpush2.msra.mxu0 0.0
      %1604 = vmatprep.subr.mxu0 0.0
      %1605 = vmatpush2.msra.mxu0 0.0
      %1606 = vmatprep.subr.mxu0 0.0
      %1607 = vmatpush2.msra.mxu0 0.0
      %1608 = vmatprep.subr.mxu0 0.0
      %1609 = vmatpush2.msra.mxu0 0.0
      %1610 = vmatprep.subr.mxu0 0.0
      %1611 = vmatpush2.msra.mxu0 0.0
      %1612 = vmatprep.subr.mxu0 0.0
      %1613 = vmatpush2.msra.mxu0 0.0
      %1614 = vmatprep.subr.mxu0 0.0
      %1615 = vmatpush2.msra.mxu0 0.0
      %1616 = vmatprep.subr.mxu0 0.0
      %1617 = vmatpush2.msra.mxu0 0.0
      %1618 = vmatprep.subr.mxu0 0.0
      %1619 = vmatpush2.msra.mxu0 0.0
      %1620 = vmatprep.subr.mxu0 0.0
      %1621 = vmatpush2.msra.mxu0 0.0
      %1622 = vmatprep.mubr.f32.mxu0 0.0
      %1623 = vmatmul.mubr.f32.gmra.mxu0 %v1550
      %v1624 = vpop.f32.mrf.mxu0
      %v1625 = vadd.f32 0.0, %v1624
      %v1626 = vpop.f32.mrf.mxu0
      %v1627 = vadd.f32 0.0, %v1626
      %1628 = vdwg.mxu0
      %1629 = vmatprep.subr.mxu0 0.0
      %1630 = vmatpush1.msra.mxu0 0.0
      %1631 = vmatprep.subr.mxu0 0.0
      %1632 = vmatpush1.msra.mxu0 0.0
      %1633 = vmatprep.subr.mxu0 0.0
      %1634 = vmatpush1.msra.mxu0 0.0
      %1635 = vmatprep.subr.mxu0 0.0
      %1636 = vmatpush1.msra.mxu0 0.0
      %1637 = vmatprep.subr.mxu0 0.0
      %1638 = vmatpush1.msra.mxu0 0.0
      %1639 = vmatprep.subr.mxu0 0.0
      %1640 = vmatpush1.msra.mxu0 0.0
      %1641 = vmatprep.subr.mxu0 0.0
      %1642 = vmatpush1.msra.mxu0 0.0
      %1643 = vmatprep.subr.mxu0 0.0
      %1644 = vmatpush1.msra.mxu0 0.0
      %1645 = vmatprep.subr.mxu0 0.0
      %1646 = vmatpush1.msra.mxu0 0.0
      %1647 = vmatprep.subr.mxu0 0.0
      %1648 = vmatpush1.msra.mxu0 0.0
      %1649 = vmatprep.subr.mxu0 0.0
      %1650 = vmatpush1.msra.mxu0 0.0
      %1651 = vmatprep.subr.mxu0 0.0
      %1652 = vmatpush1.msra.mxu0 0.0
      %1653 = vmatprep.subr.mxu0 0.0
      %1654 = vmatpush1.msra.mxu0 0.0
      %1655 = vmatprep.subr.mxu0 0.0
      %1656 = vmatpush1.msra.mxu0 0.0
      %1657 = vmatprep.subr.mxu0 0.0
      %1658 = vmatpush1.msra.mxu0 0.0
      %1659 = vmatprep.subr.mxu0 0.0
      %1660 = vmatpush1.msra.mxu0 %v1556
      %1661 = vmatprep.subr.mxu0 0.0
      %1662 = vmatpush2.msra.mxu0 0.0
      %1663 = vmatprep.subr.mxu0 0.0
      %1664 = vmatpush2.msra.mxu0 0.0
      %1665 = vmatprep.subr.mxu0 0.0
      %1666 = vmatpush2.msra.mxu0 0.0
      %1667 = vmatprep.subr.mxu0 0.0
      %1668 = vmatpush2.msra.mxu0 0.0
      %1669 = vmatprep.subr.mxu0 0.0
      %1670 = vmatpush2.msra.mxu0 0.0
      %1671 = vmatprep.subr.mxu0 0.0
      %1672 = vmatpush2.msra.mxu0 0.0
      %1673 = vmatprep.subr.mxu0 0.0
      %1674 = vmatpush2.msra.mxu0 0.0
      %1675 = vmatprep.subr.mxu0 0.0
      %1676 = vmatpush2.msra.mxu0 0.0
      %1677 = vmatprep.subr.mxu0 0.0
      %1678 = vmatpush2.msra.mxu0 0.0
      %1679 = vmatprep.subr.mxu0 0.0
      %1680 = vmatpush2.msra.mxu0 0.0
      %1681 = vmatprep.subr.mxu0 0.0
      %1682 = vmatpush2.msra.mxu0 0.0
      %1683 = vmatprep.subr.mxu0 0.0
      %1684 = vmatpush2.msra.mxu0 0.0
      %1685 = vmatprep.subr.mxu0 0.0
      %1686 = vmatpush2.msra.mxu0 0.0
      %1687 = vmatprep.subr.mxu0 0.0
      %1688 = vmatpush2.msra.mxu0 0.0
      %1689 = vmatprep.subr.mxu0 0.0
      %1690 = vmatpush2.msra.mxu0 0.0
      %1691 = vmatprep.subr.mxu0 0.0
      %1692 = vmatpush2.msra.mxu0 0.0
      %1693 = vmatprep.mubr.f32.mxu0 0.0
      %1694 = vmatmul.mubr.f32.gmra.mxu0 %v1550
      %v1695 = vpop.f32.mrf.mxu0
      %v1696 = vadd.f32 0.0, %v1695
      %v1697 = vpop.f32.mrf.mxu0
      %1698 = vdwg.mxu0
      %v1699 = vadd.f32 %v831, %v1625
      %v1700 = vadd.f32 %v833, %v1627
      %v1701 = vadd.f32 %v902, %v1696
      %1702 = vrot.lane.b32.xlu0 %v590, 91
      %v1703 = vpop.permute.xlu0 %1702
      %1704 = vrot.lane.b32.xlu0 %v591, 91
      %v1705 = vpop.permute.xlu0 %1704
      %1706 = vrot.lane.b32.xlu0 %v592, 91
      %v1707 = vpop.permute.xlu0 %1706
      %vm1708 = vcmask 744448
      %v1709 = vsel %vm1708, %v1703, %v1705
      %v1710 = vsel %vm1708, %v1705, %v1707
      %v1712 = vsel %vm410, %v358, 0
      %v1714 = vsel %vm414, %v1709, 0
      %v1716 = vsel %vm414, %v1710, 0
      %v1718 = vsel %vm414, %v1707, 0
      %1720 = vmatprep.subr.mxu0 0.0
      %1721 = vmatpush1.msra.mxu0 0.0
      %1722 = vmatprep.subr.mxu0 0.0
      %1723 = vmatpush1.msra.mxu0 0.0
      %1724 = vmatprep.subr.mxu0 0.0
      %1725 = vmatpush1.msra.mxu0 0.0
      %1726 = vmatprep.subr.mxu0 0.0
      %1727 = vmatpush1.msra.mxu0 0.0
      %1728 = vmatprep.subr.mxu0 0.0
      %1729 = vmatpush1.msra.mxu0 0.0
      %1730 = vmatprep.subr.mxu0 0.0
      %1731 = vmatpush1.msra.mxu0 0.0
      %1732 = vmatprep.subr.mxu0 0.0
      %1733 = vmatpush1.msra.mxu0 0.0
      %1734 = vmatprep.subr.mxu0 0.0
      %1735 = vmatpush1.msra.mxu0 0.0
      %1736 = vmatprep.subr.mxu0 0.0
      %1737 = vmatpush1.msra.mxu0 0.0
      %1738 = vmatprep.subr.mxu0 0.0
      %1739 = vmatpush1.msra.mxu0 0.0
      %1740 = vmatprep.subr.mxu0 0.0
      %1741 = vmatpush1.msra.mxu0 0.0
      %1742 = vmatprep.subr.mxu0 0.0
      %1743 = vmatpush1.msra.mxu0 0.0
      %1744 = vmatprep.subr.mxu0 0.0
      %1745 = vmatpush1.msra.mxu0 0.0
      %1746 = vmatprep.subr.mxu0 0.0
      %1747 = vmatpush1.msra.mxu0 0.0
      %1748 = vmatprep.subr.mxu0 0.0
      %1749 = vmatpush1.msra.mxu0 0.0
      %1750 = vmatprep.subr.mxu0 %v1716
      %1751 = vmatpush1.msra.mxu0 %v1714
      %1752 = vmatprep.subr.mxu0 0.0
      %1753 = vmatpush2.msra.mxu0 0.0
      %1754 = vmatprep.subr.mxu0 0.0
      %1755 = vmatpush2.msra.mxu0 0.0
      %1756 = vmatprep.subr.mxu0 0.0
      %1757 = vmatpush2.msra.mxu0 0.0
      %1758 = vmatprep.subr.mxu0 0.0
      %1759 = vmatpush2.msra.mxu0 0.0
      %1760 = vmatprep.subr.mxu0 0.0
      %1761 = vmatpush2.msra.mxu0 0.0
      %1762 = vmatprep.subr.mxu0 0.0
      %1763 = vmatpush2.msra.mxu0 0.0
      %1764 = vmatprep.subr.mxu0 0.0
      %1765 = vmatpush2.msra.mxu0 0.0
      %1766 = vmatprep.subr.mxu0 0.0
      %1767 = vmatpush2.msra.mxu0 0.0
      %1768 = vmatprep.subr.mxu0 0.0
      %1769 = vmatpush2.msra.mxu0 0.0
      %1770 = vmatprep.subr.mxu0 0.0
      %1771 = vmatpush2.msra.mxu0 0.0
      %1772 = vmatprep.subr.mxu0 0.0
      %1773 = vmatpush2.msra.mxu0 0.0
      %1774 = vmatprep.subr.mxu0 0.0
      %1775 = vmatpush2.msra.mxu0 0.0
      %1776 = vmatprep.subr.mxu0 0.0
      %1777 = vmatpush2.msra.mxu0 0.0
      %1778 = vmatprep.subr.mxu0 0.0
      %1779 = vmatpush2.msra.mxu0 0.0
      %1780 = vmatprep.subr.mxu0 0.0
      %1781 = vmatpush2.msra.mxu0 0.0
      %1782 = vmatprep.subr.mxu0 0.0
      %1783 = vmatpush2.msra.mxu0 0.0
      %1784 = vmatprep.mubr.f32.mxu0 0.0
      %1785 = vmatmul.mubr.f32.gmra.mxu0 %v1712
      %v1786 = vpop.f32.mrf.mxu0
      %v1787 = vadd.f32 0.0, %v1786
      %v1788 = vpop.f32.mrf.mxu0
      %v1789 = vadd.f32 0.0, %v1788
      %1790 = vdwg.mxu0
      %1791 = vmatprep.subr.mxu0 0.0
      %1792 = vmatpush1.msra.mxu0 0.0
      %1793 = vmatprep.subr.mxu0 0.0
      %1794 = vmatpush1.msra.mxu0 0.0
      %1795 = vmatprep.subr.mxu0 0.0
      %1796 = vmatpush1.msra.mxu0 0.0
      %1797 = vmatprep.subr.mxu0 0.0
      %1798 = vmatpush1.msra.mxu0 0.0
      %1799 = vmatprep.subr.mxu0 0.0
      %1800 = vmatpush1.msra.mxu0 0.0
      %1801 = vmatprep.subr.mxu0 0.0
      %1802 = vmatpush1.msra.mxu0 0.0
      %1803 = vmatprep.subr.mxu0 0.0
      %1804 = vmatpush1.msra.mxu0 0.0
      %1805 = vmatprep.subr.mxu0 0.0
      %1806 = vmatpush1.msra.mxu0 0.0
      %1807 = vmatprep.subr.mxu0 0.0
      %1808 = vmatpush1.msra.mxu0 0.0
      %1809 = vmatprep.subr.mxu0 0.0
      %1810 = vmatpush1.msra.mxu0 0.0
      %1811 = vmatprep.subr.mxu0 0.0
      %1812 = vmatpush1.msra.mxu0 0.0
      %1813 = vmatprep.subr.mxu0 0.0
      %1814 = vmatpush1.msra.mxu0 0.0
      %1815 = vmatprep.subr.mxu0 0.0
      %1816 = vmatpush1.msra.mxu0 0.0
      %1817 = vmatprep.subr.mxu0 0.0
      %1818 = vmatpush1.msra.mxu0 0.0
      %1819 = vmatprep.subr.mxu0 0.0
      %1820 = vmatpush1.msra.mxu0 0.0
      %1821 = vmatprep.subr.mxu0 0.0
      %1822 = vmatpush1.msra.mxu0 %v1718
      %1823 = vmatprep.subr.mxu0 0.0
      %1824 = vmatpush2.msra.mxu0 0.0
      %1825 = vmatprep.subr.mxu0 0.0
      %1826 = vmatpush2.msra.mxu0 0.0
      %1827 = vmatprep.subr.mxu0 0.0
      %1828 = vmatpush2.msra.mxu0 0.0
      %1829 = vmatprep.subr.mxu0 0.0
      %1830 = vmatpush2.msra.mxu0 0.0
      %1831 = vmatprep.subr.mxu0 0.0
      %1832 = vmatpush2.msra.mxu0 0.0
      %1833 = vmatprep.subr.mxu0 0.0
      %1834 = vmatpush2.msra.mxu0 0.0
      %1835 = vmatprep.subr.mxu0 0.0
      %1836 = vmatpush2.msra.mxu0 0.0
      %1837 = vmatprep.subr.mxu0 0.0
      %1838 = vmatpush2.msra.mxu0 0.0
      %1839 = vmatprep.subr.mxu0 0.0
      %1840 = vmatpush2.msra.mxu0 0.0
      %1841 = vmatprep.subr.mxu0 0.0
      %1842 = vmatpush2.msra.mxu0 0.0
      %1843 = vmatprep.subr.mxu0 0.0
      %1844 = vmatpush2.msra.mxu0 0.0
      %1845 = vmatprep.subr.mxu0 0.0
      %1846 = vmatpush2.msra.mxu0 0.0
      %1847 = vmatprep.subr.mxu0 0.0
      %1848 = vmatpush2.msra.mxu0 0.0
      %1849 = vmatprep.subr.mxu0 0.0
      %1850 = vmatpush2.msra.mxu0 0.0
      %1851 = vmatprep.subr.mxu0 0.0
      %1852 = vmatpush2.msra.mxu0 0.0
      %1853 = vmatprep.subr.mxu0 0.0
      %1854 = vmatpush2.msra.mxu0 0.0
      %1855 = vmatprep.mubr.f32.mxu0 0.0
      %1856 = vmatmul.mubr.f32.gmra.mxu0 %v1712
      %v1857 = vpop.f32.mrf.mxu0
      %v1858 = vadd.f32 0.0, %v1857
      %v1859 = vpop.f32.mrf.mxu0
      %1860 = vdwg.mxu0
      %v1861 = vadd.f32 %v1148, %v1787
      %v1862 = vadd.f32 %v1150, %v1789
      %v1863 = vadd.f32 %v1219, %v1858
      %1864 = vrot.lane.b32.xlu0 %v590, 90
      %v1865 = vpop.permute.xlu0 %1864
      %1866 = vrot.lane.b32.xlu0 %v591, 90
      %v1867 = vpop.permute.xlu0 %1866
      %1868 = vrot.lane.b32.xlu0 %v592, 90
      %v1869 = vpop.permute.xlu0 %1868
      %vm1870 = vcmask 736256
      %v1871 = vsel %vm1870, %v1865, %v1867
      %v1872 = vsel %vm1870, %v1867, %v1869
      %v1874 = vsel %vm410, %v359, 0
      %v1876 = vsel %vm414, %v1871, 0
      %v1878 = vsel %vm414, %v1872, 0
      %v1880 = vsel %vm414, %v1869, 0
      %1882 = vmatprep.subr.mxu0 0.0
      %1883 = vmatpush1.msra.mxu0 0.0
      %1884 = vmatprep.subr.mxu0 0.0
      %1885 = vmatpush1.msra.mxu0 0.0
      %1886 = vmatprep.subr.mxu0 0.0
      %1887 = vmatpush1.msra.mxu0 0.0
      %1888 = vmatprep.subr.mxu0 0.0
      %1889 = vmatpush1.msra.mxu0 0.0
      %1890 = vmatprep.subr.mxu0 0.0
      %1891 = vmatpush1.msra.mxu0 0.0
      %1892 = vmatprep.subr.mxu0 0.0
      %1893 = vmatpush1.msra.mxu0 0.0
      %1894 = vmatprep.subr.mxu0 0.0
      %1895 = vmatpush1.msra.mxu0 0.0
      %1896 = vmatprep.subr.mxu0 0.0
      %1897 = vmatpush1.msra.mxu0 0.0
      %1898 = vmatprep.subr.mxu0 0.0
      %1899 = vmatpush1.msra.mxu0 0.0
      %1900 = vmatprep.subr.mxu0 0.0
      %1901 = vmatpush1.msra.mxu0 0.0
      %1902 = vmatprep.subr.mxu0 0.0
      %1903 = vmatpush1.msra.mxu0 0.0
      %1904 = vmatprep.subr.mxu0 0.0
      %1905 = vmatpush1.msra.mxu0 0.0
      %1906 = vmatprep.subr.mxu0 0.0
      %1907 = vmatpush1.msra.mxu0 0.0
      %1908 = vmatprep.subr.mxu0 0.0
      %1909 = vmatpush1.msra.mxu0 0.0
      %1910 = vmatprep.subr.mxu0 0.0
      %1911 = vmatpush1.msra.mxu0 0.0
      %1912 = vmatprep.subr.mxu0 %v1878
      %1913 = vmatpush1.msra.mxu0 %v1876
      %1914 = vmatprep.subr.mxu0 0.0
      %1915 = vmatpush2.msra.mxu0 0.0
      %1916 = vmatprep.subr.mxu0 0.0
      %1917 = vmatpush2.msra.mxu0 0.0
      %1918 = vmatprep.subr.mxu0 0.0
      %1919 = vmatpush2.msra.mxu0 0.0
      %1920 = vmatprep.subr.mxu0 0.0
      %1921 = vmatpush2.msra.mxu0 0.0
      %1922 = vmatprep.subr.mxu0 0.0
      %1923 = vmatpush2.msra.mxu0 0.0
      %1924 = vmatprep.subr.mxu0 0.0
      %1925 = vmatpush2.msra.mxu0 0.0
      %1926 = vmatprep.subr.mxu0 0.0
      %1927 = vmatpush2.msra.mxu0 0.0
      %1928 = vmatprep.subr.mxu0 0.0
      %1929 = vmatpush2.msra.mxu0 0.0
      %1930 = vmatprep.subr.mxu0 0.0
      %1931 = vmatpush2.msra.mxu0 0.0
      %1932 = vmatprep.subr.mxu0 0.0
      %1933 = vmatpush2.msra.mxu0 0.0
      %1934 = vmatprep.subr.mxu0 0.0
      %1935 = vmatpush2.msra.mxu0 0.0
      %1936 = vmatprep.subr.mxu0 0.0
      %1937 = vmatpush2.msra.mxu0 0.0
      %1938 = vmatprep.subr.mxu0 0.0
      %1939 = vmatpush2.msra.mxu0 0.0
      %1940 = vmatprep.subr.mxu0 0.0
      %1941 = vmatpush2.msra.mxu0 0.0
      %1942 = vmatprep.subr.mxu0 0.0
      %1943 = vmatpush2.msra.mxu0 0.0
      %1944 = vmatprep.subr.mxu0 0.0
      %1945 = vmatpush2.msra.mxu0 0.0
      %1946 = vmatprep.mubr.f32.mxu0 0.0
      %1947 = vmatmul.mubr.f32.gmra.mxu0 %v1874
      %v1948 = vpop.f32.mrf.mxu0
      %v1949 = vadd.f32 0.0, %v1948
      %v1950 = vpop.f32.mrf.mxu0
      %v1951 = vadd.f32 0.0, %v1950
      %1952 = vdwg.mxu0
      %1953 = vmatprep.subr.mxu0 0.0
      %1954 = vmatpush1.msra.mxu0 0.0
      %1955 = vmatprep.subr.mxu0 0.0
      %1956 = vmatpush1.msra.mxu0 0.0
      %1957 = vmatprep.subr.mxu0 0.0
      %1958 = vmatpush1.msra.mxu0 0.0
      %1959 = vmatprep.subr.mxu0 0.0
      %1960 = vmatpush1.msra.mxu0 0.0
      %1961 = vmatprep.subr.mxu0 0.0
      %1962 = vmatpush1.msra.mxu0 0.0
      %1963 = vmatprep.subr.mxu0 0.0
      %1964 = vmatpush1.msra.mxu0 0.0
      %1965 = vmatprep.subr.mxu0 0.0
      %1966 = vmatpush1.msra.mxu0 0.0
      %1967 = vmatprep.subr.mxu0 0.0
      %1968 = vmatpush1.msra.mxu0 0.0
      %1969 = vmatprep.subr.mxu0 0.0
      %1970 = vmatpush1.msra.mxu0 0.0
      %1971 = vmatprep.subr.mxu0 0.0
      %1972 = vmatpush1.msra.mxu0 0.0
      %1973 = vmatprep.subr.mxu0 0.0
      %1974 = vmatpush1.msra.mxu0 0.0
      %1975 = vmatprep.subr.mxu0 0.0
      %1976 = vmatpush1.msra.mxu0 0.0
      %1977 = vmatprep.subr.mxu0 0.0
      %1978 = vmatpush1.msra.mxu0 0.0
      %1979 = vmatprep.subr.mxu0 0.0
      %1980 = vmatpush1.msra.mxu0 0.0
      %1981 = vmatprep.subr.mxu0 0.0
      %1982 = vmatpush1.msra.mxu0 0.0
      %1983 = vmatprep.subr.mxu0 0.0
      %1984 = vmatpush1.msra.mxu0 %v1880
      %1985 = vmatprep.subr.mxu0 0.0
      %1986 = vmatpush2.msra.mxu0 0.0
      %1987 = vmatprep.subr.mxu0 0.0
      %1988 = vmatpush2.msra.mxu0 0.0
      %1989 = vmatprep.subr.mxu0 0.0
      %1990 = vmatpush2.msra.mxu0 0.0
      %1991 = vmatprep.subr.mxu0 0.0
      %1992 = vmatpush2.msra.mxu0 0.0
      %1993 = vmatprep.subr.mxu0 0.0
      %1994 = vmatpush2.msra.mxu0 0.0
      %1995 = vmatprep.subr.mxu0 0.0
      %1996 = vmatpush2.msra.mxu0 0.0
      %1997 = vmatprep.subr.mxu0 0.0
      %1998 = vmatpush2.msra.mxu0 0.0
      %1999 = vmatprep.subr.mxu0 0.0
      %2000 = vmatpush2.msra.mxu0 0.0
      %2001 = vmatprep.subr.mxu0 0.0
      %2002 = vmatpush2.msra.mxu0 0.0
      %2003 = vmatprep.subr.mxu0 0.0
      %2004 = vmatpush2.msra.mxu0 0.0
      %2005 = vmatprep.subr.mxu0 0.0
      %2006 = vmatpush2.msra.mxu0 0.0
      %2007 = vmatprep.subr.mxu0 0.0
      %2008 = vmatpush2.msra.mxu0 0.0
      %2009 = vmatprep.subr.mxu0 0.0
      %2010 = vmatpush2.msra.mxu0 0.0
      %2011 = vmatprep.subr.mxu0 0.0
      %2012 = vmatpush2.msra.mxu0 0.0
      %2013 = vmatprep.subr.mxu0 0.0
      %2014 = vmatpush2.msra.mxu0 0.0
      %2015 = vmatprep.subr.mxu0 0.0
      %2016 = vmatpush2.msra.mxu0 0.0
      %2017 = vmatprep.mubr.f32.mxu0 0.0
      %2018 = vmatmul.mubr.f32.gmra.mxu0 %v1874
      %v2019 = vpop.f32.mrf.mxu0
      %v2020 = vadd.f32 0.0, %v2019
      %v2021 = vpop.f32.mrf.mxu0
      %2022 = vdwg.mxu0
      %v2023 = vadd.f32 %v1466, %v1949
      %v2024 = vadd.f32 %v1468, %v1951
      %v2025 = vadd.f32 %v1537, %v2020
      %v2026 = vadd.f32 %v1699, %v1861
      %v2027 = vadd.f32 %v1700, %v1862
      %v2028 = vadd.f32 %v1701, %v1863
      %v2029 = vadd.f32 %v2026, %v2023
      %v2030 = vadd.f32 %v2027, %v2024
      %v2031 = vadd.f32 %v2028, %v2025
      %2033 = vset.pattern.permute.xlu0 0
      %2034 = vperm.xlu0 %2033, %v360
      %v2035 = vpop.permute.xlu0 %2034
      %v2037 = vadd.f32 %v2029, %v2035
      %v2038 = vadd.f32 %v2030, %v2035
      %v2039 = vadd.f32 %v2031, %v2035
      %v2040 = vsel %vm565, %v2037, 0.0
      %v2041 = vsel %vm566, %v2038, 0.0
      %v2042 = vsel %vm567, %v2039, 0.0
      %v2046 = vrot.slane %v2040, 4
      %v2047 = vrot.slane %v2041, 4
      %v2048 = vrot.slane %v2042, 4
      %2049 = vrot.lane.b32.xlu0 %v2046, 19
      %v2050 = vpop.permute.xlu0 %2049
      %2051 = vrot.lane.b32.xlu0 %v2047, 19
      %v2052 = vpop.permute.xlu0 %2051
      %2053 = vrot.lane.b32.xlu0 %v2048, 19
      %v2054 = vpop.permute.xlu0 %2053
      %v2055 = vsel %vm279, %v2050, %v2052
      %v2056 = vsel %vm279, %v2052, %v2054
      %vm2060 = vcmask 1047708
      %2061 = vst.msk [vmem:[#allocation2 + $0x18] sm:$0xf0] %vm2060, %v2050
      %2062 = vst [vmem:[#allocation2 + $0x20] sm:$0xf0] %v2055
      %vm2063 = vcmask 400388
      %2064 = vst.msk [vmem:[#allocation2 + $0x28] sm:$0xf0] %vm2063, %v2056
      %v2065 = vld [vmem:[#allocation2 + $0x18] sm:$0xff]
      %v2066 = vld [vmem:[#allocation2 + $0x20] sm:$0xff]
      %v2067 = vld [vmem:[#allocation2 + $0x28] sm:$0xff]
      %2071 = vrot.lane.b32.xlu0 %v2065, 110
      %v2072 = vpop.permute.xlu0 %2071
      %2073 = vrot.lane.b32.xlu0 %v2066, 110
      %v2074 = vpop.permute.xlu0 %2073
      %2075 = vrot.lane.b32.xlu0 %v2067, 110
      %v2076 = vpop.permute.xlu0 %2075
      %v2077 = vsel %vm602, %v2072, %v2074
      %v2078 = vsel %vm602, %v2074, %v2076
      %vm2082 = vcmask 64512
      %v2084 = vsel %vm2082, %v367, 0
      %v2087 = vsel %vm2082, %v368, 0
      %2089 = vmatprep.subr.mxu0 0.0
      %2090 = vmatpush1.msra.mxu0 0.0
      %2091 = vmatprep.subr.mxu0 0.0
      %2092 = vmatpush1.msra.mxu0 0.0
      %2093 = vmatprep.subr.mxu0 0.0
      %2094 = vmatpush1.msra.mxu0 0.0
      %2095 = vmatprep.subr.mxu0 0.0
      %2096 = vmatpush1.msra.mxu0 0.0
      %2097 = vmatprep.subr.mxu0 0.0
      %2098 = vmatpush1.msra.mxu0 0.0
      %2099 = vmatprep.subr.mxu0 0.0
      %2100 = vmatpush1.msra.mxu0 0.0
      %2101 = vmatprep.subr.mxu0 0.0
      %2102 = vmatpush1.msra.mxu0 0.0
      %2103 = vmatprep.subr.mxu0 0.0
      %2104 = vmatpush1.msra.mxu0 0.0
      %2105 = vmatprep.subr.mxu0 0.0
      %2106 = vmatpush1.msra.mxu0 0.0
      %2107 = vmatprep.subr.mxu0 0.0
      %2108 = vmatpush1.msra.mxu0 0.0
      %2109 = vmatprep.subr.mxu0 0.0
      %2110 = vmatpush1.msra.mxu0 0.0
      %2111 = vmatprep.subr.mxu0 0.0
      %2112 = vmatpush1.msra.mxu0 0.0
      %2113 = vmatprep.subr.mxu0 0.0
      %2114 = vmatpush1.msra.mxu0 0.0
      %2115 = vmatprep.subr.mxu0 0.0
      %2116 = vmatpush1.msra.mxu0 0.0
      %2117 = vmatprep.subr.mxu0 0.0
      %2118 = vmatpush1.msra.mxu0 0.0
      %2119 = vmatprep.subr.mxu0 %v2078
      %2120 = vmatpush1.msra.mxu0 %v2077
      %2121 = vmatprep.subr.mxu0 0.0
      %2122 = vmatpush2.msra.mxu0 0.0
      %2123 = vmatprep.subr.mxu0 0.0
      %2124 = vmatpush2.msra.mxu0 0.0
      %2125 = vmatprep.subr.mxu0 0.0
      %2126 = vmatpush2.msra.mxu0 0.0
      %2127 = vmatprep.subr.mxu0 0.0
      %2128 = vmatpush2.msra.mxu0 0.0
      %2129 = vmatprep.subr.mxu0 0.0
      %2130 = vmatpush2.msra.mxu0 0.0
      %2131 = vmatprep.subr.mxu0 0.0
      %2132 = vmatpush2.msra.mxu0 0.0
      %2133 = vmatprep.subr.mxu0 0.0
      %2134 = vmatpush2.msra.mxu0 0.0
      %2135 = vmatprep.subr.mxu0 0.0
      %2136 = vmatpush2.msra.mxu0 0.0
      %2137 = vmatprep.subr.mxu0 0.0
      %2138 = vmatpush2.msra.mxu0 0.0
      %2139 = vmatprep.subr.mxu0 0.0
      %2140 = vmatpush2.msra.mxu0 0.0
      %2141 = vmatprep.subr.mxu0 0.0
      %2142 = vmatpush2.msra.mxu0 0.0
      %2143 = vmatprep.subr.mxu0 0.0
      %2144 = vmatpush2.msra.mxu0 0.0
      %2145 = vmatprep.subr.mxu0 0.0
      %2146 = vmatpush2.msra.mxu0 0.0
      %2147 = vmatprep.subr.mxu0 0.0
      %2148 = vmatpush2.msra.mxu0 0.0
      %2149 = vmatprep.subr.mxu0 0.0
      %2150 = vmatpush2.msra.mxu0 0.0
      %2151 = vmatprep.subr.mxu0 0.0
      %2152 = vmatpush2.msra.mxu0 0.0
      %2153 = vmatprep.mubr.f32.mxu0 0.0
      %2154 = vmatmul.mubr.f32.gmra.mxu0 %v2084
      %v2155 = vpop.f32.mrf.mxu0
      %v2156 = vadd.f32 0.0, %v2155
      %v2157 = vpop.f32.mrf.mxu0
      %v2158 = vadd.f32 0.0, %v2157
      %2159 = vmatprep.mubr.f32.mxu0 0.0
      %2160 = vmatmul.mubr.f32.gmra.mxu0 %v2087
      %v2161 = vpop.f32.mrf.mxu0
      %v2162 = vadd.f32 0.0, %v2161
      %v2163 = vpop.f32.mrf.mxu0
      %v2164 = vadd.f32 0.0, %v2163
      %2165 = vdwg.mxu0
      %2166 = vmatprep.subr.mxu0 0.0
      %2167 = vmatpush1.msra.mxu0 0.0
      %2168 = vmatprep.subr.mxu0 0.0
      %2169 = vmatpush1.msra.mxu0 0.0
      %2170 = vmatprep.subr.mxu0 0.0
      %2171 = vmatpush1.msra.mxu0 0.0
      %2172 = vmatprep.subr.mxu0 0.0
      %2173 = vmatpush1.msra.mxu0 0.0
      %2174 = vmatprep.subr.mxu0 0.0
      %2175 = vmatpush1.msra.mxu0 0.0
      %2176 = vmatprep.subr.mxu0 0.0
      %2177 = vmatpush1.msra.mxu0 0.0
      %2178 = vmatprep.subr.mxu0 0.0
      %2179 = vmatpush1.msra.mxu0 0.0
      %2180 = vmatprep.subr.mxu0 0.0
      %2181 = vmatpush1.msra.mxu0 0.0
      %2182 = vmatprep.subr.mxu0 0.0
      %2183 = vmatpush1.msra.mxu0 0.0
      %2184 = vmatprep.subr.mxu0 0.0
      %2185 = vmatpush1.msra.mxu0 0.0
      %2186 = vmatprep.subr.mxu0 0.0
      %2187 = vmatpush1.msra.mxu0 0.0
      %2188 = vmatprep.subr.mxu0 0.0
      %2189 = vmatpush1.msra.mxu0 0.0
      %2190 = vmatprep.subr.mxu0 0.0
      %2191 = vmatpush1.msra.mxu0 0.0
      %2192 = vmatprep.subr.mxu0 0.0
      %2193 = vmatpush1.msra.mxu0 0.0
      %2194 = vmatprep.subr.mxu0 0.0
      %2195 = vmatpush1.msra.mxu0 0.0
      %2196 = vmatprep.subr.mxu0 0.0
      %2197 = vmatpush1.msra.mxu0 %v2076
      %2198 = vmatprep.subr.mxu0 0.0
      %2199 = vmatpush2.msra.mxu0 0.0
      %2200 = vmatprep.subr.mxu0 0.0
      %2201 = vmatpush2.msra.mxu0 0.0
      %2202 = vmatprep.subr.mxu0 0.0
      %2203 = vmatpush2.msra.mxu0 0.0
      %2204 = vmatprep.subr.mxu0 0.0
      %2205 = vmatpush2.msra.mxu0 0.0
      %2206 = vmatprep.subr.mxu0 0.0
      %2207 = vmatpush2.msra.mxu0 0.0
      %2208 = vmatprep.subr.mxu0 0.0
      %2209 = vmatpush2.msra.mxu0 0.0
      %2210 = vmatprep.subr.mxu0 0.0
      %2211 = vmatpush2.msra.mxu0 0.0
      %2212 = vmatprep.subr.mxu0 0.0
      %2213 = vmatpush2.msra.mxu0 0.0
      %2214 = vmatprep.subr.mxu0 0.0
      %2215 = vmatpush2.msra.mxu0 0.0
      %2216 = vmatprep.subr.mxu0 0.0
      %2217 = vmatpush2.msra.mxu0 0.0
      %2218 = vmatprep.subr.mxu0 0.0
      %2219 = vmatpush2.msra.mxu0 0.0
      %2220 = vmatprep.subr.mxu0 0.0
      %2221 = vmatpush2.msra.mxu0 0.0
      %2222 = vmatprep.subr.mxu0 0.0
      %2223 = vmatpush2.msra.mxu0 0.0
      %2224 = vmatprep.subr.mxu0 0.0
      %2225 = vmatpush2.msra.mxu0 0.0
      %2226 = vmatprep.subr.mxu0 0.0
      %2227 = vmatpush2.msra.mxu0 0.0
      %2228 = vmatprep.subr.mxu0 0.0
      %2229 = vmatpush2.msra.mxu0 0.0
      %2230 = vmatprep.mubr.f32.mxu0 0.0
      %2231 = vmatmul.mubr.f32.gmra.mxu0 %v2084
      %v2232 = vpop.f32.mrf.mxu0
      %v2233 = vadd.f32 0.0, %v2232
      %v2234 = vpop.f32.mrf.mxu0
      %2235 = vmatprep.mubr.f32.mxu0 0.0
      %2236 = vmatmul.mubr.f32.gmra.mxu0 %v2087
      %v2237 = vpop.f32.mrf.mxu0
      %v2238 = vadd.f32 0.0, %v2237
      %v2239 = vpop.f32.mrf.mxu0
      %2240 = vdwg.mxu0
      %v2242 = vsel %vm2082, %v361, 0
      %v2245 = vsel %vm2082, %v362, 0
      %2247 = vmatprep.subr.mxu0 0.0
      %2248 = vmatpush1.msra.mxu0 0.0
      %2249 = vmatprep.subr.mxu0 0.0
      %2250 = vmatpush1.msra.mxu0 0.0
      %2251 = vmatprep.subr.mxu0 0.0
      %2252 = vmatpush1.msra.mxu0 0.0
      %2253 = vmatprep.subr.mxu0 0.0
      %2254 = vmatpush1.msra.mxu0 0.0
      %2255 = vmatprep.subr.mxu0 0.0
      %2256 = vmatpush1.msra.mxu0 0.0
      %2257 = vmatprep.subr.mxu0 0.0
      %2258 = vmatpush1.msra.mxu0 0.0
      %2259 = vmatprep.subr.mxu0 0.0
      %2260 = vmatpush1.msra.mxu0 0.0
      %2261 = vmatprep.subr.mxu0 0.0
      %2262 = vmatpush1.msra.mxu0 0.0
      %2263 = vmatprep.subr.mxu0 0.0
      %2264 = vmatpush1.msra.mxu0 0.0
      %2265 = vmatprep.subr.mxu0 0.0
      %2266 = vmatpush1.msra.mxu0 0.0
      %2267 = vmatprep.subr.mxu0 0.0
      %2268 = vmatpush1.msra.mxu0 0.0
      %2269 = vmatprep.subr.mxu0 0.0
      %2270 = vmatpush1.msra.mxu0 0.0
      %2271 = vmatprep.subr.mxu0 0.0
      %2272 = vmatpush1.msra.mxu0 0.0
      %2273 = vmatprep.subr.mxu0 0.0
      %2274 = vmatpush1.msra.mxu0 0.0
      %2275 = vmatprep.subr.mxu0 0.0
      %2276 = vmatpush1.msra.mxu0 0.0
      %2277 = vmatprep.subr.mxu0 %v2066
      %2278 = vmatpush1.msra.mxu0 %v2065
      %2279 = vmatprep.subr.mxu0 0.0
      %2280 = vmatpush2.msra.mxu0 0.0
      %2281 = vmatprep.subr.mxu0 0.0
      %2282 = vmatpush2.msra.mxu0 0.0
      %2283 = vmatprep.subr.mxu0 0.0
      %2284 = vmatpush2.msra.mxu0 0.0
      %2285 = vmatprep.subr.mxu0 0.0
      %2286 = vmatpush2.msra.mxu0 0.0
      %2287 = vmatprep.subr.mxu0 0.0
      %2288 = vmatpush2.msra.mxu0 0.0
      %2289 = vmatprep.subr.mxu0 0.0
      %2290 = vmatpush2.msra.mxu0 0.0
      %2291 = vmatprep.subr.mxu0 0.0
      %2292 = vmatpush2.msra.mxu0 0.0
      %2293 = vmatprep.subr.mxu0 0.0
      %2294 = vmatpush2.msra.mxu0 0.0
      %2295 = vmatprep.subr.mxu0 0.0
      %2296 = vmatpush2.msra.mxu0 0.0
      %2297 = vmatprep.subr.mxu0 0.0
      %2298 = vmatpush2.msra.mxu0 0.0
      %2299 = vmatprep.subr.mxu0 0.0
      %2300 = vmatpush2.msra.mxu0 0.0
      %2301 = vmatprep.subr.mxu0 0.0
      %2302 = vmatpush2.msra.mxu0 0.0
      %2303 = vmatprep.subr.mxu0 0.0
      %2304 = vmatpush2.msra.mxu0 0.0
      %2305 = vmatprep.subr.mxu0 0.0
      %2306 = vmatpush2.msra.mxu0 0.0
      %2307 = vmatprep.subr.mxu0 0.0
      %2308 = vmatpush2.msra.mxu0 0.0
      %2309 = vmatprep.subr.mxu0 0.0
      %2310 = vmatpush2.msra.mxu0 0.0
      %2311 = vmatprep.mubr.f32.mxu0 0.0
      %2312 = vmatmul.mubr.f32.gmra.mxu0 %v2242
      %v2313 = vpop.f32.mrf.mxu0
      %v2314 = vadd.f32 %v2156, %v2313
      %v2315 = vpop.f32.mrf.mxu0
      %v2316 = vadd.f32 %v2158, %v2315
      %2317 = vmatprep.mubr.f32.mxu0 0.0
      %2318 = vmatmul.mubr.f32.gmra.mxu0 %v2245
      %v2319 = vpop.f32.mrf.mxu0
      %v2320 = vadd.f32 %v2162, %v2319
      %v2321 = vpop.f32.mrf.mxu0
      %v2322 = vadd.f32 %v2164, %v2321
      %2323 = vdwg.mxu0
      %2324 = vmatprep.subr.mxu0 0.0
      %2325 = vmatpush1.msra.mxu0 0.0
      %2326 = vmatprep.subr.mxu0 0.0
      %2327 = vmatpush1.msra.mxu0 0.0
      %2328 = vmatprep.subr.mxu0 0.0
      %2329 = vmatpush1.msra.mxu0 0.0
      %2330 = vmatprep.subr.mxu0 0.0
      %2331 = vmatpush1.msra.mxu0 0.0
      %2332 = vmatprep.subr.mxu0 0.0
      %2333 = vmatpush1.msra.mxu0 0.0
      %2334 = vmatprep.subr.mxu0 0.0
      %2335 = vmatpush1.msra.mxu0 0.0
      %2336 = vmatprep.subr.mxu0 0.0
      %2337 = vmatpush1.msra.mxu0 0.0
      %2338 = vmatprep.subr.mxu0 0.0
      %2339 = vmatpush1.msra.mxu0 0.0
      %2340 = vmatprep.subr.mxu0 0.0
      %2341 = vmatpush1.msra.mxu0 0.0
      %2342 = vmatprep.subr.mxu0 0.0
      %2343 = vmatpush1.msra.mxu0 0.0
      %2344 = vmatprep.subr.mxu0 0.0
      %2345 = vmatpush1.msra.mxu0 0.0
      %2346 = vmatprep.subr.mxu0 0.0
      %2347 = vmatpush1.msra.mxu0 0.0
      %2348 = vmatprep.subr.mxu0 0.0
      %2349 = vmatpush1.msra.mxu0 0.0
      %2350 = vmatprep.subr.mxu0 0.0
      %2351 = vmatpush1.msra.mxu0 0.0
      %2352 = vmatprep.subr.mxu0 0.0
      %2353 = vmatpush1.msra.mxu0 0.0
      %2354 = vmatprep.subr.mxu0 0.0
      %2355 = vmatpush1.msra.mxu0 %v2067
      %2356 = vmatprep.subr.mxu0 0.0
      %2357 = vmatpush2.msra.mxu0 0.0
      %2358 = vmatprep.subr.mxu0 0.0
      %2359 = vmatpush2.msra.mxu0 0.0
      %2360 = vmatprep.subr.mxu0 0.0
      %2361 = vmatpush2.msra.mxu0 0.0
      %2362 = vmatprep.subr.mxu0 0.0
      %2363 = vmatpush2.msra.mxu0 0.0
      %2364 = vmatprep.subr.mxu0 0.0
      %2365 = vmatpush2.msra.mxu0 0.0
      %2366 = vmatprep.subr.mxu0 0.0
      %2367 = vmatpush2.msra.mxu0 0.0
      %2368 = vmatprep.subr.mxu0 0.0
      %2369 = vmatpush2.msra.mxu0 0.0
      %2370 = vmatprep.subr.mxu0 0.0
      %2371 = vmatpush2.msra.mxu0 0.0
      %2372 = vmatprep.subr.mxu0 0.0
      %2373 = vmatpush2.msra.mxu0 0.0
      %2374 = vmatprep.subr.mxu0 0.0
      %2375 = vmatpush2.msra.mxu0 0.0
      %2376 = vmatprep.subr.mxu0 0.0
      %2377 = vmatpush2.msra.mxu0 0.0
      %2378 = vmatprep.subr.mxu0 0.0
      %2379 = vmatpush2.msra.mxu0 0.0
      %2380 = vmatprep.subr.mxu0 0.0
      %2381 = vmatpush2.msra.mxu0 0.0
      %2382 = vmatprep.subr.mxu0 0.0
      %2383 = vmatpush2.msra.mxu0 0.0
      %2384 = vmatprep.subr.mxu0 0.0
      %2385 = vmatpush2.msra.mxu0 0.0
      %2386 = vmatprep.subr.mxu0 0.0
      %2387 = vmatpush2.msra.mxu0 0.0
      %2388 = vmatprep.mubr.f32.mxu0 0.0
      %2389 = vmatmul.mubr.f32.gmra.mxu0 %v2242
      %v2390 = vpop.f32.mrf.mxu0
      %v2391 = vadd.f32 %v2233, %v2390
      %v2392 = vpop.f32.mrf.mxu0
      %2393 = vmatprep.mubr.f32.mxu0 0.0
      %2394 = vmatmul.mubr.f32.gmra.mxu0 %v2245
      %v2395 = vpop.f32.mrf.mxu0
      %v2396 = vadd.f32 %v2238, %v2395
      %v2397 = vpop.f32.mrf.mxu0
      %2398 = vdwg.mxu0
      %2399 = vrot.lane.b32.xlu0 %v2065, 109
      %v2400 = vpop.permute.xlu0 %2399
      %2401 = vrot.lane.b32.xlu0 %v2066, 109
      %v2402 = vpop.permute.xlu0 %2401
      %2403 = vrot.lane.b32.xlu0 %v2067, 109
      %v2404 = vpop.permute.xlu0 %2403
      %v2405 = vsel %vm407, %v2400, %v2402
      %v2406 = vsel %vm407, %v2402, %v2404
      %v2411 = vsel %vm2082, %v369, 0
      %v2414 = vsel %vm2082, %v370, 0
      %2416 = vmatprep.subr.mxu0 0.0
      %2417 = vmatpush1.msra.mxu0 0.0
      %2418 = vmatprep.subr.mxu0 0.0
      %2419 = vmatpush1.msra.mxu0 0.0
      %2420 = vmatprep.subr.mxu0 0.0
      %2421 = vmatpush1.msra.mxu0 0.0
      %2422 = vmatprep.subr.mxu0 0.0
      %2423 = vmatpush1.msra.mxu0 0.0
      %2424 = vmatprep.subr.mxu0 0.0
      %2425 = vmatpush1.msra.mxu0 0.0
      %2426 = vmatprep.subr.mxu0 0.0
      %2427 = vmatpush1.msra.mxu0 0.0
      %2428 = vmatprep.subr.mxu0 0.0
      %2429 = vmatpush1.msra.mxu0 0.0
      %2430 = vmatprep.subr.mxu0 0.0
      %2431 = vmatpush1.msra.mxu0 0.0
      %2432 = vmatprep.subr.mxu0 0.0
      %2433 = vmatpush1.msra.mxu0 0.0
      %2434 = vmatprep.subr.mxu0 0.0
      %2435 = vmatpush1.msra.mxu0 0.0
      %2436 = vmatprep.subr.mxu0 0.0
      %2437 = vmatpush1.msra.mxu0 0.0
      %2438 = vmatprep.subr.mxu0 0.0
      %2439 = vmatpush1.msra.mxu0 0.0
      %2440 = vmatprep.subr.mxu0 0.0
      %2441 = vmatpush1.msra.mxu0 0.0
      %2442 = vmatprep.subr.mxu0 0.0
      %2443 = vmatpush1.msra.mxu0 0.0
      %2444 = vmatprep.subr.mxu0 0.0
      %2445 = vmatpush1.msra.mxu0 0.0
      %2446 = vmatprep.subr.mxu0 %v2406
      %2447 = vmatpush1.msra.mxu0 %v2405
      %2448 = vmatprep.subr.mxu0 0.0
      %2449 = vmatpush2.msra.mxu0 0.0
      %2450 = vmatprep.subr.mxu0 0.0
      %2451 = vmatpush2.msra.mxu0 0.0
      %2452 = vmatprep.subr.mxu0 0.0
      %2453 = vmatpush2.msra.mxu0 0.0
      %2454 = vmatprep.subr.mxu0 0.0
      %2455 = vmatpush2.msra.mxu0 0.0
      %2456 = vmatprep.subr.mxu0 0.0
      %2457 = vmatpush2.msra.mxu0 0.0
      %2458 = vmatprep.subr.mxu0 0.0
      %2459 = vmatpush2.msra.mxu0 0.0
      %2460 = vmatprep.subr.mxu0 0.0
      %2461 = vmatpush2.msra.mxu0 0.0
      %2462 = vmatprep.subr.mxu0 0.0
      %2463 = vmatpush2.msra.mxu0 0.0
      %2464 = vmatprep.subr.mxu0 0.0
      %2465 = vmatpush2.msra.mxu0 0.0
      %2466 = vmatprep.subr.mxu0 0.0
      %2467 = vmatpush2.msra.mxu0 0.0
      %2468 = vmatprep.subr.mxu0 0.0
      %2469 = vmatpush2.msra.mxu0 0.0
      %2470 = vmatprep.subr.mxu0 0.0
      %2471 = vmatpush2.msra.mxu0 0.0
      %2472 = vmatprep.subr.mxu0 0.0
      %2473 = vmatpush2.msra.mxu0 0.0
      %2474 = vmatprep.subr.mxu0 0.0
      %2475 = vmatpush2.msra.mxu0 0.0
      %2476 = vmatprep.subr.mxu0 0.0
      %2477 = vmatpush2.msra.mxu0 0.0
      %2478 = vmatprep.subr.mxu0 0.0
      %2479 = vmatpush2.msra.mxu0 0.0
      %2480 = vmatprep.mubr.f32.mxu0 0.0
      %2481 = vmatmul.mubr.f32.gmra.mxu0 %v2411
      %v2482 = vpop.f32.mrf.mxu0
      %v2483 = vadd.f32 0.0, %v2482
      %v2484 = vpop.f32.mrf.mxu0
      %v2485 = vadd.f32 0.0, %v2484
      %2486 = vmatprep.mubr.f32.mxu0 0.0
      %2487 = vmatmul.mubr.f32.gmra.mxu0 %v2414
      %v2488 = vpop.f32.mrf.mxu0
      %v2489 = vadd.f32 0.0, %v2488
      %v2490 = vpop.f32.mrf.mxu0
      %v2491 = vadd.f32 0.0, %v2490
      %2492 = vdwg.mxu0
      %2493 = vmatprep.subr.mxu0 0.0
      %2494 = vmatpush1.msra.mxu0 0.0
      %2495 = vmatprep.subr.mxu0 0.0
      %2496 = vmatpush1.msra.mxu0 0.0
      %2497 = vmatprep.subr.mxu0 0.0
      %2498 = vmatpush1.msra.mxu0 0.0
      %2499 = vmatprep.subr.mxu0 0.0
      %2500 = vmatpush1.msra.mxu0 0.0
      %2501 = vmatprep.subr.mxu0 0.0
      %2502 = vmatpush1.msra.mxu0 0.0
      %2503 = vmatprep.subr.mxu0 0.0
      %2504 = vmatpush1.msra.mxu0 0.0
      %2505 = vmatprep.subr.mxu0 0.0
      %2506 = vmatpush1.msra.mxu0 0.0
      %2507 = vmatprep.subr.mxu0 0.0
      %2508 = vmatpush1.msra.mxu0 0.0
      %2509 = vmatprep.subr.mxu0 0.0
      %2510 = vmatpush1.msra.mxu0 0.0
      %2511 = vmatprep.subr.mxu0 0.0
      %2512 = vmatpush1.msra.mxu0 0.0
      %2513 = vmatprep.subr.mxu0 0.0
      %2514 = vmatpush1.msra.mxu0 0.0
      %2515 = vmatprep.subr.mxu0 0.0
      %2516 = vmatpush1.msra.mxu0 0.0
      %2517 = vmatprep.subr.mxu0 0.0
      %2518 = vmatpush1.msra.mxu0 0.0
      %2519 = vmatprep.subr.mxu0 0.0
      %2520 = vmatpush1.msra.mxu0 0.0
      %2521 = vmatprep.subr.mxu0 0.0
      %2522 = vmatpush1.msra.mxu0 0.0
      %2523 = vmatprep.subr.mxu0 0.0
      %2524 = vmatpush1.msra.mxu0 %v2404
      %2525 = vmatprep.subr.mxu0 0.0
      %2526 = vmatpush2.msra.mxu0 0.0
      %2527 = vmatprep.subr.mxu0 0.0
      %2528 = vmatpush2.msra.mxu0 0.0
      %2529 = vmatprep.subr.mxu0 0.0
      %2530 = vmatpush2.msra.mxu0 0.0
      %2531 = vmatprep.subr.mxu0 0.0
      %2532 = vmatpush2.msra.mxu0 0.0
      %2533 = vmatprep.subr.mxu0 0.0
      %2534 = vmatpush2.msra.mxu0 0.0
      %2535 = vmatprep.subr.mxu0 0.0
      %2536 = vmatpush2.msra.mxu0 0.0
      %2537 = vmatprep.subr.mxu0 0.0
      %2538 = vmatpush2.msra.mxu0 0.0
      %2539 = vmatprep.subr.mxu0 0.0
      %2540 = vmatpush2.msra.mxu0 0.0
      %2541 = vmatprep.subr.mxu0 0.0
      %2542 = vmatpush2.msra.mxu0 0.0
      %2543 = vmatprep.subr.mxu0 0.0
      %2544 = vmatpush2.msra.mxu0 0.0
      %2545 = vmatprep.subr.mxu0 0.0
      %2546 = vmatpush2.msra.mxu0 0.0
      %2547 = vmatprep.subr.mxu0 0.0
      %2548 = vmatpush2.msra.mxu0 0.0
      %2549 = vmatprep.subr.mxu0 0.0
      %2550 = vmatpush2.msra.mxu0 0.0
      %2551 = vmatprep.subr.mxu0 0.0
      %2552 = vmatpush2.msra.mxu0 0.0
      %2553 = vmatprep.subr.mxu0 0.0
      %2554 = vmatpush2.msra.mxu0 0.0
      %2555 = vmatprep.subr.mxu0 0.0
      %2556 = vmatpush2.msra.mxu0 0.0
      %2557 = vmatprep.mubr.f32.mxu0 0.0
      %2558 = vmatmul.mubr.f32.gmra.mxu0 %v2411
      %v2559 = vpop.f32.mrf.mxu0
      %v2560 = vadd.f32 0.0, %v2559
      %v2561 = vpop.f32.mrf.mxu0
      %2562 = vmatprep.mubr.f32.mxu0 0.0
      %2563 = vmatmul.mubr.f32.gmra.mxu0 %v2414
      %v2564 = vpop.f32.mrf.mxu0
      %v2565 = vadd.f32 0.0, %v2564
      %v2566 = vpop.f32.mrf.mxu0
      %2567 = vdwg.mxu0
      %2568 = vrot.lane.b32.xlu0 %v2065, 127
      %v2569 = vpop.permute.xlu0 %2568
      %2570 = vrot.lane.b32.xlu0 %v2066, 127
      %v2571 = vpop.permute.xlu0 %2570
      %2572 = vrot.lane.b32.xlu0 %v2067, 127
      %v2573 = vpop.permute.xlu0 %2572
      %v2574 = vsel %vm1069, %v2569, %v2571
      %v2575 = vsel %vm1069, %v2571, %v2573
      %v2580 = vsel %vm2082, %v363, 0
      %v2583 = vsel %vm2082, %v364, 0
      %2585 = vmatprep.subr.mxu0 0.0
      %2586 = vmatpush1.msra.mxu0 0.0
      %2587 = vmatprep.subr.mxu0 0.0
      %2588 = vmatpush1.msra.mxu0 0.0
      %2589 = vmatprep.subr.mxu0 0.0
      %2590 = vmatpush1.msra.mxu0 0.0
      %2591 = vmatprep.subr.mxu0 0.0
      %2592 = vmatpush1.msra.mxu0 0.0
      %2593 = vmatprep.subr.mxu0 0.0
      %2594 = vmatpush1.msra.mxu0 0.0
      %2595 = vmatprep.subr.mxu0 0.0
      %2596 = vmatpush1.msra.mxu0 0.0
      %2597 = vmatprep.subr.mxu0 0.0
      %2598 = vmatpush1.msra.mxu0 0.0
      %2599 = vmatprep.subr.mxu0 0.0
      %2600 = vmatpush1.msra.mxu0 0.0
      %2601 = vmatprep.subr.mxu0 0.0
      %2602 = vmatpush1.msra.mxu0 0.0
      %2603 = vmatprep.subr.mxu0 0.0
      %2604 = vmatpush1.msra.mxu0 0.0
      %2605 = vmatprep.subr.mxu0 0.0
      %2606 = vmatpush1.msra.mxu0 0.0
      %2607 = vmatprep.subr.mxu0 0.0
      %2608 = vmatpush1.msra.mxu0 0.0
      %2609 = vmatprep.subr.mxu0 0.0
      %2610 = vmatpush1.msra.mxu0 0.0
      %2611 = vmatprep.subr.mxu0 0.0
      %2612 = vmatpush1.msra.mxu0 0.0
      %2613 = vmatprep.subr.mxu0 0.0
      %2614 = vmatpush1.msra.mxu0 0.0
      %2615 = vmatprep.subr.mxu0 %v2575
      %2616 = vmatpush1.msra.mxu0 %v2574
      %2617 = vmatprep.subr.mxu0 0.0
      %2618 = vmatpush2.msra.mxu0 0.0
      %2619 = vmatprep.subr.mxu0 0.0
      %2620 = vmatpush2.msra.mxu0 0.0
      %2621 = vmatprep.subr.mxu0 0.0
      %2622 = vmatpush2.msra.mxu0 0.0
      %2623 = vmatprep.subr.mxu0 0.0
      %2624 = vmatpush2.msra.mxu0 0.0
      %2625 = vmatprep.subr.mxu0 0.0
      %2626 = vmatpush2.msra.mxu0 0.0
      %2627 = vmatprep.subr.mxu0 0.0
      %2628 = vmatpush2.msra.mxu0 0.0
      %2629 = vmatprep.subr.mxu0 0.0
      %2630 = vmatpush2.msra.mxu0 0.0
      %2631 = vmatprep.subr.mxu0 0.0
      %2632 = vmatpush2.msra.mxu0 0.0
      %2633 = vmatprep.subr.mxu0 0.0
      %2634 = vmatpush2.msra.mxu0 0.0
      %2635 = vmatprep.subr.mxu0 0.0
      %2636 = vmatpush2.msra.mxu0 0.0
      %2637 = vmatprep.subr.mxu0 0.0
      %2638 = vmatpush2.msra.mxu0 0.0
      %2639 = vmatprep.subr.mxu0 0.0
      %2640 = vmatpush2.msra.mxu0 0.0
      %2641 = vmatprep.subr.mxu0 0.0
      %2642 = vmatpush2.msra.mxu0 0.0
      %2643 = vmatprep.subr.mxu0 0.0
      %2644 = vmatpush2.msra.mxu0 0.0
      %2645 = vmatprep.subr.mxu0 0.0
      %2646 = vmatpush2.msra.mxu0 0.0
      %2647 = vmatprep.subr.mxu0 0.0
      %2648 = vmatpush2.msra.mxu0 0.0
      %2649 = vmatprep.mubr.f32.mxu0 0.0
      %2650 = vmatmul.mubr.f32.gmra.mxu0 %v2580
      %v2651 = vpop.f32.mrf.mxu0
      %v2652 = vadd.f32 %v2483, %v2651
      %v2653 = vpop.f32.mrf.mxu0
      %v2654 = vadd.f32 %v2485, %v2653
      %2655 = vmatprep.mubr.f32.mxu0 0.0
      %2656 = vmatmul.mubr.f32.gmra.mxu0 %v2583
      %v2657 = vpop.f32.mrf.mxu0
      %v2658 = vadd.f32 %v2489, %v2657
      %v2659 = vpop.f32.mrf.mxu0
      %v2660 = vadd.f32 %v2491, %v2659
      %2661 = vdwg.mxu0
      %2662 = vmatprep.subr.mxu0 0.0
      %2663 = vmatpush1.msra.mxu0 0.0
      %2664 = vmatprep.subr.mxu0 0.0
      %2665 = vmatpush1.msra.mxu0 0.0
      %2666 = vmatprep.subr.mxu0 0.0
      %2667 = vmatpush1.msra.mxu0 0.0
      %2668 = vmatprep.subr.mxu0 0.0
      %2669 = vmatpush1.msra.mxu0 0.0
      %2670 = vmatprep.subr.mxu0 0.0
      %2671 = vmatpush1.msra.mxu0 0.0
      %2672 = vmatprep.subr.mxu0 0.0
      %2673 = vmatpush1.msra.mxu0 0.0
      %2674 = vmatprep.subr.mxu0 0.0
      %2675 = vmatpush1.msra.mxu0 0.0
      %2676 = vmatprep.subr.mxu0 0.0
      %2677 = vmatpush1.msra.mxu0 0.0
      %2678 = vmatprep.subr.mxu0 0.0
      %2679 = vmatpush1.msra.mxu0 0.0
      %2680 = vmatprep.subr.mxu0 0.0
      %2681 = vmatpush1.msra.mxu0 0.0
      %2682 = vmatprep.subr.mxu0 0.0
      %2683 = vmatpush1.msra.mxu0 0.0
      %2684 = vmatprep.subr.mxu0 0.0
      %2685 = vmatpush1.msra.mxu0 0.0
      %2686 = vmatprep.subr.mxu0 0.0
      %2687 = vmatpush1.msra.mxu0 0.0
      %2688 = vmatprep.subr.mxu0 0.0
      %2689 = vmatpush1.msra.mxu0 0.0
      %2690 = vmatprep.subr.mxu0 0.0
      %2691 = vmatpush1.msra.mxu0 0.0
      %2692 = vmatprep.subr.mxu0 0.0
      %2693 = vmatpush1.msra.mxu0 %v2573
      %2694 = vmatprep.subr.mxu0 0.0
      %2695 = vmatpush2.msra.mxu0 0.0
      %2696 = vmatprep.subr.mxu0 0.0
      %2697 = vmatpush2.msra.mxu0 0.0
      %2698 = vmatprep.subr.mxu0 0.0
      %2699 = vmatpush2.msra.mxu0 0.0
      %2700 = vmatprep.subr.mxu0 0.0
      %2701 = vmatpush2.msra.mxu0 0.0
      %2702 = vmatprep.subr.mxu0 0.0
      %2703 = vmatpush2.msra.mxu0 0.0
      %2704 = vmatprep.subr.mxu0 0.0
      %2705 = vmatpush2.msra.mxu0 0.0
      %2706 = vmatprep.subr.mxu0 0.0
      %2707 = vmatpush2.msra.mxu0 0.0
      %2708 = vmatprep.subr.mxu0 0.0
      %2709 = vmatpush2.msra.mxu0 0.0
      %2710 = vmatprep.subr.mxu0 0.0
      %2711 = vmatpush2.msra.mxu0 0.0
      %2712 = vmatprep.subr.mxu0 0.0
      %2713 = vmatpush2.msra.mxu0 0.0
      %2714 = vmatprep.subr.mxu0 0.0
      %2715 = vmatpush2.msra.mxu0 0.0
      %2716 = vmatprep.subr.mxu0 0.0
      %2717 = vmatpush2.msra.mxu0 0.0
      %2718 = vmatprep.subr.mxu0 0.0
      %2719 = vmatpush2.msra.mxu0 0.0
      %2720 = vmatprep.subr.mxu0 0.0
      %2721 = vmatpush2.msra.mxu0 0.0
      %2722 = vmatprep.subr.mxu0 0.0
      %2723 = vmatpush2.msra.mxu0 0.0
      %2724 = vmatprep.subr.mxu0 0.0
      %2725 = vmatpush2.msra.mxu0 0.0
      %2726 = vmatprep.mubr.f32.mxu0 0.0
      %2727 = vmatmul.mubr.f32.gmra.mxu0 %v2580
      %v2728 = vpop.f32.mrf.mxu0
      %v2729 = vadd.f32 %v2560, %v2728
      %v2730 = vpop.f32.mrf.mxu0
      %2731 = vmatprep.mubr.f32.mxu0 0.0
      %2732 = vmatmul.mubr.f32.gmra.mxu0 %v2583
      %v2733 = vpop.f32.mrf.mxu0
      %v2734 = vadd.f32 %v2565, %v2733
      %v2735 = vpop.f32.mrf.mxu0
      %2736 = vdwg.mxu0
      %2737 = vrot.lane.b32.xlu0 %v2065, 108
      %v2738 = vpop.permute.xlu0 %2737
      %2739 = vrot.lane.b32.xlu0 %v2066, 108
      %v2740 = vpop.permute.xlu0 %2739
      %2741 = vrot.lane.b32.xlu0 %v2067, 108
      %v2742 = vpop.permute.xlu0 %2741
      %v2743 = vsel %vm1228, %v2738, %v2740
      %v2744 = vsel %vm1228, %v2740, %v2742
      %v2749 = vsel %vm2082, %v371, 0
      %v2752 = vsel %vm2082, %v372, 0
      %2754 = vmatprep.subr.mxu0 0.0
      %2755 = vmatpush1.msra.mxu0 0.0
      %2756 = vmatprep.subr.mxu0 0.0
      %2757 = vmatpush1.msra.mxu0 0.0
      %2758 = vmatprep.subr.mxu0 0.0
      %2759 = vmatpush1.msra.mxu0 0.0
      %2760 = vmatprep.subr.mxu0 0.0
      %2761 = vmatpush1.msra.mxu0 0.0
      %2762 = vmatprep.subr.mxu0 0.0
      %2763 = vmatpush1.msra.mxu0 0.0
      %2764 = vmatprep.subr.mxu0 0.0
      %2765 = vmatpush1.msra.mxu0 0.0
      %2766 = vmatprep.subr.mxu0 0.0
      %2767 = vmatpush1.msra.mxu0 0.0
      %2768 = vmatprep.subr.mxu0 0.0
      %2769 = vmatpush1.msra.mxu0 0.0
      %2770 = vmatprep.subr.mxu0 0.0
      %2771 = vmatpush1.msra.mxu0 0.0
      %2772 = vmatprep.subr.mxu0 0.0
      %2773 = vmatpush1.msra.mxu0 0.0
      %2774 = vmatprep.subr.mxu0 0.0
      %2775 = vmatpush1.msra.mxu0 0.0
      %2776 = vmatprep.subr.mxu0 0.0
      %2777 = vmatpush1.msra.mxu0 0.0
      %2778 = vmatprep.subr.mxu0 0.0
      %2779 = vmatpush1.msra.mxu0 0.0
      %2780 = vmatprep.subr.mxu0 0.0
      %2781 = vmatpush1.msra.mxu0 0.0
      %2782 = vmatprep.subr.mxu0 0.0
      %2783 = vmatpush1.msra.mxu0 0.0
      %2784 = vmatprep.subr.mxu0 %v2744
      %2785 = vmatpush1.msra.mxu0 %v2743
      %2786 = vmatprep.subr.mxu0 0.0
      %2787 = vmatpush2.msra.mxu0 0.0
      %2788 = vmatprep.subr.mxu0 0.0
      %2789 = vmatpush2.msra.mxu0 0.0
      %2790 = vmatprep.subr.mxu0 0.0
      %2791 = vmatpush2.msra.mxu0 0.0
      %2792 = vmatprep.subr.mxu0 0.0
      %2793 = vmatpush2.msra.mxu0 0.0
      %2794 = vmatprep.subr.mxu0 0.0
      %2795 = vmatpush2.msra.mxu0 0.0
      %2796 = vmatprep.subr.mxu0 0.0
      %2797 = vmatpush2.msra.mxu0 0.0
      %2798 = vmatprep.subr.mxu0 0.0
      %2799 = vmatpush2.msra.mxu0 0.0
      %2800 = vmatprep.subr.mxu0 0.0
      %2801 = vmatpush2.msra.mxu0 0.0
      %2802 = vmatprep.subr.mxu0 0.0
      %2803 = vmatpush2.msra.mxu0 0.0
      %2804 = vmatprep.subr.mxu0 0.0
      %2805 = vmatpush2.msra.mxu0 0.0
      %2806 = vmatprep.subr.mxu0 0.0
      %2807 = vmatpush2.msra.mxu0 0.0
      %2808 = vmatprep.subr.mxu0 0.0
      %2809 = vmatpush2.msra.mxu0 0.0
      %2810 = vmatprep.subr.mxu0 0.0
      %2811 = vmatpush2.msra.mxu0 0.0
      %2812 = vmatprep.subr.mxu0 0.0
      %2813 = vmatpush2.msra.mxu0 0.0
      %2814 = vmatprep.subr.mxu0 0.0
      %2815 = vmatpush2.msra.mxu0 0.0
      %2816 = vmatprep.subr.mxu0 0.0
      %2817 = vmatpush2.msra.mxu0 0.0
      %2818 = vmatprep.mubr.f32.mxu0 0.0
      %2819 = vmatmul.mubr.f32.gmra.mxu0 %v2749
      %v2820 = vpop.f32.mrf.mxu0
      %v2821 = vadd.f32 0.0, %v2820
      %v2822 = vpop.f32.mrf.mxu0
      %v2823 = vadd.f32 0.0, %v2822
      %2824 = vmatprep.mubr.f32.mxu0 0.0
      %2825 = vmatmul.mubr.f32.gmra.mxu0 %v2752
      %v2826 = vpop.f32.mrf.mxu0
      %v2827 = vadd.f32 0.0, %v2826
      %v2828 = vpop.f32.mrf.mxu0
      %v2829 = vadd.f32 0.0, %v2828
      %2830 = vdwg.mxu0
      %2831 = vmatprep.subr.mxu0 0.0
      %2832 = vmatpush1.msra.mxu0 0.0
      %2833 = vmatprep.subr.mxu0 0.0
      %2834 = vmatpush1.msra.mxu0 0.0
      %2835 = vmatprep.subr.mxu0 0.0
      %2836 = vmatpush1.msra.mxu0 0.0
      %2837 = vmatprep.subr.mxu0 0.0
      %2838 = vmatpush1.msra.mxu0 0.0
      %2839 = vmatprep.subr.mxu0 0.0
      %2840 = vmatpush1.msra.mxu0 0.0
      %2841 = vmatprep.subr.mxu0 0.0
      %2842 = vmatpush1.msra.mxu0 0.0
      %2843 = vmatprep.subr.mxu0 0.0
      %2844 = vmatpush1.msra.mxu0 0.0
      %2845 = vmatprep.subr.mxu0 0.0
      %2846 = vmatpush1.msra.mxu0 0.0
      %2847 = vmatprep.subr.mxu0 0.0
      %2848 = vmatpush1.msra.mxu0 0.0
      %2849 = vmatprep.subr.mxu0 0.0
      %2850 = vmatpush1.msra.mxu0 0.0
      %2851 = vmatprep.subr.mxu0 0.0
      %2852 = vmatpush1.msra.mxu0 0.0
      %2853 = vmatprep.subr.mxu0 0.0
      %2854 = vmatpush1.msra.mxu0 0.0
      %2855 = vmatprep.subr.mxu0 0.0
      %2856 = vmatpush1.msra.mxu0 0.0
      %2857 = vmatprep.subr.mxu0 0.0
      %2858 = vmatpush1.msra.mxu0 0.0
      %2859 = vmatprep.subr.mxu0 0.0
      %2860 = vmatpush1.msra.mxu0 0.0
      %2861 = vmatprep.subr.mxu0 0.0
      %2862 = vmatpush1.msra.mxu0 %v2742
      %2863 = vmatprep.subr.mxu0 0.0
      %2864 = vmatpush2.msra.mxu0 0.0
      %2865 = vmatprep.subr.mxu0 0.0
      %2866 = vmatpush2.msra.mxu0 0.0
      %2867 = vmatprep.subr.mxu0 0.0
      %2868 = vmatpush2.msra.mxu0 0.0
      %2869 = vmatprep.subr.mxu0 0.0
      %2870 = vmatpush2.msra.mxu0 0.0
      %2871 = vmatprep.subr.mxu0 0.0
      %2872 = vmatpush2.msra.mxu0 0.0
      %2873 = vmatprep.subr.mxu0 0.0
      %2874 = vmatpush2.msra.mxu0 0.0
      %2875 = vmatprep.subr.mxu0 0.0
      %2876 = vmatpush2.msra.mxu0 0.0
      %2877 = vmatprep.subr.mxu0 0.0
      %2878 = vmatpush2.msra.mxu0 0.0
      %2879 = vmatprep.subr.mxu0 0.0
      %2880 = vmatpush2.msra.mxu0 0.0
      %2881 = vmatprep.subr.mxu0 0.0
      %2882 = vmatpush2.msra.mxu0 0.0
      %2883 = vmatprep.subr.mxu0 0.0
      %2884 = vmatpush2.msra.mxu0 0.0
      %2885 = vmatprep.subr.mxu0 0.0
      %2886 = vmatpush2.msra.mxu0 0.0
      %2887 = vmatprep.subr.mxu0 0.0
      %2888 = vmatpush2.msra.mxu0 0.0
      %2889 = vmatprep.subr.mxu0 0.0
      %2890 = vmatpush2.msra.mxu0 0.0
      %2891 = vmatprep.subr.mxu0 0.0
      %2892 = vmatpush2.msra.mxu0 0.0
      %2893 = vmatprep.subr.mxu0 0.0
      %2894 = vmatpush2.msra.mxu0 0.0
      %2895 = vmatprep.mubr.f32.mxu0 0.0
      %2896 = vmatmul.mubr.f32.gmra.mxu0 %v2749
      %v2897 = vpop.f32.mrf.mxu0
      %v2898 = vadd.f32 0.0, %v2897
      %v2899 = vpop.f32.mrf.mxu0
      %2900 = vmatprep.mubr.f32.mxu0 0.0
      %2901 = vmatmul.mubr.f32.gmra.mxu0 %v2752
      %v2902 = vpop.f32.mrf.mxu0
      %v2903 = vadd.f32 0.0, %v2902
      %v2904 = vpop.f32.mrf.mxu0
      %2905 = vdwg.mxu0
      %2906 = vrot.lane.b32.xlu0 %v2065, 126
      %v2907 = vpop.permute.xlu0 %2906
      %2908 = vrot.lane.b32.xlu0 %v2066, 126
      %v2909 = vpop.permute.xlu0 %2908
      %2910 = vrot.lane.b32.xlu0 %v2067, 126
      %v2911 = vpop.permute.xlu0 %2910
      %v2912 = vsel %vm1387, %v2907, %v2909
      %v2913 = vsel %vm1387, %v2909, %v2911
      %v2918 = vsel %vm2082, %v365, 0
      %v2921 = vsel %vm2082, %v366, 0
      %2923 = vmatprep.subr.mxu0 0.0
      %2924 = vmatpush1.msra.mxu0 0.0
      %2925 = vmatprep.subr.mxu0 0.0
      %2926 = vmatpush1.msra.mxu0 0.0
      %2927 = vmatprep.subr.mxu0 0.0
      %2928 = vmatpush1.msra.mxu0 0.0
      %2929 = vmatprep.subr.mxu0 0.0
      %2930 = vmatpush1.msra.mxu0 0.0
      %2931 = vmatprep.subr.mxu0 0.0
      %2932 = vmatpush1.msra.mxu0 0.0
      %2933 = vmatprep.subr.mxu0 0.0
      %2934 = vmatpush1.msra.mxu0 0.0
      %2935 = vmatprep.subr.mxu0 0.0
      %2936 = vmatpush1.msra.mxu0 0.0
      %2937 = vmatprep.subr.mxu0 0.0
      %2938 = vmatpush1.msra.mxu0 0.0
      %2939 = vmatprep.subr.mxu0 0.0
      %2940 = vmatpush1.msra.mxu0 0.0
      %2941 = vmatprep.subr.mxu0 0.0
      %2942 = vmatpush1.msra.mxu0 0.0
      %2943 = vmatprep.subr.mxu0 0.0
      %2944 = vmatpush1.msra.mxu0 0.0
      %2945 = vmatprep.subr.mxu0 0.0
      %2946 = vmatpush1.msra.mxu0 0.0
      %2947 = vmatprep.subr.mxu0 0.0
      %2948 = vmatpush1.msra.mxu0 0.0
      %2949 = vmatprep.subr.mxu0 0.0
      %2950 = vmatpush1.msra.mxu0 0.0
      %2951 = vmatprep.subr.mxu0 0.0
      %2952 = vmatpush1.msra.mxu0 0.0
      %2953 = vmatprep.subr.mxu0 %v2913
      %2954 = vmatpush1.msra.mxu0 %v2912
      %2955 = vmatprep.subr.mxu0 0.0
      %2956 = vmatpush2.msra.mxu0 0.0
      %2957 = vmatprep.subr.mxu0 0.0
      %2958 = vmatpush2.msra.mxu0 0.0
      %2959 = vmatprep.subr.mxu0 0.0
      %2960 = vmatpush2.msra.mxu0 0.0
      %2961 = vmatprep.subr.mxu0 0.0
      %2962 = vmatpush2.msra.mxu0 0.0
      %2963 = vmatprep.subr.mxu0 0.0
      %2964 = vmatpush2.msra.mxu0 0.0
      %2965 = vmatprep.subr.mxu0 0.0
      %2966 = vmatpush2.msra.mxu0 0.0
      %2967 = vmatprep.subr.mxu0 0.0
      %2968 = vmatpush2.msra.mxu0 0.0
      %2969 = vmatprep.subr.mxu0 0.0
      %2970 = vmatpush2.msra.mxu0 0.0
      %2971 = vmatprep.subr.mxu0 0.0
      %2972 = vmatpush2.msra.mxu0 0.0
      %2973 = vmatprep.subr.mxu0 0.0
      %2974 = vmatpush2.msra.mxu0 0.0
      %2975 = vmatprep.subr.mxu0 0.0
      %2976 = vmatpush2.msra.mxu0 0.0
      %2977 = vmatprep.subr.mxu0 0.0
      %2978 = vmatpush2.msra.mxu0 0.0
      %2979 = vmatprep.subr.mxu0 0.0
      %2980 = vmatpush2.msra.mxu0 0.0
      %2981 = vmatprep.subr.mxu0 0.0
      %2982 = vmatpush2.msra.mxu0 0.0
      %2983 = vmatprep.subr.mxu0 0.0
      %2984 = vmatpush2.msra.mxu0 0.0
      %2985 = vmatprep.subr.mxu0 0.0
      %2986 = vmatpush2.msra.mxu0 0.0
      %2987 = vmatprep.mubr.f32.mxu0 0.0
      %2988 = vmatmul.mubr.f32.gmra.mxu0 %v2918
      %v2989 = vpop.f32.mrf.mxu0
      %v2990 = vadd.f32 %v2821, %v2989
      %v2991 = vpop.f32.mrf.mxu0
      %v2992 = vadd.f32 %v2823, %v2991
      %2993 = vmatprep.mubr.f32.mxu0 0.0
      %2994 = vmatmul.mubr.f32.gmra.mxu0 %v2921
      %v2995 = vpop.f32.mrf.mxu0
      %v2996 = vadd.f32 %v2827, %v2995
      %v2997 = vpop.f32.mrf.mxu0
      %v2998 = vadd.f32 %v2829, %v2997
      %2999 = vdwg.mxu0
      %3000 = vmatprep.subr.mxu0 0.0
      %3001 = vmatpush1.msra.mxu0 0.0
      %3002 = vmatprep.subr.mxu0 0.0
      %3003 = vmatpush1.msra.mxu0 0.0
      %3004 = vmatprep.subr.mxu0 0.0
      %3005 = vmatpush1.msra.mxu0 0.0
      %3006 = vmatprep.subr.mxu0 0.0
      %3007 = vmatpush1.msra.mxu0 0.0
      %3008 = vmatprep.subr.mxu0 0.0
      %3009 = vmatpush1.msra.mxu0 0.0
      %3010 = vmatprep.subr.mxu0 0.0
      %3011 = vmatpush1.msra.mxu0 0.0
      %3012 = vmatprep.subr.mxu0 0.0
      %3013 = vmatpush1.msra.mxu0 0.0
      %3014 = vmatprep.subr.mxu0 0.0
      %3015 = vmatpush1.msra.mxu0 0.0
      %3016 = vmatprep.subr.mxu0 0.0
      %3017 = vmatpush1.msra.mxu0 0.0
      %3018 = vmatprep.subr.mxu0 0.0
      %3019 = vmatpush1.msra.mxu0 0.0
      %3020 = vmatprep.subr.mxu0 0.0
      %3021 = vmatpush1.msra.mxu0 0.0
      %3022 = vmatprep.subr.mxu0 0.0
      %3023 = vmatpush1.msra.mxu0 0.0
      %3024 = vmatprep.subr.mxu0 0.0
      %3025 = vmatpush1.msra.mxu0 0.0
      %3026 = vmatprep.subr.mxu0 0.0
      %3027 = vmatpush1.msra.mxu0 0.0
      %3028 = vmatprep.subr.mxu0 0.0
      %3029 = vmatpush1.msra.mxu0 0.0
      %3030 = vmatprep.subr.mxu0 0.0
      %3031 = vmatpush1.msra.mxu0 %v2911
      %3032 = vmatprep.subr.mxu0 0.0
      %3033 = vmatpush2.msra.mxu0 0.0
      %3034 = vmatprep.subr.mxu0 0.0
      %3035 = vmatpush2.msra.mxu0 0.0
      %3036 = vmatprep.subr.mxu0 0.0
      %3037 = vmatpush2.msra.mxu0 0.0
      %3038 = vmatprep.subr.mxu0 0.0
      %3039 = vmatpush2.msra.mxu0 0.0
      %3040 = vmatprep.subr.mxu0 0.0
      %3041 = vmatpush2.msra.mxu0 0.0
      %3042 = vmatprep.subr.mxu0 0.0
      %3043 = vmatpush2.msra.mxu0 0.0
      %3044 = vmatprep.subr.mxu0 0.0
      %3045 = vmatpush2.msra.mxu0 0.0
      %3046 = vmatprep.subr.mxu0 0.0
      %3047 = vmatpush2.msra.mxu0 0.0
      %3048 = vmatprep.subr.mxu0 0.0
      %3049 = vmatpush2.msra.mxu0 0.0
      %3050 = vmatprep.subr.mxu0 0.0
      %3051 = vmatpush2.msra.mxu0 0.0
      %3052 = vmatprep.subr.mxu0 0.0
      %3053 = vmatpush2.msra.mxu0 0.0
      %3054 = vmatprep.subr.mxu0 0.0
      %3055 = vmatpush2.msra.mxu0 0.0
      %3056 = vmatprep.subr.mxu0 0.0
      %3057 = vmatpush2.msra.mxu0 0.0
      %3058 = vmatprep.subr.mxu0 0.0
      %3059 = vmatpush2.msra.mxu0 0.0
      %3060 = vmatprep.subr.mxu0 0.0
      %3061 = vmatpush2.msra.mxu0 0.0
      %3062 = vmatprep.subr.mxu0 0.0
      %3063 = vmatpush2.msra.mxu0 0.0
      %3064 = vmatprep.mubr.f32.mxu0 0.0
      %3065 = vmatmul.mubr.f32.gmra.mxu0 %v2918
      %v3066 = vpop.f32.mrf.mxu0
      %v3067 = vadd.f32 %v2898, %v3066
      %v3068 = vpop.f32.mrf.mxu0
      %3069 = vmatprep.mubr.f32.mxu0 0.0
      %3070 = vmatmul.mubr.f32.gmra.mxu0 %v2921
      %v3071 = vpop.f32.mrf.mxu0
      %v3072 = vadd.f32 %v2903, %v3071
      %v3073 = vpop.f32.mrf.mxu0
      %3074 = vdwg.mxu0
      %3075 = vrot.lane.b32.xlu0 %v2065, 92
      %v3076 = vpop.permute.xlu0 %3075
      %3077 = vrot.lane.b32.xlu0 %v2066, 92
      %v3078 = vpop.permute.xlu0 %3077
      %3079 = vrot.lane.b32.xlu0 %v2067, 92
      %v3080 = vpop.permute.xlu0 %3079
      %v3081 = vsel %vm1546, %v3076, %v3078
      %v3082 = vsel %vm1546, %v3078, %v3080
      %v3087 = vsel %vm2082, %v373, 0
      %v3090 = vsel %vm2082, %v374, 0
      %3092 = vmatprep.subr.mxu0 0.0
      %3093 = vmatpush1.msra.mxu0 0.0
      %3094 = vmatprep.subr.mxu0 0.0
      %3095 = vmatpush1.msra.mxu0 0.0
      %3096 = vmatprep.subr.mxu0 0.0
      %3097 = vmatpush1.msra.mxu0 0.0
      %3098 = vmatprep.subr.mxu0 0.0
      %3099 = vmatpush1.msra.mxu0 0.0
      %3100 = vmatprep.subr.mxu0 0.0
      %3101 = vmatpush1.msra.mxu0 0.0
      %3102 = vmatprep.subr.mxu0 0.0
      %3103 = vmatpush1.msra.mxu0 0.0
      %3104 = vmatprep.subr.mxu0 0.0
      %3105 = vmatpush1.msra.mxu0 0.0
      %3106 = vmatprep.subr.mxu0 0.0
      %3107 = vmatpush1.msra.mxu0 0.0
      %3108 = vmatprep.subr.mxu0 0.0
      %3109 = vmatpush1.msra.mxu0 0.0
      %3110 = vmatprep.subr.mxu0 0.0
      %3111 = vmatpush1.msra.mxu0 0.0
      %3112 = vmatprep.subr.mxu0 0.0
      %3113 = vmatpush1.msra.mxu0 0.0
      %3114 = vmatprep.subr.mxu0 0.0
      %3115 = vmatpush1.msra.mxu0 0.0
      %3116 = vmatprep.subr.mxu0 0.0
      %3117 = vmatpush1.msra.mxu0 0.0
      %3118 = vmatprep.subr.mxu0 0.0
      %3119 = vmatpush1.msra.mxu0 0.0
      %3120 = vmatprep.subr.mxu0 0.0
      %3121 = vmatpush1.msra.mxu0 0.0
      %3122 = vmatprep.subr.mxu0 %v3082
      %3123 = vmatpush1.msra.mxu0 %v3081
      %3124 = vmatprep.subr.mxu0 0.0
      %3125 = vmatpush2.msra.mxu0 0.0
      %3126 = vmatprep.subr.mxu0 0.0
      %3127 = vmatpush2.msra.mxu0 0.0
      %3128 = vmatprep.subr.mxu0 0.0
      %3129 = vmatpush2.msra.mxu0 0.0
      %3130 = vmatprep.subr.mxu0 0.0
      %3131 = vmatpush2.msra.mxu0 0.0
      %3132 = vmatprep.subr.mxu0 0.0
      %3133 = vmatpush2.msra.mxu0 0.0
      %3134 = vmatprep.subr.mxu0 0.0
      %3135 = vmatpush2.msra.mxu0 0.0
      %3136 = vmatprep.subr.mxu0 0.0
      %3137 = vmatpush2.msra.mxu0 0.0
      %3138 = vmatprep.subr.mxu0 0.0
      %3139 = vmatpush2.msra.mxu0 0.0
      %3140 = vmatprep.subr.mxu0 0.0
      %3141 = vmatpush2.msra.mxu0 0.0
      %3142 = vmatprep.subr.mxu0 0.0
      %3143 = vmatpush2.msra.mxu0 0.0
      %3144 = vmatprep.subr.mxu0 0.0
      %3145 = vmatpush2.msra.mxu0 0.0
      %3146 = vmatprep.subr.mxu0 0.0
      %3147 = vmatpush2.msra.mxu0 0.0
      %3148 = vmatprep.subr.mxu0 0.0
      %3149 = vmatpush2.msra.mxu0 0.0
      %3150 = vmatprep.subr.mxu0 0.0
      %3151 = vmatpush2.msra.mxu0 0.0
      %3152 = vmatprep.subr.mxu0 0.0
      %3153 = vmatpush2.msra.mxu0 0.0
      %3154 = vmatprep.subr.mxu0 0.0
      %3155 = vmatpush2.msra.mxu0 0.0
      %3156 = vmatprep.mubr.f32.mxu0 0.0
      %3157 = vmatmul.mubr.f32.gmra.mxu0 %v3087
      %v3158 = vpop.f32.mrf.mxu0
      %v3159 = vadd.f32 0.0, %v3158
      %v3160 = vpop.f32.mrf.mxu0
      %v3161 = vadd.f32 0.0, %v3160
      %3162 = vmatprep.mubr.f32.mxu0 0.0
      %3163 = vmatmul.mubr.f32.gmra.mxu0 %v3090
      %v3164 = vpop.f32.mrf.mxu0
      %v3165 = vadd.f32 0.0, %v3164
      %v3166 = vpop.f32.mrf.mxu0
      %v3167 = vadd.f32 0.0, %v3166
      %3168 = vdwg.mxu0
      %3169 = vmatprep.subr.mxu0 0.0
      %3170 = vmatpush1.msra.mxu0 0.0
      %3171 = vmatprep.subr.mxu0 0.0
      %3172 = vmatpush1.msra.mxu0 0.0
      %3173 = vmatprep.subr.mxu0 0.0
      %3174 = vmatpush1.msra.mxu0 0.0
      %3175 = vmatprep.subr.mxu0 0.0
      %3176 = vmatpush1.msra.mxu0 0.0
      %3177 = vmatprep.subr.mxu0 0.0
      %3178 = vmatpush1.msra.mxu0 0.0
      %3179 = vmatprep.subr.mxu0 0.0
      %3180 = vmatpush1.msra.mxu0 0.0
      %3181 = vmatprep.subr.mxu0 0.0
      %3182 = vmatpush1.msra.mxu0 0.0
      %3183 = vmatprep.subr.mxu0 0.0
      %3184 = vmatpush1.msra.mxu0 0.0
      %3185 = vmatprep.subr.mxu0 0.0
      %3186 = vmatpush1.msra.mxu0 0.0
      %3187 = vmatprep.subr.mxu0 0.0
      %3188 = vmatpush1.msra.mxu0 0.0
      %3189 = vmatprep.subr.mxu0 0.0
      %3190 = vmatpush1.msra.mxu0 0.0
      %3191 = vmatprep.subr.mxu0 0.0
      %3192 = vmatpush1.msra.mxu0 0.0
      %3193 = vmatprep.subr.mxu0 0.0
      %3194 = vmatpush1.msra.mxu0 0.0
      %3195 = vmatprep.subr.mxu0 0.0
      %3196 = vmatpush1.msra.mxu0 0.0
      %3197 = vmatprep.subr.mxu0 0.0
      %3198 = vmatpush1.msra.mxu0 0.0
      %3199 = vmatprep.subr.mxu0 0.0
      %3200 = vmatpush1.msra.mxu0 %v3080
      %3201 = vmatprep.subr.mxu0 0.0
      %3202 = vmatpush2.msra.mxu0 0.0
      %3203 = vmatprep.subr.mxu0 0.0
      %3204 = vmatpush2.msra.mxu0 0.0
      %3205 = vmatprep.subr.mxu0 0.0
      %3206 = vmatpush2.msra.mxu0 0.0
      %3207 = vmatprep.subr.mxu0 0.0
      %3208 = vmatpush2.msra.mxu0 0.0
      %3209 = vmatprep.subr.mxu0 0.0
      %3210 = vmatpush2.msra.mxu0 0.0
      %3211 = vmatprep.subr.mxu0 0.0
      %3212 = vmatpush2.msra.mxu0 0.0
      %3213 = vmatprep.subr.mxu0 0.0
      %3214 = vmatpush2.msra.mxu0 0.0
      %3215 = vmatprep.subr.mxu0 0.0
      %3216 = vmatpush2.msra.mxu0 0.0
      %3217 = vmatprep.subr.mxu0 0.0
      %3218 = vmatpush2.msra.mxu0 0.0
      %3219 = vmatprep.subr.mxu0 0.0
      %3220 = vmatpush2.msra.mxu0 0.0
      %3221 = vmatprep.subr.mxu0 0.0
      %3222 = vmatpush2.msra.mxu0 0.0
      %3223 = vmatprep.subr.mxu0 0.0
      %3224 = vmatpush2.msra.mxu0 0.0
      %3225 = vmatprep.subr.mxu0 0.0
      %3226 = vmatpush2.msra.mxu0 0.0
      %3227 = vmatprep.subr.mxu0 0.0
      %3228 = vmatpush2.msra.mxu0 0.0
      %3229 = vmatprep.subr.mxu0 0.0
      %3230 = vmatpush2.msra.mxu0 0.0
      %3231 = vmatprep.subr.mxu0 0.0
      %3232 = vmatpush2.msra.mxu0 0.0
      %3233 = vmatprep.mubr.f32.mxu0 0.0
      %3234 = vmatmul.mubr.f32.gmra.mxu0 %v3087
      %v3235 = vpop.f32.mrf.mxu0
      %v3236 = vadd.f32 0.0, %v3235
      %v3237 = vpop.f32.mrf.mxu0
      %3238 = vmatprep.mubr.f32.mxu0 0.0
      %3239 = vmatmul.mubr.f32.gmra.mxu0 %v3090
      %v3240 = vpop.f32.mrf.mxu0
      %v3241 = vadd.f32 0.0, %v3240
      %v3242 = vpop.f32.mrf.mxu0
      %3243 = vdwg.mxu0
      %v3244 = vadd.f32 %v2314, %v3159
      %v3245 = vadd.f32 %v2316, %v3161
      %v3246 = vadd.f32 %v2391, %v3236
      %v3247 = vadd.f32 %v2320, %v3165
      %v3248 = vadd.f32 %v2322, %v3167
      %v3249 = vadd.f32 %v2396, %v3241
      %3250 = vrot.lane.b32.xlu0 %v2065, 91
      %v3251 = vpop.permute.xlu0 %3250
      %3252 = vrot.lane.b32.xlu0 %v2066, 91
      %v3253 = vpop.permute.xlu0 %3252
      %3254 = vrot.lane.b32.xlu0 %v2067, 91
      %v3255 = vpop.permute.xlu0 %3254
      %v3256 = vsel %vm1708, %v3251, %v3253
      %v3257 = vsel %vm1708, %v3253, %v3255
      %v3262 = vsel %vm2082, %v375, 0
      %v3265 = vsel %vm2082, %v376, 0
      %3267 = vmatprep.subr.mxu0 0.0
      %3268 = vmatpush1.msra.mxu0 0.0
      %3269 = vmatprep.subr.mxu0 0.0
      %3270 = vmatpush1.msra.mxu0 0.0
      %3271 = vmatprep.subr.mxu0 0.0
      %3272 = vmatpush1.msra.mxu0 0.0
      %3273 = vmatprep.subr.mxu0 0.0
      %3274 = vmatpush1.msra.mxu0 0.0
      %3275 = vmatprep.subr.mxu0 0.0
      %3276 = vmatpush1.msra.mxu0 0.0
      %3277 = vmatprep.subr.mxu0 0.0
      %3278 = vmatpush1.msra.mxu0 0.0
      %3279 = vmatprep.subr.mxu0 0.0
      %3280 = vmatpush1.msra.mxu0 0.0
      %3281 = vmatprep.subr.mxu0 0.0
      %3282 = vmatpush1.msra.mxu0 0.0
      %3283 = vmatprep.subr.mxu0 0.0
      %3284 = vmatpush1.msra.mxu0 0.0
      %3285 = vmatprep.subr.mxu0 0.0
      %3286 = vmatpush1.msra.mxu0 0.0
      %3287 = vmatprep.subr.mxu0 0.0
      %3288 = vmatpush1.msra.mxu0 0.0
      %3289 = vmatprep.subr.mxu0 0.0
      %3290 = vmatpush1.msra.mxu0 0.0
      %3291 = vmatprep.subr.mxu0 0.0
      %3292 = vmatpush1.msra.mxu0 0.0
      %3293 = vmatprep.subr.mxu0 0.0
      %3294 = vmatpush1.msra.mxu0 0.0
      %3295 = vmatprep.subr.mxu0 0.0
      %3296 = vmatpush1.msra.mxu0 0.0
      %3297 = vmatprep.subr.mxu0 %v3257
      %3298 = vmatpush1.msra.mxu0 %v3256
      %3299 = vmatprep.subr.mxu0 0.0
      %3300 = vmatpush2.msra.mxu0 0.0
      %3301 = vmatprep.subr.mxu0 0.0
      %3302 = vmatpush2.msra.mxu0 0.0
      %3303 = vmatprep.subr.mxu0 0.0
      %3304 = vmatpush2.msra.mxu0 0.0
      %3305 = vmatprep.subr.mxu0 0.0
      %3306 = vmatpush2.msra.mxu0 0.0
      %3307 = vmatprep.subr.mxu0 0.0
      %3308 = vmatpush2.msra.mxu0 0.0
      %3309 = vmatprep.subr.mxu0 0.0
      %3310 = vmatpush2.msra.mxu0 0.0
      %3311 = vmatprep.subr.mxu0 0.0
      %3312 = vmatpush2.msra.mxu0 0.0
      %3313 = vmatprep.subr.mxu0 0.0
      %3314 = vmatpush2.msra.mxu0 0.0
      %3315 = vmatprep.subr.mxu0 0.0
      %3316 = vmatpush2.msra.mxu0 0.0
      %3317 = vmatprep.subr.mxu0 0.0
      %3318 = vmatpush2.msra.mxu0 0.0
      %3319 = vmatprep.subr.mxu0 0.0
      %3320 = vmatpush2.msra.mxu0 0.0
      %3321 = vmatprep.subr.mxu0 0.0
      %3322 = vmatpush2.msra.mxu0 0.0
      %3323 = vmatprep.subr.mxu0 0.0
      %3324 = vmatpush2.msra.mxu0 0.0
      %3325 = vmatprep.subr.mxu0 0.0
      %3326 = vmatpush2.msra.mxu0 0.0
      %3327 = vmatprep.subr.mxu0 0.0
      %3328 = vmatpush2.msra.mxu0 0.0
      %3329 = vmatprep.subr.mxu0 0.0
      %3330 = vmatpush2.msra.mxu0 0.0
      %3331 = vmatprep.mubr.f32.mxu0 0.0
      %3332 = vmatmul.mubr.f32.gmra.mxu0 %v3262
      %v3333 = vpop.f32.mrf.mxu0
      %v3334 = vadd.f32 0.0, %v3333
      %v3335 = vpop.f32.mrf.mxu0
      %v3336 = vadd.f32 0.0, %v3335
      %3337 = vmatprep.mubr.f32.mxu0 0.0
      %3338 = vmatmul.mubr.f32.gmra.mxu0 %v3265
      %v3339 = vpop.f32.mrf.mxu0
      %v3340 = vadd.f32 0.0, %v3339
      %v3341 = vpop.f32.mrf.mxu0
      %v3342 = vadd.f32 0.0, %v3341
      %3343 = vdwg.mxu0
      %3344 = vmatprep.subr.mxu0 0.0
      %3345 = vmatpush1.msra.mxu0 0.0
      %3346 = vmatprep.subr.mxu0 0.0
      %3347 = vmatpush1.msra.mxu0 0.0
      %3348 = vmatprep.subr.mxu0 0.0
      %3349 = vmatpush1.msra.mxu0 0.0
      %3350 = vmatprep.subr.mxu0 0.0
      %3351 = vmatpush1.msra.mxu0 0.0
      %3352 = vmatprep.subr.mxu0 0.0
      %3353 = vmatpush1.msra.mxu0 0.0
      %3354 = vmatprep.subr.mxu0 0.0
      %3355 = vmatpush1.msra.mxu0 0.0
      %3356 = vmatprep.subr.mxu0 0.0
      %3357 = vmatpush1.msra.mxu0 0.0
      %3358 = vmatprep.subr.mxu0 0.0
      %3359 = vmatpush1.msra.mxu0 0.0
      %3360 = vmatprep.subr.mxu0 0.0
      %3361 = vmatpush1.msra.mxu0 0.0
      %3362 = vmatprep.subr.mxu0 0.0
      %3363 = vmatpush1.msra.mxu0 0.0
      %3364 = vmatprep.subr.mxu0 0.0
      %3365 = vmatpush1.msra.mxu0 0.0
      %3366 = vmatprep.subr.mxu0 0.0
      %3367 = vmatpush1.msra.mxu0 0.0
      %3368 = vmatprep.subr.mxu0 0.0
      %3369 = vmatpush1.msra.mxu0 0.0
      %3370 = vmatprep.subr.mxu0 0.0
      %3371 = vmatpush1.msra.mxu0 0.0
      %3372 = vmatprep.subr.mxu0 0.0
      %3373 = vmatpush1.msra.mxu0 0.0
      %3374 = vmatprep.subr.mxu0 0.0
      %3375 = vmatpush1.msra.mxu0 %v3255
      %3376 = vmatprep.subr.mxu0 0.0
      %3377 = vmatpush2.msra.mxu0 0.0
      %3378 = vmatprep.subr.mxu0 0.0
      %3379 = vmatpush2.msra.mxu0 0.0
      %3380 = vmatprep.subr.mxu0 0.0
      %3381 = vmatpush2.msra.mxu0 0.0
      %3382 = vmatprep.subr.mxu0 0.0
      %3383 = vmatpush2.msra.mxu0 0.0
      %3384 = vmatprep.subr.mxu0 0.0
      %3385 = vmatpush2.msra.mxu0 0.0
      %3386 = vmatprep.subr.mxu0 0.0
      %3387 = vmatpush2.msra.mxu0 0.0
      %3388 = vmatprep.subr.mxu0 0.0
      %3389 = vmatpush2.msra.mxu0 0.0
      %3390 = vmatprep.subr.mxu0 0.0
      %3391 = vmatpush2.msra.mxu0 0.0
      %3392 = vmatprep.subr.mxu0 0.0
      %3393 = vmatpush2.msra.mxu0 0.0
      %3394 = vmatprep.subr.mxu0 0.0
      %3395 = vmatpush2.msra.mxu0 0.0
      %3396 = vmatprep.subr.mxu0 0.0
      %3397 = vmatpush2.msra.mxu0 0.0
      %3398 = vmatprep.subr.mxu0 0.0
      %3399 = vmatpush2.msra.mxu0 0.0
      %3400 = vmatprep.subr.mxu0 0.0
      %3401 = vmatpush2.msra.mxu0 0.0
      %3402 = vmatprep.subr.mxu0 0.0
      %3403 = vmatpush2.msra.mxu0 0.0
      %3404 = vmatprep.subr.mxu0 0.0
      %3405 = vmatpush2.msra.mxu0 0.0
      %3406 = vmatprep.subr.mxu0 0.0
      %3407 = vmatpush2.msra.mxu0 0.0
      %3408 = vmatprep.mubr.f32.mxu0 0.0
      %3409 = vmatmul.mubr.f32.gmra.mxu0 %v3262
      %v3410 = vpop.f32.mrf.mxu0
      %v3411 = vadd.f32 0.0, %v3410
      %v3412 = vpop.f32.mrf.mxu0
      %3413 = vmatprep.mubr.f32.mxu0 0.0
      %3414 = vmatmul.mubr.f32.gmra.mxu0 %v3265
      %v3415 = vpop.f32.mrf.mxu0
      %v3416 = vadd.f32 0.0, %v3415
      %v3417 = vpop.f32.mrf.mxu0
      %3418 = vdwg.mxu0
      %v3419 = vadd.f32 %v2652, %v3334
      %v3420 = vadd.f32 %v2654, %v3336
      %v3421 = vadd.f32 %v2729, %v3411
      %v3422 = vadd.f32 %v2658, %v3340
      %v3423 = vadd.f32 %v2660, %v3342
      %v3424 = vadd.f32 %v2734, %v3416
      %3425 = vrot.lane.b32.xlu0 %v2065, 90
      %v3426 = vpop.permute.xlu0 %3425
      %3427 = vrot.lane.b32.xlu0 %v2066, 90
      %v3428 = vpop.permute.xlu0 %3427
      %3429 = vrot.lane.b32.xlu0 %v2067, 90
      %v3430 = vpop.permute.xlu0 %3429
      %v3431 = vsel %vm1870, %v3426, %v3428
      %v3432 = vsel %vm1870, %v3428, %v3430
      %v3437 = vsel %vm2082, %v377, 0
      %v3440 = vsel %vm2082, %v378, 0
      %3442 = vmatprep.subr.mxu0 0.0
      %3443 = vmatpush1.msra.mxu0 0.0
      %3444 = vmatprep.subr.mxu0 0.0
      %3445 = vmatpush1.msra.mxu0 0.0
      %3446 = vmatprep.subr.mxu0 0.0
      %3447 = vmatpush1.msra.mxu0 0.0
      %3448 = vmatprep.subr.mxu0 0.0
      %3449 = vmatpush1.msra.mxu0 0.0
      %3450 = vmatprep.subr.mxu0 0.0
      %3451 = vmatpush1.msra.mxu0 0.0
      %3452 = vmatprep.subr.mxu0 0.0
      %3453 = vmatpush1.msra.mxu0 0.0
      %3454 = vmatprep.subr.mxu0 0.0
      %3455 = vmatpush1.msra.mxu0 0.0
      %3456 = vmatprep.subr.mxu0 0.0
      %3457 = vmatpush1.msra.mxu0 0.0
      %3458 = vmatprep.subr.mxu0 0.0
      %3459 = vmatpush1.msra.mxu0 0.0
      %3460 = vmatprep.subr.mxu0 0.0
      %3461 = vmatpush1.msra.mxu0 0.0
      %3462 = vmatprep.subr.mxu0 0.0
      %3463 = vmatpush1.msra.mxu0 0.0
      %3464 = vmatprep.subr.mxu0 0.0
      %3465 = vmatpush1.msra.mxu0 0.0
      %3466 = vmatprep.subr.mxu0 0.0
      %3467 = vmatpush1.msra.mxu0 0.0
      %3468 = vmatprep.subr.mxu0 0.0
      %3469 = vmatpush1.msra.mxu0 0.0
      %3470 = vmatprep.subr.mxu0 0.0
      %3471 = vmatpush1.msra.mxu0 0.0
      %3472 = vmatprep.subr.mxu0 %v3432
      %3473 = vmatpush1.msra.mxu0 %v3431
      %3474 = vmatprep.subr.mxu0 0.0
      %3475 = vmatpush2.msra.mxu0 0.0
      %3476 = vmatprep.subr.mxu0 0.0
      %3477 = vmatpush2.msra.mxu0 0.0
      %3478 = vmatprep.subr.mxu0 0.0
      %3479 = vmatpush2.msra.mxu0 0.0
      %3480 = vmatprep.subr.mxu0 0.0
      %3481 = vmatpush2.msra.mxu0 0.0
      %3482 = vmatprep.subr.mxu0 0.0
      %3483 = vmatpush2.msra.mxu0 0.0
      %3484 = vmatprep.subr.mxu0 0.0
      %3485 = vmatpush2.msra.mxu0 0.0
      %3486 = vmatprep.subr.mxu0 0.0
      %3487 = vmatpush2.msra.mxu0 0.0
      %3488 = vmatprep.subr.mxu0 0.0
      %3489 = vmatpush2.msra.mxu0 0.0
      %3490 = vmatprep.subr.mxu0 0.0
      %3491 = vmatpush2.msra.mxu0 0.0
      %3492 = vmatprep.subr.mxu0 0.0
      %3493 = vmatpush2.msra.mxu0 0.0
      %3494 = vmatprep.subr.mxu0 0.0
      %3495 = vmatpush2.msra.mxu0 0.0
      %3496 = vmatprep.subr.mxu0 0.0
      %3497 = vmatpush2.msra.mxu0 0.0
      %3498 = vmatprep.subr.mxu0 0.0
      %3499 = vmatpush2.msra.mxu0 0.0
      %3500 = vmatprep.subr.mxu0 0.0
      %3501 = vmatpush2.msra.mxu0 0.0
      %3502 = vmatprep.subr.mxu0 0.0
      %3503 = vmatpush2.msra.mxu0 0.0
      %3504 = vmatprep.subr.mxu0 0.0
      %3505 = vmatpush2.msra.mxu0 0.0
      %3506 = vmatprep.mubr.f32.mxu0 0.0
      %3507 = vmatmul.mubr.f32.gmra.mxu0 %v3437
      %v3508 = vpop.f32.mrf.mxu0
      %v3509 = vadd.f32 0.0, %v3508
      %v3510 = vpop.f32.mrf.mxu0
      %v3511 = vadd.f32 0.0, %v3510
      %3512 = vmatprep.mubr.f32.mxu0 0.0
      %3513 = vmatmul.mubr.f32.gmra.mxu0 %v3440
      %v3514 = vpop.f32.mrf.mxu0
      %v3515 = vadd.f32 0.0, %v3514
      %v3516 = vpop.f32.mrf.mxu0
      %v3517 = vadd.f32 0.0, %v3516
      %3518 = vdwg.mxu0
      %3519 = vmatprep.subr.mxu0 0.0
      %3520 = vmatpush1.msra.mxu0 0.0
      %3521 = vmatprep.subr.mxu0 0.0
      %3522 = vmatpush1.msra.mxu0 0.0
      %3523 = vmatprep.subr.mxu0 0.0
      %3524 = vmatpush1.msra.mxu0 0.0
      %3525 = vmatprep.subr.mxu0 0.0
      %3526 = vmatpush1.msra.mxu0 0.0
      %3527 = vmatprep.subr.mxu0 0.0
      %3528 = vmatpush1.msra.mxu0 0.0
      %3529 = vmatprep.subr.mxu0 0.0
      %3530 = vmatpush1.msra.mxu0 0.0
      %3531 = vmatprep.subr.mxu0 0.0
      %3532 = vmatpush1.msra.mxu0 0.0
      %3533 = vmatprep.subr.mxu0 0.0
      %3534 = vmatpush1.msra.mxu0 0.0
      %3535 = vmatprep.subr.mxu0 0.0
      %3536 = vmatpush1.msra.mxu0 0.0
      %3537 = vmatprep.subr.mxu0 0.0
      %3538 = vmatpush1.msra.mxu0 0.0
      %3539 = vmatprep.subr.mxu0 0.0
      %3540 = vmatpush1.msra.mxu0 0.0
      %3541 = vmatprep.subr.mxu0 0.0
      %3542 = vmatpush1.msra.mxu0 0.0
      %3543 = vmatprep.subr.mxu0 0.0
      %3544 = vmatpush1.msra.mxu0 0.0
      %3545 = vmatprep.subr.mxu0 0.0
      %3546 = vmatpush1.msra.mxu0 0.0
      %3547 = vmatprep.subr.mxu0 0.0
      %3548 = vmatpush1.msra.mxu0 0.0
      %3549 = vmatprep.subr.mxu0 0.0
      %3550 = vmatpush1.msra.mxu0 %v3430
      %3551 = vmatprep.subr.mxu0 0.0
      %3552 = vmatpush2.msra.mxu0 0.0
      %3553 = vmatprep.subr.mxu0 0.0
      %3554 = vmatpush2.msra.mxu0 0.0
      %3555 = vmatprep.subr.mxu0 0.0
      %3556 = vmatpush2.msra.mxu0 0.0
      %3557 = vmatprep.subr.mxu0 0.0
      %3558 = vmatpush2.msra.mxu0 0.0
      %3559 = vmatprep.subr.mxu0 0.0
      %3560 = vmatpush2.msra.mxu0 0.0
      %3561 = vmatprep.subr.mxu0 0.0
      %3562 = vmatpush2.msra.mxu0 0.0
      %3563 = vmatprep.subr.mxu0 0.0
      %3564 = vmatpush2.msra.mxu0 0.0
      %3565 = vmatprep.subr.mxu0 0.0
      %3566 = vmatpush2.msra.mxu0 0.0
      %3567 = vmatprep.subr.mxu0 0.0
      %3568 = vmatpush2.msra.mxu0 0.0
      %3569 = vmatprep.subr.mxu0 0.0
      %3570 = vmatpush2.msra.mxu0 0.0
      %3571 = vmatprep.subr.mxu0 0.0
      %3572 = vmatpush2.msra.mxu0 0.0
      %3573 = vmatprep.subr.mxu0 0.0
      %3574 = vmatpush2.msra.mxu0 0.0
      %3575 = vmatprep.subr.mxu0 0.0
      %3576 = vmatpush2.msra.mxu0 0.0
      %3577 = vmatprep.subr.mxu0 0.0
      %3578 = vmatpush2.msra.mxu0 0.0
      %3579 = vmatprep.subr.mxu0 0.0
      %3580 = vmatpush2.msra.mxu0 0.0
      %3581 = vmatprep.subr.mxu0 0.0
      %3582 = vmatpush2.msra.mxu0 0.0
      %3583 = vmatprep.mubr.f32.mxu0 0.0
      %3584 = vmatmul.mubr.f32.gmra.mxu0 %v3437
      %v3585 = vpop.f32.mrf.mxu0
      %v3586 = vadd.f32 0.0, %v3585
      %v3587 = vpop.f32.mrf.mxu0
      %3588 = vmatprep.mubr.f32.mxu0 0.0
      %3589 = vmatmul.mubr.f32.gmra.mxu0 %v3440
      %v3590 = vpop.f32.mrf.mxu0
      %v3591 = vadd.f32 0.0, %v3590
      %v3592 = vpop.f32.mrf.mxu0
      %3593 = vdwg.mxu0
      %v3594 = vadd.f32 %v2990, %v3509
      %v3595 = vadd.f32 %v2992, %v3511
      %v3596 = vadd.f32 %v3067, %v3586
      %v3597 = vadd.f32 %v2996, %v3515
      %v3598 = vadd.f32 %v2998, %v3517
      %v3599 = vadd.f32 %v3072, %v3591
      %v3600 = vadd.f32 %v3244, %v3419
      %v3601 = vadd.f32 %v3245, %v3420
      %v3602 = vadd.f32 %v3246, %v3421
      %v3603 = vadd.f32 %v3247, %v3422
      %v3604 = vadd.f32 %v3248, %v3423
      %v3605 = vadd.f32 %v3249, %v3424
      %v3606 = vadd.f32 %v3600, %v3594
      %v3607 = vadd.f32 %v3601, %v3595
      %v3608 = vadd.f32 %v3602, %v3596
      %v3609 = vadd.f32 %v3603, %v3597
      %v3610 = vadd.f32 %v3604, %v3598
      %v3611 = vadd.f32 %v3605, %v3599
      %3613 = vset.pattern.permute.xlu0 0
      %3614 = vperm.xlu0 %3613, %v379
      %v3615 = vpop.permute.xlu0 %3614
      %3618 = vset.pattern.permute.xlu0 0
      %3619 = vperm.xlu0 %3618, %v380
      %v3620 = vpop.permute.xlu0 %3619
      %v3622 = vadd.f32 %v3606, %v3615
      %v3623 = vadd.f32 %v3607, %v3615
      %v3624 = vadd.f32 %v3608, %v3615
      %v3625 = vadd.f32 %v3609, %v3620
      %v3626 = vadd.f32 %v3610, %v3620
      %v3627 = vadd.f32 %v3611, %v3620
      %3628 = vst [vmem:[%s278] sm:$0xff] %v3622
      %3629 = vst [vmem:[%s278 + $0x8] sm:$0xff] %v3623
      %vm3630 = vcmask 244736
      %3631 = vst.msk [vmem:[%s278 + $0x10] sm:$0xff] %vm3630, %v3624
      %3632 = vst [vmem:[%s278 + $0x18] sm:$0xff] %v3625
      %3633 = vst [vmem:[%s278 + $0x20] sm:$0xff] %v3626
      %3634 = vst.msk [vmem:[%s278 + $0x28] sm:$0xff] %vm3630, %v3627
      %p3635 = scmp.lt.s32.totalorder %s18, 1
      %s3636 = scalar_select %p3635, %s18, 1
      %s3637 = smul.addr %s3636, 6
      %s3638 = smul.addr %s3637, 8
      %s3639 = scalar_lea.vmem %s7, %s3638
      // Predicated region
      $region49: #{_lambda_.1} parent=47 // pred_check
        %p3640 = pneg %p188
      $region50: #{_lambda_.1} parent=47 // pred_check_branch
        %3642 = sbr.rel (%p3640) target = $region52
      $region51: #{_lambda_.1} parent=47 // pred_region
        _
      $region52: #{_lambda_.1} parent=47 // pred_fallthru
        _
    $region48: #{_lambda_.1} parent=5 // pred_fallthru
      _
    %p3643 = scmp.le.s32.totalorder 2, %s13
    // Predicated region
    $region53: #{_lambda_.1} parent=5 // pred_check
      %p3644 = pneg %p3643
    $region54: #{_lambda_.1} parent=5 // pred_check_branch
      %3646 = sbr.rel (%p3644) target = $region56
    $region55: #{_lambda_.1} parent=5 // pred_region
      %s3647 = ssub.s32 %s13, 2
      // Predicated region
      $region57: #{_lambda_.1} parent=55 // pred_check
        %p3648 = pneg %p194
      $region58: #{_lambda_.1} parent=55 // pred_check_branch
        %3650 = sbr.rel (%p3648) target = $region60
      $region59: #{_lambda_.1} parent=55 // pred_region
        %p3651 = scmp.lt.s32.totalorder %s19, 1
        %s3652 = scalar_select %p3651, %s19, 1
        %s3653 = smul.addr %s3652, 6
        %s3654 = smul.addr %s3653, 8
        %s3655 = scalar_lea.vmem %s7, %s3654
      $region60: #{_lambda_.1} parent=55 // pred_fallthru
        _
    $region56: #{_lambda_.1} parent=5 // pred_fallthru
      _
  $region6: #{_lambda_.1} parent=0 // loop_footer
    %s17 = sadd.s32 1, %s13
  $region7: #{_lambda_.1} parent=0 // loop_footer_branch
    %12 = sbr.rel target = $region3
  $region8: #{_lambda_.1} parent=0 // loop_exit
    _

</llo_original>
